<compile_context>
chip_gen: v5e
topology: v5e:2x2
jax: 0.10.0
libtpu: 0.0.40
codegen_flags: <defaults>
</compile_context>

<pallas_src>
import functools

import jax
import jax.numpy as jnp
import numpy as np
from jax.experimental import pallas as pl
from jax.experimental.pallas import tpu as pltpu


def _round_up(v, m):
    return ((v + m - 1) // m) * m


def _largest_divisor_leq(n, cap):
    cap = max(1, min(n, cap))
    for d in range(cap, 0, -1):
        if n % d == 0:
            return d
    return 1


@functools.partial(jax.jit, static_argnames=("tile_h", "lane", "out_dtype"))
def bottleneck_pallas(x_nchw, params, *, tile_h=8, lane=128, out_dtype=jnp.float32):
    (w1, s1, b1, w2, s2, b2, w3, s3, b3) = params
    N, Cin, H, W = x_nchw.shape
    Cmid = w1.shape[1]
    Cout = w3.shape[1]
    assert Cin == Cout, "identity residual requires in_channels == 4*out_channels"

    # Row-tile height: never fall back to TH = H (VMEM hazard); use the
    # largest divisor of H that does not exceed tile_h.
    TH = tile_h if (H % tile_h == 0) else _largest_divisor_leq(H, tile_h)
    nH = H // TH
    Cm = _round_up(Cmid, lane)                   # lane-dense mid channels
    Cp = _round_up(Cin, lane)                    # lane-dense in/out channels

    # Row chunking inside a tile: keep matmul M (= RC*W) around <=256 so the
    # f32 accumulator chunk stays in vregs (no spill through the vst slot).
    RC = _largest_divisor_leq(TH, max(1, 256 // max(W, 1)))
    NC = TH // RC

    PADL = 16                                    # bf16 sublane-tile aligned interior offset
    WP = PADL + W + 1                            # scratch W extent (left halo col at PADL-1)

    f32, bf16 = jnp.float32, jnp.bfloat16

    # ---- layout & dtype prep (wrapper side) -------------------------------
    # NCHW -> NHWC, cast to bf16 BEFORE channel padding (2 B/elem padded copy).
    x_nhwc = jnp.transpose(x_nchw, (0, 2, 3, 1)).astype(bf16)
    x_p = jnp.pad(x_nhwc, ((0, 0), (0, 0), (0, 0), (0, Cp - Cin)))

    def pad2(m, r, c):
        return jnp.pad(m, ((0, r - m.shape[0]), (0, c - m.shape[1])))

    w1p = pad2(w1, Cp, Cm).astype(bf16)                        # (Cp, Cm)
    w3p = pad2(w3, Cm, Cp).astype(bf16)                        # (Cm, Cp)
    w2p = jnp.pad(w2, ((0, 0), (0, 0), (0, Cm - Cmid), (0, Cm - Cmid)))
    w2p = w2p.reshape(3, 3 * Cm, Cm).astype(bf16)              # [dy, dx*Cm+ci, co]
    s1p, b1p = pad2(s1, 1, Cm).astype(f32), pad2(b1, 1, Cm).astype(f32)
    s2p, b2p = pad2(s2, 1, Cm).astype(f32), pad2(b2, 1, Cm).astype(f32)
    s3p, b3p = pad2(s3, 1, Cp).astype(f32), pad2(b3, 1, Cp).astype(f32)

    # ---- kernel ------------------------------------------------------------
    def kernel(xc_ref, xt_ref, xb_ref,
               w1_ref, s1_ref, b1_ref,
               w2_ref, s2_ref, b2_ref,
               w3_ref, s3_ref, b3_ref,
               out_ref, pad_ref):
        i = pl.program_id(1)                                   # row-tile index

        def conv1(rows2d):                                     # (M, Cp) bf16 -> (M, Cm) bf16
            t = jnp.dot(rows2d, w1_ref[...], preferred_element_type=jnp.float32)
            t = jnp.maximum(t * s1_ref[...] + b1_ref[...], 0.0)
            return t.astype(jnp.bfloat16)

        # --- phase 1: conv1 + bn1 + relu into the padded bf16 scratch ------
        # conv2's W zero-padding columns (read by the dx=0 / dx=2 taps).
        pad_ref[:, PADL - 1:PADL, :] = jnp.zeros((TH + 2, 1, Cm), jnp.bfloat16)
        pad_ref[:, PADL + W:PADL + W + 1, :] = jnp.zeros((TH + 2, 1, Cm), jnp.bfloat16)
        # Halo rows (clamped copies of image rows 0 / H-1; edge tiles zero
        # them below).  Interior store starts at sublane offset 16 -> aligned.
        pad_ref[0:1, PADL:PADL + W, :] = conv1(xt_ref[0, 0]).reshape(1, W, Cm)
        pad_ref[TH + 1:TH + 2, PADL:PADL + W, :] = conv1(xb_ref[0, 0]).reshape(1, W, Cm)
        # Center rows, chunked so the live f32 conv1 tile stays small.
        for c in range(NC):
            r0 = c * RC
            rows = xc_ref[0, r0:r0 + RC].reshape(RC * W, Cp)
            pad_ref[1 + r0:1 + r0 + RC, PADL:PADL + W, :] = (
                conv1(rows).reshape(RC, W, Cm))

        # conv2's H zero padding: only the first / last row tile of the image
        # needs it (pl.when -> no per-step iota / divide / full-tile select).
        @pl.when(i == 0)
        def _():
            pad_ref[0:1, PADL:PADL + W, :] = jnp.zeros((1, W, Cm), jnp.bfloat16)

        @pl.when(i == nH - 1)
        def _():
            pad_ref[TH + 1:TH + 2, PADL:PADL + W, :] = jnp.zeros((1, W, Cm), jnp.bfloat16)

        # --- phase 2: conv2 (3x3, 3 fat-K matmuls) + bn2 + relu,
        #              conv3 (1x1) + bn3, residual add, final relu ----------
        # TODO(synk): on v7x the MRB makes the 9-matmul (per-tap) form cheaper
        #   than the concatenated fat-K form; keep fat-K for v5e/v6e MRF.
        for c in range(NC):
            r0 = c * RC
            acc = jnp.zeros((RC * W, Cm), jnp.float32)
            for dy in range(3):
                taps = [pad_ref[r0 + dy:r0 + dy + RC,
                                PADL - 1 + dx:PADL - 1 + dx + W, :]
                        .reshape(RC * W, Cm) for dx in range(3)]
                patch = jnp.concatenate(taps, axis=1)          # bf16, lane-aligned
                acc = acc + jnp.dot(patch, w2_ref[dy],
                                    preferred_element_type=jnp.float32)
            t2 = jnp.maximum(acc * s2_ref[...] + b2_ref[...], 0.0)

            t3 = jnp.dot(t2.astype(jnp.bfloat16), w3_ref[...],
                         preferred_element_type=jnp.float32)
            t3 = t3 * s3_ref[...] + b3_ref[...]
            resid = xc_ref[0, r0:r0 + RC].reshape(RC * W, Cp).astype(jnp.float32)
            out = jnp.maximum(t3 + resid, 0.0)
            out_ref[0, r0:r0 + RC] = out.reshape(RC, W, Cp).astype(out_dtype)

    # ---- grid / specs ------------------------------------------------------
    const2 = lambda: pl.BlockSpec((1, Cm), lambda n, i: (0, 0))
    const2p = lambda: pl.BlockSpec((1, Cp), lambda n, i: (0, 0))

    grid_spec = pltpu.PrefetchScalarGridSpec(
        num_scalar_prefetch=0,
        grid=(N, nH),
        in_specs=[
            # center rows of the tile
            pl.BlockSpec((1, TH, W, Cp), lambda n, i: (n, i, 0, 0)),
            # top / bottom 1-row halos (row index clamped; zeroed in-kernel on edges)
            pl.BlockSpec((1, 1, W, Cp),
                         lambda n, i: (n, jnp.maximum(i * TH - 1, 0), 0, 0)),
            pl.BlockSpec((1, 1, W, Cp),
                         lambda n, i: (n, jnp.minimum(i * TH + TH, H - 1), 0, 0)),
            pl.BlockSpec((Cp, Cm), lambda n, i: (0, 0)),           # w1
            const2(), const2(),                                    # s1, b1
            pl.BlockSpec((3, 3 * Cm, Cm), lambda n, i: (0, 0, 0)),  # w2
            const2(), const2(),                                    # s2, b2
            pl.BlockSpec((Cm, Cp), lambda n, i: (0, 0)),           # w3
            const2p(), const2p(),                                  # s3, b3
        ],
        out_specs=pl.BlockSpec((1, TH, W, Cp), lambda n, i: (n, i, 0, 0)),
        scratch_shapes=[pltpu.VMEM((TH + 2, WP, Cm), jnp.bfloat16)],
    )

    # VMEM budget: double-buffered blocks + weights + scratch, clamped to the
    # detected chip capacity (v7x: 64 MiB physical; v5e/v6e: 128 MiB).
    bpe_out = jnp.dtype(out_dtype).itemsize
    est = (2 * (TH * W * Cp * 2 + 2 * W * Cp * 2)            # x center + halos (bf16, 2 bufs)
           + 2 * TH * W * Cp * bpe_out                        # out block (2 bufs)
           + 2 * 2 * (Cp * Cm + 9 * Cm * Cm + Cm * Cp)        # weights bf16 (2 bufs)
           + (TH + 2) * _round_up(WP, 16) * Cm * 2)           # bf16 scratch
    try:
        vmem_cap = int(pltpu.get_tpu_info().vmem_capacity_bytes)
    except Exception:  # pragma: no cover - conservative fallback
        vmem_cap = 128 * 1024 * 1024
    vmem_limit = int(min(max(32 * 1024 * 1024, 2 * est),
                         100 * 1024 * 1024, 0.85 * vmem_cap))

    flops = 2 * N * H * W * (Cp * Cm + 9 * Cm * Cm + Cm * Cp)
    bytes_accessed = int(x_p.size * 2 * (1.0 + 2.0 / TH)
                         + N * H * W * Cp * bpe_out
                         + (w1p.size + w2p.size + w3p.size) * 2)

    # NOTE(v7x): grid=(N, nH) with both axes 'parallel'; keep N*nH even where
    # possible so both TensorCores stay busy (N=2 here).
    out = pl.pallas_call(
        kernel,
        out_shape=jax.ShapeDtypeStruct((N, H, W, Cp), out_dtype),
        grid_spec=grid_spec,
        compiler_params=pltpu.CompilerParams(
            dimension_semantics=("parallel", "parallel"),
            vmem_limit_bytes=vmem_limit),
        cost_estimate=pl.CostEstimate(flops=int(flops), transcendentals=0,
                                      bytes_accessed=bytes_accessed),
    )(x_p, x_p, x_p, w1p, s1p, b1p, w2p, s2p, b2p, w3p, s3p, b3p)

    # drop channel padding, back to NCHW (module-facing layout)
    return jnp.transpose(out[..., :Cout], (0, 3, 1, 2))


def bottleneck_reference(x_nchw, params):
    """Pure-JAX f32 reference (inference-mode BN folded into scale/shift)."""
    (w1, s1, b1, w2, s2, b2, w3, s3, b3) = params
    x = jnp.transpose(x_nchw, (0, 2, 3, 1))
    t = jnp.einsum('nhwc,cd->nhwd', x, w1)
    t = jnp.maximum(t * s1 + b1, 0.0)
    t = jax.lax.conv_general_dilated(
        t, w2, window_strides=(1, 1), padding=((1, 1), (1, 1)),
        dimension_numbers=('NHWC', 'HWIO', 'NHWC'))
    t = jnp.maximum(t * s2 + b2, 0.0)
    t = jnp.einsum('nhwc,cd->nhwd', t, w3)
    t = t * s3 + b3
    out = jnp.maximum(t + x, 0.0)
    return jnp.transpose(out, (0, 3, 1, 2))


def make_params(key, in_channels, out_channels, eps=1e-5):
    """Deterministic synthetic params; BN (gamma,beta,mean,var) folded to scale/shift."""
    Cmid = out_channels
    Cout = out_channels * 4
    ks = jax.random.split(key, 12)

    def bn_fold(kg, kb, km, kv, c):
        gamma = 1.0 + 0.1 * jax.random.normal(kg, (c,), jnp.float32)
        beta = 0.1 * jax.random.normal(kb, (c,), jnp.float32)
        mean = 0.1 * jax.random.normal(km, (c,), jnp.float32)
        var = jnp.abs(jax.random.normal(kv, (c,), jnp.float32)) + 0.5
        scale = gamma / jnp.sqrt(var + eps)
        shift = beta - mean * scale
        return scale.reshape(1, c), shift.reshape(1, c)

    w1 = 0.1 * jax.random.normal(ks[0], (in_channels, Cmid), jnp.float32)
    s1, b1 = bn_fold(ks[1], ks[2], ks[3], ks[4], Cmid)
    w2 = 0.1 * jax.random.normal(ks[5], (3, 3, Cmid, Cmid), jnp.float32)   # HWIO
    s2, b2 = bn_fold(ks[6], ks[7], ks[8], ks[9], Cmid)
    w3 = 0.1 * jax.random.normal(ks[10], (Cmid, Cout), jnp.float32)
    s3, b3 = bn_fold(ks[11], ks[0], ks[5], ks[10], Cout)
    return (w1, s1, b1, w2, s2, b2, w3, s3, b3)


if __name__ == "__main__":
    # BottleneckNew(in_channels=16, out_channels=4): Cin = 4*Cmid = 16,
    # batch=2, spatial 16x16 (identity / downsample=None path).
    N, Cmid, H, W = 2, 4, 16, 16
    Cin = Cmid * 4

    key = jax.random.PRNGKey(0)
    kx, kp = jax.random.split(key)
    x = jax.random.normal(kx, (N, Cin, H, W), jnp.float32)   # PyTorch NCHW input
    params = make_params(kp, Cin, Cmid)

    out = jax.block_until_ready(bottleneck_pallas(x, params))
    ref = jax.block_until_ready(bottleneck_reference(x, params))

    # bf16 MXU inputs / bf16 residual path (f32 accumulation + epilogues) vs.
    # an all-f32 reference: tolerance sized for bf16 input rounding.
    np.testing.assert_allclose(np.asarray(out), np.asarray(ref),
                               rtol=2e-2, atol=2e-2)
    print("KERNEL_OK")
</pallas_src>

<mosaic_0001>
module attributes {stable_mosaic.version = 11 : i64} {
  func.func @kernel(%arg0: i32, %arg1: i32, %arg2: memref<1x8x16x128xbf16, #tpu.memory_space<vmem>>, %arg3: memref<1x1x16x128xbf16, #tpu.memory_space<vmem>>, %arg4: memref<1x1x16x128xbf16, #tpu.memory_space<vmem>>, %arg5: memref<128x128xbf16, #tpu.memory_space<vmem>>, %arg6: memref<1x128xf32, #tpu.memory_space<vmem>>, %arg7: memref<1x128xf32, #tpu.memory_space<vmem>>, %arg8: memref<3x384x128xbf16, #tpu.memory_space<vmem>>, %arg9: memref<1x128xf32, #tpu.memory_space<vmem>>, %arg10: memref<1x128xf32, #tpu.memory_space<vmem>>, %arg11: memref<128x128xbf16, #tpu.memory_space<vmem>>, %arg12: memref<1x128xf32, #tpu.memory_space<vmem>>, %arg13: memref<1x128xf32, #tpu.memory_space<vmem>>, %arg14: memref<1x8x16x128xf32, #tpu.memory_space<vmem>>, %arg15: memref<10x33x128xbf16, #tpu.memory_space<vmem>>) attributes {dimension_semantics = [#tpu.dimension_semantics<parallel>, #tpu.dimension_semantics<parallel>], iteration_bounds = array<i64: 2, 2>, scalar_prefetch = 0 : i64, scratch_operands = 1 : i64, tpu.core_type = #tpu.core_type<tc>, window_params = [{transform_indices = @transform_0, window_bounds = array<i64: 1, 8, 16, 128>}, {transform_indices = @transform_1, window_bounds = array<i64: 1, 1, 16, 128>}, {transform_indices = @transform_2, window_bounds = array<i64: 1, 1, 16, 128>}, {pipeline_mode = #tpu.pipeline_mode<synchronous>, transform_indices = @transform_3, window_bounds = array<i64: 128, 128>}, {pipeline_mode = #tpu.pipeline_mode<synchronous>, transform_indices = @transform_4, window_bounds = array<i64: 1, 128>}, {pipeline_mode = #tpu.pipeline_mode<synchronous>, transform_indices = @transform_5, window_bounds = array<i64: 1, 128>}, {pipeline_mode = #tpu.pipeline_mode<synchronous>, transform_indices = @transform_6, window_bounds = array<i64: 3, 384, 128>}, {pipeline_mode = #tpu.pipeline_mode<synchronous>, transform_indices = @transform_7, window_bounds = array<i64: 1, 128>}, {pipeline_mode = #tpu.pipeline_mode<synchronous>, transform_indices = @transform_8, window_bounds = array<i64: 1, 128>}, {pipeline_mode = #tpu.pipeline_mode<synchronous>, transform_indices = @transform_9, window_bounds = array<i64: 128, 128>}, {pipeline_mode = #tpu.pipeline_mode<synchronous>, transform_indices = @transform_10, window_bounds = array<i64: 1, 128>}, {pipeline_mode = #tpu.pipeline_mode<synchronous>, transform_indices = @transform_11, window_bounds = array<i64: 1, 128>}, {transform_indices = @transform_12, window_bounds = array<i64: 1, 8, 16, 128>}]} {
    %cst = arith.constant 0.000000e+00 : bf16
    %0 = vector.broadcast %cst : bf16 to vector<10x1x128xbf16>
    %c0 = arith.constant 0 : index
    %c15 = arith.constant 15 : index
    %c0_0 = arith.constant 0 : index
    %1 = vector.load %arg15[%c0, %c15, %c0_0] : memref<10x33x128xbf16, #tpu.memory_space<vmem>>, vector<10x1x128xbf16>
    tpu.vector_store %arg15[%c0, %c15, %c0_0], %0 {strides = array<i32>} : memref<10x33x128xbf16, #tpu.memory_space<vmem>>, vector<10x1x128xbf16>,
    %cst_1 = arith.constant 0.000000e+00 : bf16
    %2 = vector.broadcast %cst_1 : bf16 to vector<10x1x128xbf16>
    %c0_2 = arith.constant 0 : index
    %c32 = arith.constant 32 : index
    %c0_3 = arith.constant 0 : index
    %3 = vector.load %arg15[%c0_2, %c32, %c0_3] : memref<10x33x128xbf16, #tpu.memory_space<vmem>>, vector<10x1x128xbf16>
    tpu.vector_store %arg15[%c0_2, %c32, %c0_3], %2 {strides = array<i32>} : memref<10x33x128xbf16, #tpu.memory_space<vmem>>, vector<10x1x128xbf16>,
    %c0_4 = arith.constant 0 : index
    %c0_5 = arith.constant 0 : index
    %c0_6 = arith.constant 0 : index
    %c0_7 = arith.constant 0 : index
    %4 = vector.load %arg3[%c0_4, %c0_5, %c0_6, %c0_7] : memref<1x1x16x128xbf16, #tpu.memory_space<vmem>>, vector<1x1x16x128xbf16>
    %5 = vector.shape_cast %4 : vector<1x1x16x128xbf16> to vector<16x128xbf16>
    %c0_8 = arith.constant 0 : index
    %c0_9 = arith.constant 0 : index
    %6 = vector.load %arg5[%c0_8, %c0_9] : memref<128x128xbf16, #tpu.memory_space<vmem>>, vector<128x128xbf16>
    %cst_10 = arith.constant dense<0.000000e+00> : vector<16x128xf32>
    %7 = tpu.matmul %5, %6, %cst_10 {dimension_numbers = #tpu.dot_dimension_numbers<[1], [0], [0], [1], [0, 0, 1, 1], [], []>} : vector<16x128xbf16>, vector<128x128xbf16>, vector<16x128xf32> -> vector<16x128xf32>
    %c0_11 = arith.constant 0 : index
    %c0_12 = arith.constant 0 : index
    %8 = vector.load %arg6[%c0_11, %c0_12] : memref<1x128xf32, #tpu.memory_space<vmem>>, vector<1x128xf32>
    %9 = vector.broadcast %8 : vector<1x128xf32> to vector<16x128xf32>
    %10 = arith.mulf %7, %9 : vector<16x128xf32>
    %c0_13 = arith.constant 0 : index
    %c0_14 = arith.constant 0 : index
    %11 = vector.load %arg7[%c0_13, %c0_14] : memref<1x128xf32, #tpu.memory_space<vmem>>, vector<1x128xf32>
    %12 = vector.broadcast %11 : vector<1x128xf32> to vector<16x128xf32>
    %13 = arith.addf %10, %12 : vector<16x128xf32>
    %cst_15 = arith.constant 0.000000e+00 : f32
    %14 = vector.broadcast %cst_15 : f32 to vector<16x128xf32>
    %15 = arith.maximumf %13, %14 : vector<16x128xf32>
    %16 = arith.truncf %15 : vector<16x128xf32> to vector<16x128xbf16>
    %17 = vector.shape_cast %16 : vector<16x128xbf16> to vector<1x16x128xbf16>
    %c0_16 = arith.constant 0 : index
    %c16 = arith.constant 16 : index
    %c0_17 = arith.constant 0 : index
    %18 = vector.load %arg15[%c0_16, %c16, %c0_17] : memref<10x33x128xbf16, #tpu.memory_space<vmem>>, vector<1x16x128xbf16>
    tpu.vector_store %arg15[%c0_16, %c16, %c0_17], %17 {strides = array<i32>} : memref<10x33x128xbf16, #tpu.memory_space<vmem>>, vector<1x16x128xbf16>,
    %c0_18 = arith.constant 0 : index
    %c0_19 = arith.constant 0 : index
    %c0_20 = arith.constant 0 : index
    %c0_21 = arith.constant 0 : index
    %19 = vector.load %arg4[%c0_18, %c0_19, %c0_20, %c0_21] : memref<1x1x16x128xbf16, #tpu.memory_space<vmem>>, vector<1x1x16x128xbf16>
    %20 = vector.shape_cast %19 : vector<1x1x16x128xbf16> to vector<16x128xbf16>
    %c0_22 = arith.constant 0 : index
    %c0_23 = arith.constant 0 : index
    %21 = vector.load %arg5[%c0_22, %c0_23] : memref<128x128xbf16, #tpu.memory_space<vmem>>, vector<128x128xbf16>
    %cst_24 = arith.constant dense<0.000000e+00> : vector<16x128xf32>
    %22 = tpu.matmul %20, %21, %cst_24 {dimension_numbers = #tpu.dot_dimension_numbers<[1], [0], [0], [1], [0, 0, 1, 1], [], []>} : vector<16x128xbf16>, vector<128x128xbf16>, vector<16x128xf32> -> vector<16x128xf32>
    %c0_25 = arith.constant 0 : index
    %c0_26 = arith.constant 0 : index
    %23 = vector.load %arg6[%c0_25, %c0_26] : memref<1x128xf32, #tpu.memory_space<vmem>>, vector<1x128xf32>
    %24 = vector.broadcast %23 : vector<1x128xf32> to vector<16x128xf32>
    %25 = arith.mulf %22, %24 : vector<16x128xf32>
    %c0_27 = arith.constant 0 : index
    %c0_28 = arith.constant 0 : index
    %26 = vector.load %arg7[%c0_27, %c0_28] : memref<1x128xf32, #tpu.memory_space<vmem>>, vector<1x128xf32>
    %27 = vector.broadcast %26 : vector<1x128xf32> to vector<16x128xf32>
    %28 = arith.addf %25, %27 : vector<16x128xf32>
    %cst_29 = arith.constant 0.000000e+00 : f32
    %29 = vector.broadcast %cst_29 : f32 to vector<16x128xf32>
    %30 = arith.maximumf %28, %29 : vector<16x128xf32>
    %31 = arith.truncf %30 : vector<16x128xf32> to vector<16x128xbf16>
    %32 = vector.shape_cast %31 : vector<16x128xbf16> to vector<1x16x128xbf16>
    %c9 = arith.constant 9 : index
    %c16_30 = arith.constant 16 : index
    %c0_31 = arith.constant 0 : index
    %33 = vector.load %arg15[%c9, %c16_30, %c0_31] : memref<10x33x128xbf16, #tpu.memory_space<vmem>>, vector<1x16x128xbf16>
    tpu.vector_store %arg15[%c9, %c16_30, %c0_31], %32 {strides = array<i32>} : memref<10x33x128xbf16, #tpu.memory_space<vmem>>, vector<1x16x128xbf16>,
    %c0_32 = arith.constant 0 : index
    %c0_33 = arith.constant 0 : index
    %c0_34 = arith.constant 0 : index
    %c0_35 = arith.constant 0 : index
    %34 = vector.load %arg2[%c0_32, %c0_33, %c0_34, %c0_35] : memref<1x8x16x128xbf16, #tpu.memory_space<vmem>>, vector<1x8x16x128xbf16>
    %35 = vector.shape_cast %34 : vector<1x8x16x128xbf16> to vector<8x16x128xbf16>
    %36 = vector.shape_cast %35 : vector<8x16x128xbf16> to vector<128x128xbf16>
    %c0_36 = arith.constant 0 : index
    %c0_37 = arith.constant 0 : index
    %37 = vector.load %arg5[%c0_36, %c0_37] : memref<128x128xbf16, #tpu.memory_space<vmem>>, vector<128x128xbf16>
    %cst_38 = arith.constant dense<0.000000e+00> : vector<128x128xf32>
    %38 = tpu.matmul %36, %37, %cst_38 {dimension_numbers = #tpu.dot_dimension_numbers<[1], [0], [0], [1], [0, 0, 1, 1], [], []>} : vector<128x128xbf16>, vector<128x128xbf16>, vector<128x128xf32> -> vector<128x128xf32>
    %c0_39 = arith.constant 0 : index
    %c0_40 = arith.constant 0 : index
    %39 = vector.load %arg6[%c0_39, %c0_40] : memref<1x128xf32, #tpu.memory_space<vmem>>, vector<1x128xf32>
    %40 = vector.broadcast %39 : vector<1x128xf32> to vector<128x128xf32>
    %41 = arith.mulf %38, %40 : vector<128x128xf32>
    %c0_41 = arith.constant 0 : index
    %c0_42 = arith.constant 0 : index
    %42 = vector.load %arg7[%c0_41, %c0_42] : memref<1x128xf32, #tpu.memory_space<vmem>>, vector<1x128xf32>
    %43 = vector.broadcast %42 : vector<1x128xf32> to vector<128x128xf32>
    %44 = arith.addf %41, %43 : vector<128x128xf32>
    %cst_43 = arith.constant 0.000000e+00 : f32
    %45 = vector.broadcast %cst_43 : f32 to vector<128x128xf32>
    %46 = arith.maximumf %44, %45 : vector<128x128xf32>
    %47 = arith.truncf %46 : vector<128x128xf32> to vector<128x128xbf16>
    %48 = vector.shape_cast %47 : vector<128x128xbf16> to vector<8x16x128xbf16>
    %c1 = arith.constant 1 : index
    %c16_44 = arith.constant 16 : index
    %c0_45 = arith.constant 0 : index
    %49 = vector.load %arg15[%c1, %c16_44, %c0_45] : memref<10x33x128xbf16, #tpu.memory_space<vmem>>, vector<8x16x128xbf16>
    tpu.vector_store %arg15[%c1, %c16_44, %c0_45], %48 {strides = array<i32>} : memref<10x33x128xbf16, #tpu.memory_space<vmem>>, vector<8x16x128xbf16>,
    %c0_i32 = arith.constant 0 : i32
    %50 = arith.cmpi eq, %arg1, %c0_i32 : i32
    %51 = arith.extui %50 : i1 to i32
    %c0_i32_46 = arith.constant 0 : i32
    %52 = arith.cmpi ne, %51, %c0_i32_46 : i32
    scf.if %52 {
      %cst_107 = arith.constant 0.000000e+00 : bf16
      %118 = vector.broadcast %cst_107 : bf16 to vector<1x16x128xbf16>
      %c0_108 = arith.constant 0 : index
      %c16_109 = arith.constant 16 : index
      %c0_110 = arith.constant 0 : index
      %119 = vector.load %arg15[%c0_108, %c16_109, %c0_110] : memref<10x33x128xbf16, #tpu.memory_space<vmem>>, vector<1x16x128xbf16>
      tpu.vector_store %arg15[%c0_108, %c16_109, %c0_110], %118 {strides = array<i32>} : memref<10x33x128xbf16, #tpu.memory_space<vmem>>, vector<1x16x128xbf16>,
    } else {
    }
    %c1_i32 = arith.constant 1 : i32
    %53 = arith.cmpi eq, %arg1, %c1_i32 : i32
    %54 = arith.extui %53 : i1 to i32
    %c0_i32_47 = arith.constant 0 : i32
    %55 = arith.cmpi ne, %54, %c0_i32_47 : i32
    scf.if %55 {
      %cst_107 = arith.constant 0.000000e+00 : bf16
      %118 = vector.broadcast %cst_107 : bf16 to vector<1x16x128xbf16>
      %c9_108 = arith.constant 9 : index
      %c16_109 = arith.constant 16 : index
      %c0_110 = arith.constant 0 : index
      %119 = vector.load %arg15[%c9_108, %c16_109, %c0_110] : memref<10x33x128xbf16, #tpu.memory_space<vmem>>, vector<1x16x128xbf16>
      tpu.vector_store %arg15[%c9_108, %c16_109, %c0_110], %118 {strides = array<i32>} : memref<10x33x128xbf16, #tpu.memory_space<vmem>>, vector<1x16x128xbf16>,
    } else {
    }
    %cst_48 = arith.constant 0.000000e+00 : f32
    %56 = vector.broadcast %cst_48 : f32 to vector<128x128xf32>
    %c0_49 = arith.constant 0 : index
    %c15_50 = arith.constant 15 : index
    %c0_51 = arith.constant 0 : index
    %57 = vector.load %arg15[%c0_49, %c15_50, %c0_51] : memref<10x33x128xbf16, #tpu.memory_space<vmem>>, vector<8x16x128xbf16>
    %58 = vector.shape_cast %57 : vector<8x16x128xbf16> to vector<128x128xbf16>
    %c0_52 = arith.constant 0 : index
    %c16_53 = arith.constant 16 : index
    %c0_54 = arith.constant 0 : index
    %59 = vector.load %arg15[%c0_52, %c16_53, %c0_54] : memref<10x33x128xbf16, #tpu.memory_space<vmem>>, vector<8x16x128xbf16>
    %60 = vector.shape_cast %59 : vector<8x16x128xbf16> to vector<128x128xbf16>
    %c0_55 = arith.constant 0 : index
    %c17 = arith.constant 17 : index
    %c0_56 = arith.constant 0 : index
    %61 = vector.load %arg15[%c0_55, %c17, %c0_56] : memref<10x33x128xbf16, #tpu.memory_space<vmem>>, vector<8x16x128xbf16>
    %62 = vector.shape_cast %61 : vector<8x16x128xbf16> to vector<128x128xbf16>
    %63 = tpu.concatenate %58, %60, %62 in 1 : vector<128x128xbf16>, vector<128x128xbf16>, vector<128x128xbf16> -> vector<128x384xbf16>
    %c0_57 = arith.constant 0 : index
    %c0_58 = arith.constant 0 : index
    %c0_59 = arith.constant 0 : index
    %64 = vector.load %arg8[%c0_57, %c0_58, %c0_59] : memref<3x384x128xbf16, #tpu.memory_space<vmem>>, vector<1x384x128xbf16>
    %65 = vector.shape_cast %64 : vector<1x384x128xbf16> to vector<384x128xbf16>
    %cst_60 = arith.constant dense<0.000000e+00> : vector<128x128xf32>
    %66 = tpu.matmul %63, %65, %cst_60 {dimension_numbers = #tpu.dot_dimension_numbers<[1], [0], [0], [1], [0, 0, 1, 1], [], []>} : vector<128x384xbf16>, vector<384x128xbf16>, vector<128x128xf32> -> vector<128x128xf32>
    %67 = arith.addf %56, %66 : vector<128x128xf32>
    %c1_61 = arith.constant 1 : index
    %c15_62 = arith.constant 15 : index
    %c0_63 = arith.constant 0 : index
    %68 = vector.load %arg15[%c1_61, %c15_62, %c0_63] : memref<10x33x128xbf16, #tpu.memory_space<vmem>>, vector<8x16x128xbf16>
    %69 = vector.shape_cast %68 : vector<8x16x128xbf16> to vector<128x128xbf16>
    %c1_64 = arith.constant 1 : index
    %c16_65 = arith.constant 16 : index
    %c0_66 = arith.constant 0 : index
    %70 = vector.load %arg15[%c1_64, %c16_65, %c0_66] : memref<10x33x128xbf16, #tpu.memory_space<vmem>>, vector<8x16x128xbf16>
    %71 = vector.shape_cast %70 : vector<8x16x128xbf16> to vector<128x128xbf16>
    %c1_67 = arith.constant 1 : index
    %c17_68 = arith.constant 17 : index
    %c0_69 = arith.constant 0 : index
    %72 = vector.load %arg15[%c1_67, %c17_68, %c0_69] : memref<10x33x128xbf16, #tpu.memory_space<vmem>>, vector<8x16x128xbf16>
    %73 = vector.shape_cast %72 : vector<8x16x128xbf16> to vector<128x128xbf16>
    %74 = tpu.concatenate %69, %71, %73 in 1 : vector<128x128xbf16>, vector<128x128xbf16>, vector<128x128xbf16> -> vector<128x384xbf16>
    %c1_70 = arith.constant 1 : index
    %c0_71 = arith.constant 0 : index
    %c0_72 = arith.constant 0 : index
    %75 = vector.load %arg8[%c1_70, %c0_71, %c0_72] : memref<3x384x128xbf16, #tpu.memory_space<vmem>>, vector<1x384x128xbf16>
    %76 = vector.shape_cast %75 : vector<1x384x128xbf16> to vector<384x128xbf16>
    %cst_73 = arith.constant dense<0.000000e+00> : vector<128x128xf32>
    %77 = tpu.matmul %74, %76, %cst_73 {dimension_numbers = #tpu.dot_dimension_numbers<[1], [0], [0], [1], [0, 0, 1, 1], [], []>} : vector<128x384xbf16>, vector<384x128xbf16>, vector<128x128xf32> -> vector<128x128xf32>
    %78 = arith.addf %67, %77 : vector<128x128xf32>
    %c2 = arith.constant 2 : index
    %c15_74 = arith.constant 15 : index
    %c0_75 = arith.constant 0 : index
    %79 = vector.load %arg15[%c2, %c15_74, %c0_75] : memref<10x33x128xbf16, #tpu.memory_space<vmem>>, vector<8x16x128xbf16>
    %80 = vector.shape_cast %79 : vector<8x16x128xbf16> to vector<128x128xbf16>
    %c2_76 = arith.constant 2 : index
    %c16_77 = arith.constant 16 : index
    %c0_78 = arith.constant 0 : index
    %81 = vector.load %arg15[%c2_76, %c16_77, %c0_78] : memref<10x33x128xbf16, #tpu.memory_space<vmem>>, vector<8x16x128xbf16>
    %82 = vector.shape_cast %81 : vector<8x16x128xbf16> to vector<128x128xbf16>
    %c2_79 = arith.constant 2 : index
    %c17_80 = arith.constant 17 : index
    %c0_81 = arith.constant 0 : index
    %83 = vector.load %arg15[%c2_79, %c17_80, %c0_81] : memref<10x33x128xbf16, #tpu.memory_space<vmem>>, vector<8x16x128xbf16>
    %84 = vector.shape_cast %83 : vector<8x16x128xbf16> to vector<128x128xbf16>
    %85 = tpu.concatenate %80, %82, %84 in 1 : vector<128x128xbf16>, vector<128x128xbf16>, vector<128x128xbf16> -> vector<128x384xbf16>
    %c2_82 = arith.constant 2 : index
    %c0_83 = arith.constant 0 : index
    %c0_84 = arith.constant 0 : index
    %86 = vector.load %arg8[%c2_82, %c0_83, %c0_84] : memref<3x384x128xbf16, #tpu.memory_space<vmem>>, vector<1x384x128xbf16>
    %87 = vector.shape_cast %86 : vector<1x384x128xbf16> to vector<384x128xbf16>
    %cst_85 = arith.constant dense<0.000000e+00> : vector<128x128xf32>
    %88 = tpu.matmul %85, %87, %cst_85 {dimension_numbers = #tpu.dot_dimension_numbers<[1], [0], [0], [1], [0, 0, 1, 1], [], []>} : vector<128x384xbf16>, vector<384x128xbf16>, vector<128x128xf32> -> vector<128x128xf32>
    %89 = arith.addf %78, %88 : vector<128x128xf32>
    %c0_86 = arith.constant 0 : index
    %c0_87 = arith.constant 0 : index
    %90 = vector.load %arg9[%c0_86, %c0_87] : memref<1x128xf32, #tpu.memory_space<vmem>>, vector<1x128xf32>
    %91 = vector.broadcast %90 : vector<1x128xf32> to vector<128x128xf32>
    %92 = arith.mulf %89, %91 : vector<128x128xf32>
    %c0_88 = arith.constant 0 : index
    %c0_89 = arith.constant 0 : index
    %93 = vector.load %arg10[%c0_88, %c0_89] : memref<1x128xf32, #tpu.memory_space<vmem>>, vector<1x128xf32>
    %94 = vector.broadcast %93 : vector<1x128xf32> to vector<128x128xf32>
    %95 = arith.addf %92, %94 : vector<128x128xf32>
    %cst_90 = arith.constant 0.000000e+00 : f32
    %96 = vector.broadcast %cst_90 : f32 to vector<128x128xf32>
    %97 = arith.maximumf %95, %96 : vector<128x128xf32>
    %98 = arith.truncf %97 : vector<128x128xf32> to vector<128x128xbf16>
    %c0_91 = arith.constant 0 : index
    %c0_92 = arith.constant 0 : index
    %99 = vector.load %arg11[%c0_91, %c0_92] : memref<128x128xbf16, #tpu.memory_space<vmem>>, vector<128x128xbf16>
    %cst_93 = arith.constant dense<0.000000e+00> : vector<128x128xf32>
    %100 = tpu.matmul %98, %99, %cst_93 {dimension_numbers = #tpu.dot_dimension_numbers<[1], [0], [0], [1], [0, 0, 1, 1], [], []>} : vector<128x128xbf16>, vector<128x128xbf16>, vector<128x128xf32> -> vector<128x128xf32>
    %c0_94 = arith.constant 0 : index
    %c0_95 = arith.constant 0 : index
    %101 = vector.load %arg12[%c0_94, %c0_95] : memref<1x128xf32, #tpu.memory_space<vmem>>, vector<1x128xf32>
    %102 = vector.broadcast %101 : vector<1x128xf32> to vector<128x128xf32>
    %103 = arith.mulf %100, %102 : vector<128x128xf32>
    %c0_96 = arith.constant 0 : index
    %c0_97 = arith.constant 0 : index
    %104 = vector.load %arg13[%c0_96, %c0_97] : memref<1x128xf32, #tpu.memory_space<vmem>>, vector<1x128xf32>
    %105 = vector.broadcast %104 : vector<1x128xf32> to vector<128x128xf32>
    %106 = arith.addf %103, %105 : vector<128x128xf32>
    %c0_98 = arith.constant 0 : index
    %c0_99 = arith.constant 0 : index
    %c0_100 = arith.constant 0 : index
    %c0_101 = arith.constant 0 : index
    %107 = vector.load %arg2[%c0_98, %c0_99, %c0_100, %c0_101] : memref<1x8x16x128xbf16, #tpu.memory_space<vmem>>, vector<1x8x16x128xbf16>
    %108 = vector.shape_cast %107 : vector<1x8x16x128xbf16> to vector<8x16x128xbf16>
    %109 = vector.shape_cast %108 : vector<8x16x128xbf16> to vector<128x128xbf16>
    %110 = arith.extf %109 : vector<128x128xbf16> to vector<128x128xf32>
    %111 = arith.addf %106, %110 : vector<128x128xf32>
    %cst_102 = arith.constant 0.000000e+00 : f32
    %112 = vector.broadcast %cst_102 : f32 to vector<128x128xf32>
    %113 = arith.maximumf %111, %112 : vector<128x128xf32>
    %114 = vector.shape_cast %113 : vector<128x128xf32> to vector<8x16x128xf32>
    %c0_103 = arith.constant 0 : index
    %c0_104 = arith.constant 0 : index
    %c0_105 = arith.constant 0 : index
    %c0_106 = arith.constant 0 : index
    %115 = vector.load %arg14[%c0_103, %c0_104, %c0_105, %c0_106] : memref<1x8x16x128xf32, #tpu.memory_space<vmem>>, vector<1x8x16x128xf32>
    %116 = vector.shape_cast %115 : vector<1x8x16x128xf32> to vector<8x16x128xf32>
    %117 = vector.shape_cast %114 : vector<8x16x128xf32> to vector<1x8x16x128xf32>
    tpu.vector_store %arg14[%c0_103, %c0_104, %c0_105, %c0_106], %117 {strides = array<i32>} : memref<1x8x16x128xf32, #tpu.memory_space<vmem>>, vector<1x8x16x128xf32>,
    return
  }
  func.func @transform_0(%arg0: i32, %arg1: i32) -> (i32, i32, i32, i32) {
    %c0_i32 = arith.constant 0 : i32
    %c0_i32_0 = arith.constant 0 : i32
    %c0_i32_1 = arith.constant 0 : i32
    return %arg0, %arg1, %c0_i32, %c0_i32_0 : i32, i32, i32, i32
  }
  func.func @transform_1(%arg0: i32, %arg1: i32) -> (i32, i32, i32, i32) {
    %c8_i32 = arith.constant 8 : i32
    %0 = arith.muli %arg1, %c8_i32 : i32
    %c1_i32 = arith.constant 1 : i32
    %1 = arith.subi %0, %c1_i32 : i32
    %c0_i32 = arith.constant 0 : i32
    %2 = arith.maxsi %1, %c0_i32 : i32
    %c0_i32_0 = arith.constant 0 : i32
    %c0_i32_1 = arith.constant 0 : i32
    %c0_i32_2 = arith.constant 0 : i32
    return %arg0, %2, %c0_i32_0, %c0_i32_1 : i32, i32, i32, i32
  }
  func.func @transform_2(%arg0: i32, %arg1: i32) -> (i32, i32, i32, i32) {
    %c8_i32 = arith.constant 8 : i32
    %0 = arith.muli %arg1, %c8_i32 : i32
    %c8_i32_0 = arith.constant 8 : i32
    %1 = arith.addi %0, %c8_i32_0 : i32
    %c15_i32 = arith.constant 15 : i32
    %2 = arith.minsi %1, %c15_i32 : i32
    %c0_i32 = arith.constant 0 : i32
    %c0_i32_1 = arith.constant 0 : i32
    %c0_i32_2 = arith.constant 0 : i32
    return %arg0, %2, %c0_i32, %c0_i32_1 : i32, i32, i32, i32
  }
  func.func @transform_3(%arg0: i32, %arg1: i32) -> (i32, i32) {
    %c0_i32 = arith.constant 0 : i32
    %c0_i32_0 = arith.constant 0 : i32
    %c0_i32_1 = arith.constant 0 : i32
    return %c0_i32, %c0_i32_0 : i32, i32
  }
  func.func @transform_4(%arg0: i32, %arg1: i32) -> (i32, i32) {
    %c0_i32 = arith.constant 0 : i32
    %c0_i32_0 = arith.constant 0 : i32
    %c0_i32_1 = arith.constant 0 : i32
    return %c0_i32, %c0_i32_0 : i32, i32
  }
  func.func @transform_5(%arg0: i32, %arg1: i32) -> (i32, i32) {
    %c0_i32 = arith.constant 0 : i32
    %c0_i32_0 = arith.constant 0 : i32
    %c0_i32_1 = arith.constant 0 : i32
    return %c0_i32, %c0_i32_0 : i32, i32
  }
  func.func @transform_6(%arg0: i32, %arg1: i32) -> (i32, i32, i32) {
    %c0_i32 = arith.constant 0 : i32
    %c0_i32_0 = arith.constant 0 : i32
    %c0_i32_1 = arith.constant 0 : i32
    %c0_i32_2 = arith.constant 0 : i32
    return %c0_i32, %c0_i32_0, %c0_i32_1 : i32, i32, i32
  }
  func.func @transform_7(%arg0: i32, %arg1: i32) -> (i32, i32) {
    %c0_i32 = arith.constant 0 : i32
    %c0_i32_0 = arith.constant 0 : i32
    %c0_i32_1 = arith.constant 0 : i32
    return %c0_i32, %c0_i32_0 : i32, i32
  }
  func.func @transform_8(%arg0: i32, %arg1: i32) -> (i32, i32) {
    %c0_i32 = arith.constant 0 : i32
    %c0_i32_0 = arith.constant 0 : i32
    %c0_i32_1 = arith.constant 0 : i32
    return %c0_i32, %c0_i32_0 : i32, i32
  }
  func.func @transform_9(%arg0: i32, %arg1: i32) -> (i32, i32) {
    %c0_i32 = arith.constant 0 : i32
    %c0_i32_0 = arith.constant 0 : i32
    %c0_i32_1 = arith.constant 0 : i32
    return %c0_i32, %c0_i32_0 : i32, i32
  }
  func.func @transform_10(%arg0: i32, %arg1: i32) -> (i32, i32) {
    %c0_i32 = arith.constant 0 : i32
    %c0_i32_0 = arith.constant 0 : i32
    %c0_i32_1 = arith.constant 0 : i32
    return %c0_i32, %c0_i32_0 : i32, i32
  }
  func.func @transform_11(%arg0: i32, %arg1: i32) -> (i32, i32) {
    %c0_i32 = arith.constant 0 : i32
    %c0_i32_0 = arith.constant 0 : i32
    %c0_i32_1 = arith.constant 0 : i32
    return %c0_i32, %c0_i32_0 : i32, i32
  }
  func.func @transform_12(%arg0: i32, %arg1: i32) -> (i32, i32, i32, i32) {
    %c0_i32 = arith.constant 0 : i32
    %c0_i32_0 = arith.constant 0 : i32
    %c0_i32_1 = arith.constant 0 : i32
    return %arg0, %arg1, %c0_i32, %c0_i32_0 : i32, i32, i32, i32
  }
}

</mosaic_0001>

<llo_original>
// kernel: bottleneck_pallas.1
$region0: #{bottleneck_pallas.1}
  #allocation0 [shape = 'u32[]', space=smem, size = 0x4, offset = 0x4, fixed_abs, tag = 'smem constant byte address 0x4 - core index']
  #allocation1 [shape = 'u32[72,128]{1,0:T(1,128)}', space=vmem, size = 0x9000, scoped, tag = 'internal scratch']
  #allocation2 [shape = 'bf16[10,33,128]{2,1,0:T(8,128)(2,1)}', space=vmem, size = 0x19000, scoped, tag = 'scratch operand']
  %s0 = inlined_call_operand.vmem [shape: bf16[2,16,16,128], index: 0, kind: input, shape index: {}, may-alias: {0,1,2}]
  %s1 = inlined_call_operand.vmem [shape: bf16[2,16,16,128], index: 1, kind: input, shape index: {}, may-alias: {0,1,2}]
  %s2 = inlined_call_operand.vmem [shape: bf16[2,16,16,128], index: 2, kind: input, shape index: {}, may-alias: {0,1,2}]
  %s3 = inlined_call_operand.vmem [shape: bf16[128,128], index: 3, kind: input, shape index: {}]
  %s4 = inlined_call_operand.vmem [shape: f32[1,128], index: 4, kind: input, shape index: {}]
  %s5 = inlined_call_operand.vmem [shape: f32[1,128], index: 5, kind: input, shape index: {}]
  %s6 = inlined_call_operand.vmem [shape: bf16[3,384,128], index: 6, kind: input, shape index: {}]
  %s7 = inlined_call_operand.vmem [shape: f32[1,128], index: 7, kind: input, shape index: {}]
  %s8 = inlined_call_operand.vmem [shape: f32[1,128], index: 8, kind: input, shape index: {}]
  %s9 = inlined_call_operand.vmem [shape: bf16[128,128], index: 9, kind: input, shape index: {}]
  %s10 = inlined_call_operand.vmem [shape: f32[1,128], index: 10, kind: input, shape index: {}]
  %s11 = inlined_call_operand.vmem [shape: f32[1,128], index: 11, kind: input, shape index: {}]
  %s12 = inlined_call_operand.vmem [shape: f32[2,16,16,128], index: 12, kind: output, shape index: {}]
  %s13 = sld [smem:[#allocation0]]
  $region89: #{bottleneck_pallas.1} parent=0
    _
  %s15 = ssub.s32 1, %s13
  %s16 = scalar_select 0, %s15, %s13
  loop: start=0, step=1, limit=6
  $region2: #{bottleneck_pallas.1} parent=0 // loop_pre_header
    _
  $region3: #{bottleneck_pallas.1} parent=0 // loop_header
    %s18 = sphi 0, %s22
    %p19 = scmp.ge.s32.totalorder %s18, 6
    %s25 = sphi 0, %s37
    %s26 = sphi 0, %s33
    %s27 = sphi 0, %s25
    %s28 = sphi 0, %s26
    %s29 = sphi 0, %s27
    %s30 = sphi 0, %s28
    %s42 = sphi 0, %s44
    %s45 = sphi 0, %s42
    %s46 = sphi 0, %s45
    %s62 = sphi 0, %s46
    %s78 = sphi 0, %s80
    %s81 = sphi 0, %s78
    %s82 = sphi 0, %s81
    %s98 = sphi 0, %s82
    %s114 = sphi 0, %s116
    %s117 = sphi 0, %s114
    %s118 = sphi 0, %s117
    %s134 = sphi 0, %s118
    %s138 = sphi 0, %s138
    %s140 = sphi 0, %s138
    %s141 = sphi 0, %s140
    %s155 = sphi 0, %s141
    %s159 = sphi 0, %s159
    %s161 = sphi 0, %s159
    %s162 = sphi 0, %s161
    %s176 = sphi 0, %s162
    %s180 = sphi 0, %s180
    %s182 = sphi 0, %s180
    %s183 = sphi 0, %s182
    %s197 = sphi 0, %s183
    %s201 = sphi 0, %s201
    %s203 = sphi 0, %s201
    %s204 = sphi 0, %s203
    %s218 = sphi 0, %s204
    %s222 = sphi 0, %s222
    %s224 = sphi 0, %s222
    %s225 = sphi 0, %s224
    %s239 = sphi 0, %s225
    %s243 = sphi 0, %s243
    %s245 = sphi 0, %s243
    %s246 = sphi 0, %s245
    %s260 = sphi 0, %s246
    %s264 = sphi 0, %s264
    %s266 = sphi 0, %s264
    %s267 = sphi 0, %s266
    %s281 = sphi 0, %s267
    %s285 = sphi 0, %s285
    %s287 = sphi 0, %s285
    %s288 = sphi 0, %s287
    %s302 = sphi 0, %s288
    %s306 = sphi 0, %s306
    %s308 = sphi 0, %s306
    %s309 = sphi 0, %s308
    %s323 = sphi 0, %s309
    %s331 = sphi 0, %s333
    %s334 = sphi 0, %s331
    %s335 = sphi 0, %s334
    %s351 = sphi 0, %s335
  $region4: #{bottleneck_pallas.1} parent=0 // loop_header_branch
    %21 = sbr.rel (%p19) target = $region8
  $region5: #{bottleneck_pallas.1} parent=0 // loop_body
    %s23 = ssub.s32 %s18, 1
    %s24 = ssub.s32 %s18, 2
    %s31 = sadd.s32 1, %s26
    %p32 = scmp.ge.s32.totalorder %s31, 2
    %s33 = scalar_select %p32, 0, %s31
    %s34 = sadd.s32 1, %s25
    %s35 = scalar_select %p32, %s34, %s25
    %p36 = scmp.ge.s32.totalorder %s35, 2
    %s37 = scalar_select %p36, 0, %s35
    %s38 = ssub.s32 %s25, %s37
    %s39 = ssub.s32 %s26, %s33
    %s40 = sor.u32 %s38, %s39
    %p41 = scmp.eq.s32.totalorder %s40, 0
    %s43 = sadd.s32 %s42, 1
    %s44 = scalar_select %p41, %s42, %s43
    %p47 = pneg %p41
    %p48 = scmp.eq.s32.totalorder %s18, 3
    %p49 = por %p47, %p48
    %p50 = scmp.ne.s32.totalorder %s42, %s45
    %p51 = scmp.eq.s32.totalorder %s18, 0
    %p52 = por %p50, %p51
    %p53 = scmp.ne.s32.totalorder %s42, %s45
    %p54 = scmp.eq.s32.totalorder %s23, 3
    %p55 = por %p53, %p54
    %p56 = scmp.ne.s32.totalorder %s45, %s46
    %p57 = scmp.eq.s32.totalorder %s23, 0
    %p58 = por %p56, %p57
    %p59 = scmp.ne.s32.totalorder %s45, %s46
    %p60 = scmp.eq.s32.totalorder %s24, 3
    %p61 = por %p59, %p60
    %p63 = scmp.ne.s32.totalorder %s46, %s62
    %p64 = scmp.eq.s32.totalorder %s24, 0
    %p65 = por %p63, %p64
    %s66 = smul.u32 %s26, 8
    %s67 = ssub.s32 %s66, 1
    %p68 = scmp.gt.s32.totalorder %s67, 0
    %s69 = scalar_select %p68, %s67, 0
    %s70 = smul.u32 %s33, 8
    %s71 = ssub.s32 %s70, 1
    %p72 = scmp.gt.s32.totalorder %s71, 0
    %s73 = scalar_select %p72, %s71, 0
    %s74 = ssub.s32 %s25, %s37
    %s75 = ssub.s32 %s69, %s73
    %s76 = sor.u32 %s74, %s75
    %p77 = scmp.eq.s32.totalorder %s76, 0
    %s79 = sadd.s32 %s78, 1
    %s80 = scalar_select %p77, %s78, %s79
    %p83 = pneg %p77
    %p84 = scmp.eq.s32.totalorder %s18, 3
    %p85 = por %p83, %p84
    %p86 = scmp.ne.s32.totalorder %s78, %s81
    %p87 = scmp.eq.s32.totalorder %s18, 0
    %p88 = por %p86, %p87
    %p89 = scmp.ne.s32.totalorder %s78, %s81
    %p90 = scmp.eq.s32.totalorder %s23, 3
    %p91 = por %p89, %p90
    %p92 = scmp.ne.s32.totalorder %s81, %s82
    %p93 = scmp.eq.s32.totalorder %s23, 0
    %p94 = por %p92, %p93
    %p95 = scmp.ne.s32.totalorder %s81, %s82
    %p96 = scmp.eq.s32.totalorder %s24, 3
    %p97 = por %p95, %p96
    %p99 = scmp.ne.s32.totalorder %s82, %s98
    %p100 = scmp.eq.s32.totalorder %s24, 0
    %p101 = por %p99, %p100
    %s102 = smul.u32 %s26, 8
    %s103 = sadd.s32 %s102, 8
    %p104 = scmp.lt.s32.totalorder %s103, 15
    %s105 = scalar_select %p104, %s103, 15
    %s106 = smul.u32 %s33, 8
    %s107 = sadd.s32 %s106, 8
    %p108 = scmp.lt.s32.totalorder %s107, 15
    %s109 = scalar_select %p108, %s107, 15
    %s110 = ssub.s32 %s25, %s37
    %s111 = ssub.s32 %s105, %s109
    %s112 = sor.u32 %s110, %s111
    %p113 = scmp.eq.s32.totalorder %s112, 0
    %s115 = sadd.s32 %s114, 1
    %s116 = scalar_select %p113, %s114, %s115
    %p119 = pneg %p113
    %p120 = scmp.eq.s32.totalorder %s18, 3
    %p121 = por %p119, %p120
    %p122 = scmp.ne.s32.totalorder %s114, %s117
    %p123 = scmp.eq.s32.totalorder %s18, 0
    %p124 = por %p122, %p123
    %p125 = scmp.ne.s32.totalorder %s114, %s117
    %p126 = scmp.eq.s32.totalorder %s23, 3
    %p127 = por %p125, %p126
    %p128 = scmp.ne.s32.totalorder %s117, %s118
    %p129 = scmp.eq.s32.totalorder %s23, 0
    %p130 = por %p128, %p129
    %p131 = scmp.ne.s32.totalorder %s117, %s118
    %p132 = scmp.eq.s32.totalorder %s24, 3
    %p133 = por %p131, %p132
    %p135 = scmp.ne.s32.totalorder %s118, %s134
    %p136 = scmp.eq.s32.totalorder %s24, 0
    %p137 = por %p135, %p136
    %s139 = sadd.s32 %s138, 1
    %p142 = scmp.eq.s32.totalorder %s18, 3
    %p143 = scmp.ne.s32.totalorder %s138, %s140
    %p144 = scmp.eq.s32.totalorder %s18, 0
    %p145 = por %p143, %p144
    %p146 = scmp.ne.s32.totalorder %s138, %s140
    %p147 = scmp.eq.s32.totalorder %s23, 3
    %p148 = por %p146, %p147
    %p149 = scmp.ne.s32.totalorder %s140, %s141
    %p150 = scmp.eq.s32.totalorder %s23, 0
    %p151 = por %p149, %p150
    %p152 = scmp.ne.s32.totalorder %s140, %s141
    %p153 = scmp.eq.s32.totalorder %s24, 3
    %p154 = por %p152, %p153
    %p156 = scmp.ne.s32.totalorder %s141, %s155
    %p157 = scmp.eq.s32.totalorder %s24, 0
    %p158 = por %p156, %p157
    %s160 = sadd.s32 %s159, 1
    %p163 = scmp.eq.s32.totalorder %s18, 3
    %p164 = scmp.ne.s32.totalorder %s159, %s161
    %p165 = scmp.eq.s32.totalorder %s18, 0
    %p166 = por %p164, %p165
    %p167 = scmp.ne.s32.totalorder %s159, %s161
    %p168 = scmp.eq.s32.totalorder %s23, 3
    %p169 = por %p167, %p168
    %p170 = scmp.ne.s32.totalorder %s161, %s162
    %p171 = scmp.eq.s32.totalorder %s23, 0
    %p172 = por %p170, %p171
    %p173 = scmp.ne.s32.totalorder %s161, %s162
    %p174 = scmp.eq.s32.totalorder %s24, 3
    %p175 = por %p173, %p174
    %p177 = scmp.ne.s32.totalorder %s162, %s176
    %p178 = scmp.eq.s32.totalorder %s24, 0
    %p179 = por %p177, %p178
    %s181 = sadd.s32 %s180, 1
    %p184 = scmp.eq.s32.totalorder %s18, 3
    %p185 = scmp.ne.s32.totalorder %s180, %s182
    %p186 = scmp.eq.s32.totalorder %s18, 0
    %p187 = por %p185, %p186
    %p188 = scmp.ne.s32.totalorder %s180, %s182
    %p189 = scmp.eq.s32.totalorder %s23, 3
    %p190 = por %p188, %p189
    %p191 = scmp.ne.s32.totalorder %s182, %s183
    %p192 = scmp.eq.s32.totalorder %s23, 0
    %p193 = por %p191, %p192
    %p194 = scmp.ne.s32.totalorder %s182, %s183
    %p195 = scmp.eq.s32.totalorder %s24, 3
    %p196 = por %p194, %p195
    %p198 = scmp.ne.s32.totalorder %s183, %s197
    %p199 = scmp.eq.s32.totalorder %s24, 0
    %p200 = por %p198, %p199
    %s202 = sadd.s32 %s201, 1
    %p205 = scmp.eq.s32.totalorder %s18, 3
    %p206 = scmp.ne.s32.totalorder %s201, %s203
    %p207 = scmp.eq.s32.totalorder %s18, 0
    %p208 = por %p206, %p207
    %p209 = scmp.ne.s32.totalorder %s201, %s203
    %p210 = scmp.eq.s32.totalorder %s23, 3
    %p211 = por %p209, %p210
    %p212 = scmp.ne.s32.totalorder %s203, %s204
    %p213 = scmp.eq.s32.totalorder %s23, 0
    %p214 = por %p212, %p213
    %p215 = scmp.ne.s32.totalorder %s203, %s204
    %p216 = scmp.eq.s32.totalorder %s24, 3
    %p217 = por %p215, %p216
    %p219 = scmp.ne.s32.totalorder %s204, %s218
    %p220 = scmp.eq.s32.totalorder %s24, 0
    %p221 = por %p219, %p220
    %s223 = sadd.s32 %s222, 1
    %p226 = scmp.eq.s32.totalorder %s18, 3
    %p227 = scmp.ne.s32.totalorder %s222, %s224
    %p228 = scmp.eq.s32.totalorder %s18, 0
    %p229 = por %p227, %p228
    %p230 = scmp.ne.s32.totalorder %s222, %s224
    %p231 = scmp.eq.s32.totalorder %s23, 3
    %p232 = por %p230, %p231
    %p233 = scmp.ne.s32.totalorder %s224, %s225
    %p234 = scmp.eq.s32.totalorder %s23, 0
    %p235 = por %p233, %p234
    %p236 = scmp.ne.s32.totalorder %s224, %s225
    %p237 = scmp.eq.s32.totalorder %s24, 3
    %p238 = por %p236, %p237
    %p240 = scmp.ne.s32.totalorder %s225, %s239
    %p241 = scmp.eq.s32.totalorder %s24, 0
    %p242 = por %p240, %p241
    %s244 = sadd.s32 %s243, 1
    %p247 = scmp.eq.s32.totalorder %s18, 3
    %p248 = scmp.ne.s32.totalorder %s243, %s245
    %p249 = scmp.eq.s32.totalorder %s18, 0
    %p250 = por %p248, %p249
    %p251 = scmp.ne.s32.totalorder %s243, %s245
    %p252 = scmp.eq.s32.totalorder %s23, 3
    %p253 = por %p251, %p252
    %p254 = scmp.ne.s32.totalorder %s245, %s246
    %p255 = scmp.eq.s32.totalorder %s23, 0
    %p256 = por %p254, %p255
    %p257 = scmp.ne.s32.totalorder %s245, %s246
    %p258 = scmp.eq.s32.totalorder %s24, 3
    %p259 = por %p257, %p258
    %p261 = scmp.ne.s32.totalorder %s246, %s260
    %p262 = scmp.eq.s32.totalorder %s24, 0
    %p263 = por %p261, %p262
    %s265 = sadd.s32 %s264, 1
    %p268 = scmp.eq.s32.totalorder %s18, 3
    %p269 = scmp.ne.s32.totalorder %s264, %s266
    %p270 = scmp.eq.s32.totalorder %s18, 0
    %p271 = por %p269, %p270
    %p272 = scmp.ne.s32.totalorder %s264, %s266
    %p273 = scmp.eq.s32.totalorder %s23, 3
    %p274 = por %p272, %p273
    %p275 = scmp.ne.s32.totalorder %s266, %s267
    %p276 = scmp.eq.s32.totalorder %s23, 0
    %p277 = por %p275, %p276
    %p278 = scmp.ne.s32.totalorder %s266, %s267
    %p279 = scmp.eq.s32.totalorder %s24, 3
    %p280 = por %p278, %p279
    %p282 = scmp.ne.s32.totalorder %s267, %s281
    %p283 = scmp.eq.s32.totalorder %s24, 0
    %p284 = por %p282, %p283
    %s286 = sadd.s32 %s285, 1
    %p289 = scmp.eq.s32.totalorder %s18, 3
    %p290 = scmp.ne.s32.totalorder %s285, %s287
    %p291 = scmp.eq.s32.totalorder %s18, 0
    %p292 = por %p290, %p291
    %p293 = scmp.ne.s32.totalorder %s285, %s287
    %p294 = scmp.eq.s32.totalorder %s23, 3
    %p295 = por %p293, %p294
    %p296 = scmp.ne.s32.totalorder %s287, %s288
    %p297 = scmp.eq.s32.totalorder %s23, 0
    %p298 = por %p296, %p297
    %p299 = scmp.ne.s32.totalorder %s287, %s288
    %p300 = scmp.eq.s32.totalorder %s24, 3
    %p301 = por %p299, %p300
    %p303 = scmp.ne.s32.totalorder %s288, %s302
    %p304 = scmp.eq.s32.totalorder %s24, 0
    %p305 = por %p303, %p304
    %s307 = sadd.s32 %s306, 1
    %p310 = scmp.eq.s32.totalorder %s18, 3
    %p311 = scmp.ne.s32.totalorder %s306, %s308
    %p312 = scmp.eq.s32.totalorder %s18, 0
    %p313 = por %p311, %p312
    %p314 = scmp.ne.s32.totalorder %s306, %s308
    %p315 = scmp.eq.s32.totalorder %s23, 3
    %p316 = por %p314, %p315
    %p317 = scmp.ne.s32.totalorder %s308, %s309
    %p318 = scmp.eq.s32.totalorder %s23, 0
    %p319 = por %p317, %p318
    %p320 = scmp.ne.s32.totalorder %s308, %s309
    %p321 = scmp.eq.s32.totalorder %s24, 3
    %p322 = por %p320, %p321
    %p324 = scmp.ne.s32.totalorder %s309, %s323
    %p325 = scmp.eq.s32.totalorder %s24, 0
    %p326 = por %p324, %p325
    %s327 = ssub.s32 %s25, %s37
    %s328 = ssub.s32 %s26, %s33
    %s329 = sor.u32 %s327, %s328
    %p330 = scmp.eq.s32.totalorder %s329, 0
    %s332 = sadd.s32 %s331, 1
    %s333 = scalar_select %p330, %s331, %s332
    %p336 = pneg %p330
    %p337 = scmp.eq.s32.totalorder %s18, 3
    %p338 = por %p336, %p337
    %p339 = scmp.ne.s32.totalorder %s331, %s334
    %p340 = scmp.eq.s32.totalorder %s18, 0
    %p341 = por %p339, %p340
    %p342 = scmp.ne.s32.totalorder %s331, %s334
    %p343 = scmp.eq.s32.totalorder %s23, 3
    %p344 = por %p342, %p343
    %p345 = scmp.ne.s32.totalorder %s334, %s335
    %p346 = scmp.eq.s32.totalorder %s23, 0
    %p347 = por %p345, %p346
    %p348 = scmp.ne.s32.totalorder %s334, %s335
    %p349 = scmp.eq.s32.totalorder %s24, 3
    %p350 = por %p348, %p349
    %p352 = scmp.ne.s32.totalorder %s335, %s351
    %p353 = scmp.eq.s32.totalorder %s24, 0
    %p354 = por %p352, %p353
    %p355 = scmp.le.s32.totalorder 1, %s18
    %p356 = scmp.lt.s32.totalorder %s18, 5
    %p357 = pnand %p355, %p356
    %p358 = pneg %p357
    // Predicated region
    $region9: #{bottleneck_pallas.1} parent=5 // pred_check
      _
    $region10: #{bottleneck_pallas.1} parent=5 // pred_check_branch
      %360 = sbr.rel (%p357) target = $region12
    $region11: #{bottleneck_pallas.1} parent=5 // pred_region
      %s361 = ssub.s32 %s18, 1
      // Predicated region
      $region13: #{bottleneck_pallas.1} parent=11 // pred_check
        %p362 = pneg %p151
      $region14: #{bottleneck_pallas.1} parent=11 // pred_check_branch
        %364 = sbr.rel (%p362) target = $region16
      $region15: #{bottleneck_pallas.1} parent=11 // pred_region
        _
      $region16: #{bottleneck_pallas.1} parent=11 // pred_fallthru
        _
      // Predicated region
      $region17: #{bottleneck_pallas.1} parent=11 // pred_check
        %p365 = pneg %p172
      $region18: #{bottleneck_pallas.1} parent=11 // pred_check_branch
        %367 = sbr.rel (%p365) target = $region20
      $region19: #{bottleneck_pallas.1} parent=11 // pred_region
        _
      $region20: #{bottleneck_pallas.1} parent=11 // pred_fallthru
        _
      // Predicated region
      $region21: #{bottleneck_pallas.1} parent=11 // pred_check
        %p368 = pneg %p193
      $region22: #{bottleneck_pallas.1} parent=11 // pred_check_branch
        %370 = sbr.rel (%p368) target = $region24
      $region23: #{bottleneck_pallas.1} parent=11 // pred_region
        _
      $region24: #{bottleneck_pallas.1} parent=11 // pred_fallthru
        _
      // Predicated region
      $region25: #{bottleneck_pallas.1} parent=11 // pred_check
        %p371 = pneg %p214
      $region26: #{bottleneck_pallas.1} parent=11 // pred_check_branch
        %373 = sbr.rel (%p371) target = $region28
      $region27: #{bottleneck_pallas.1} parent=11 // pred_region
        _
      $region28: #{bottleneck_pallas.1} parent=11 // pred_fallthru
        _
      // Predicated region
      $region29: #{bottleneck_pallas.1} parent=11 // pred_check
        %p374 = pneg %p235
      $region30: #{bottleneck_pallas.1} parent=11 // pred_check_branch
        %376 = sbr.rel (%p374) target = $region32
      $region31: #{bottleneck_pallas.1} parent=11 // pred_region
        _
      $region32: #{bottleneck_pallas.1} parent=11 // pred_fallthru
        _
      // Predicated region
      $region33: #{bottleneck_pallas.1} parent=11 // pred_check
        %p377 = pneg %p256
      $region34: #{bottleneck_pallas.1} parent=11 // pred_check_branch
        %379 = sbr.rel (%p377) target = $region36
      $region35: #{bottleneck_pallas.1} parent=11 // pred_region
        _
      $region36: #{bottleneck_pallas.1} parent=11 // pred_fallthru
        _
      // Predicated region
      $region37: #{bottleneck_pallas.1} parent=11 // pred_check
        %p380 = pneg %p277
      $region38: #{bottleneck_pallas.1} parent=11 // pred_check_branch
        %382 = sbr.rel (%p380) target = $region40
      $region39: #{bottleneck_pallas.1} parent=11 // pred_region
        _
      $region40: #{bottleneck_pallas.1} parent=11 // pred_fallthru
        _
      // Predicated region
      $region41: #{bottleneck_pallas.1} parent=11 // pred_check
        %p383 = pneg %p298
      $region42: #{bottleneck_pallas.1} parent=11 // pred_check_branch
        %385 = sbr.rel (%p383) target = $region44
      $region43: #{bottleneck_pallas.1} parent=11 // pred_region
        _
      $region44: #{bottleneck_pallas.1} parent=11 // pred_fallthru
        _
      // Predicated region
      $region45: #{bottleneck_pallas.1} parent=11 // pred_check
        %p386 = pneg %p319
      $region46: #{bottleneck_pallas.1} parent=11 // pred_check_branch
        %388 = sbr.rel (%p386) target = $region48
      $region47: #{bottleneck_pallas.1} parent=11 // pred_region
        _
      $region48: #{bottleneck_pallas.1} parent=11 // pred_fallthru
        _
    $region12: #{bottleneck_pallas.1} parent=5 // pred_fallthru
      _
    %p389 = scmp.lt.s32.totalorder %s18, 4
    // Predicated region
    $region49: #{bottleneck_pallas.1} parent=5 // pred_check
      %p390 = pneg %p389
    $region50: #{bottleneck_pallas.1} parent=5 // pred_check_branch
      %392 = sbr.rel (%p390) target = $region52
    $region51: #{bottleneck_pallas.1} parent=5 // pred_region
      // Predicated region
      $region53: #{bottleneck_pallas.1} parent=51 // pred_check
        %p393 = pneg %p52
      $region54: #{bottleneck_pallas.1} parent=51 // pred_check_branch
        %395 = sbr.rel (%p393) target = $region56
      $region55: #{bottleneck_pallas.1} parent=51 // pred_region
        %s396 = smul.u32 8, %s26
        %p397 = scmp.lt.s32.totalorder %s25, 1
        %s398 = scalar_select %p397, %s25, 1
        %p399 = scmp.lt.s32.totalorder %s396, 15
        %s400 = scalar_select %p399, %s396, 15
        %s401 = smul.addr %s400, 2
        %s402 = smul.addr %s398, 32
        %s403 = sadd.s32 %s401, %s402
        %s404 = smul.addr %s403, 4
        %s405 = scalar_lea.vmem %s0, %s404
        %s406 = smul.u32 8, %s26
      $region56: #{bottleneck_pallas.1} parent=51 // pred_fallthru
        _
      // Predicated region
      $region57: #{bottleneck_pallas.1} parent=51 // pred_check
        %p407 = pneg %p88
      $region58: #{bottleneck_pallas.1} parent=51 // pred_check_branch
        %409 = sbr.rel (%p407) target = $region60
      $region59: #{bottleneck_pallas.1} parent=51 // pred_region
        %s410 = smul.u32 %s26, 8
        %s411 = ssub.s32 %s410, 1
        %p412 = scmp.gt.s32.totalorder %s411, 0
        %s413 = scalar_select %p412, %s411, 0
        %p414 = scmp.lt.s32.totalorder %s25, 1
        %s415 = scalar_select %p414, %s25, 1
        %p416 = scmp.lt.s32.totalorder %s413, 15
        %s417 = scalar_select %p416, %s413, 15
        %s418 = smul.addr %s417, 2
        %s419 = smul.addr %s415, 32
        %s420 = sadd.s32 %s418, %s419
        %s421 = smul.addr %s420, 4
        %s422 = scalar_lea.vmem %s1, %s421
        %s423 = smul.u32 %s26, 8
        %s424 = ssub.s32 %s423, 1
        %p425 = scmp.gt.s32.totalorder %s424, 0
        %s426 = scalar_select %p425, %s424, 0
      $region60: #{bottleneck_pallas.1} parent=51 // pred_fallthru
        _
      // Predicated region
      $region61: #{bottleneck_pallas.1} parent=51 // pred_check
        %p427 = pneg %p124
      $region62: #{bottleneck_pallas.1} parent=51 // pred_check_branch
        %429 = sbr.rel (%p427) target = $region64
      $region63: #{bottleneck_pallas.1} parent=51 // pred_region
        %s430 = smul.u32 %s26, 8
        %s431 = sadd.s32 %s430, 8
        %p432 = scmp.lt.s32.totalorder %s431, 15
        %s433 = scalar_select %p432, %s431, 15
        %p434 = scmp.lt.s32.totalorder %s25, 1
        %s435 = scalar_select %p434, %s25, 1
        %p436 = scmp.lt.s32.totalorder %s433, 15
        %s437 = scalar_select %p436, %s433, 15
        %s438 = smul.addr %s437, 2
        %s439 = smul.addr %s435, 32
        %s440 = sadd.s32 %s438, %s439
        %s441 = smul.addr %s440, 4
        %s442 = scalar_lea.vmem %s2, %s441
        %s443 = smul.u32 %s26, 8
        %s444 = sadd.s32 %s443, 8
        %p445 = scmp.lt.s32.totalorder %s444, 15
        %s446 = scalar_select %p445, %s444, 15
      $region64: #{bottleneck_pallas.1} parent=51 // pred_fallthru
        _
    $region52: #{bottleneck_pallas.1} parent=5 // pred_fallthru
      _
    %p447 = scmp.le.s32.totalorder 1, %s18
    %p448 = scmp.lt.s32.totalorder %s18, 5
    %p449 = pnand %p447, %p448
    %p450 = pneg %p449
    // Predicated region
    $region65: #{bottleneck_pallas.1} parent=5 // pred_check
      _
    $region66: #{bottleneck_pallas.1} parent=5 // pred_check_branch
      %452 = sbr.rel (%p449) target = $region68
    $region67: #{bottleneck_pallas.1} parent=5 // pred_region
      %s453 = ssub.s32 %s18, 1
      %s454 = smul.u32 8, %s28
      %p455 = scmp.lt.s32.totalorder %s27, 1
      %s456 = scalar_select %p455, %s27, 1
      %p457 = scmp.lt.s32.totalorder %s454, 15
      %s458 = scalar_select %p457, %s454, 15
      %s459 = smul.addr %s458, 2
      %s460 = smul.addr %s456, 32
      %s461 = sadd.s32 %s459, %s460
      %s462 = smul.addr %s461, 4
      %s463 = scalar_lea.vmem %s0, %s462
      %p464 = pneg %p58
      %p465 = pneg %p55
      %s466 = smul.u32 %s28, 8
      %s467 = ssub.s32 %s466, 1
      %p468 = scmp.gt.s32.totalorder %s467, 0
      %s469 = scalar_select %p468, %s467, 0
      %p470 = scmp.lt.s32.totalorder %s27, 1
      %s471 = scalar_select %p470, %s27, 1
      %p472 = scmp.lt.s32.totalorder %s469, 15
      %s473 = scalar_select %p472, %s469, 15
      %s474 = smul.addr %s473, 2
      %s475 = smul.addr %s471, 32
      %s476 = sadd.s32 %s474, %s475
      %s477 = smul.addr %s476, 4
      %s478 = scalar_lea.vmem %s1, %s477
      %p479 = pneg %p94
      %p480 = pneg %p91
      %s481 = smul.u32 %s28, 8
      %s482 = sadd.s32 %s481, 8
      %p483 = scmp.lt.s32.totalorder %s482, 15
      %s484 = scalar_select %p483, %s482, 15
      %p485 = scmp.lt.s32.totalorder %s27, 1
      %s486 = scalar_select %p485, %s27, 1
      %p487 = scmp.lt.s32.totalorder %s484, 15
      %s488 = scalar_select %p487, %s484, 15
      %s489 = smul.addr %s488, 2
      %s490 = smul.addr %s486, 32
      %s491 = sadd.s32 %s489, %s490
      %s492 = smul.addr %s491, 4
      %s493 = scalar_lea.vmem %s2, %s492
      %p494 = pneg %p130
      %p495 = pneg %p127
      %p496 = pneg %p151
      %p497 = pneg %p148
      %p498 = pneg %p172
      %p499 = pneg %p169
      %p500 = pneg %p193
      %p501 = pneg %p190
      %p502 = pneg %p214
      %p503 = pneg %p211
      %p504 = pneg %p235
      %p505 = pneg %p232
      %p506 = pneg %p256
      %p507 = pneg %p253
      %p508 = pneg %p277
      %p509 = pneg %p274
      %p510 = pneg %p298
      %p511 = pneg %p295
      %p512 = pneg %p319
      %p513 = pneg %p316
      %p514 = pneg %p347
      %p515 = pneg %p344
      %s516 = smul.u32 8, %s28
      %p517 = scmp.lt.s32.totalorder %s27, 1
      %s518 = scalar_select %p517, %s27, 1
      %p519 = scmp.lt.s32.totalorder %s516, 15
      %s520 = scalar_select %p519, %s516, 15
      %s521 = smul.addr %s520, 2
      %s522 = smul.addr %s518, 32
      %s523 = sadd.s32 %s521, %s522
      %s524 = smul.addr %s523, 8
      %s525 = scalar_lea.vmem %s12, %s524
      %s526 = smul.u32 8, %s28
      %p527 = scmp.lt.s32.totalorder %s27, 1
      %s528 = scalar_select %p527, %s27, 1
      %p529 = scmp.lt.s32.totalorder %s526, 15
      %s530 = scalar_select %p529, %s526, 15
      %s531 = smul.addr %s530, 2
      %s532 = smul.addr %s528, 32
      %s533 = sadd.s32 %s531, %s532
      %s534 = smul.addr %s533, 4
      %s535 = scalar_lea.vmem %s0, %s534
      %s536 = smul.u32 8, %s28
      %s537 = smul.u32 %s28, 8
      %s538 = ssub.s32 %s537, 1
      %p539 = scmp.gt.s32.totalorder %s538, 0
      %s540 = scalar_select %p539, %s538, 0
      %p541 = scmp.lt.s32.totalorder %s27, 1
      %s542 = scalar_select %p541, %s27, 1
      %p543 = scmp.lt.s32.totalorder %s540, 15
      %s544 = scalar_select %p543, %s540, 15
      %s545 = smul.addr %s544, 2
      %s546 = smul.addr %s542, 32
      %s547 = sadd.s32 %s545, %s546
      %s548 = smul.addr %s547, 4
      %s549 = scalar_lea.vmem %s1, %s548
      %s550 = smul.u32 %s28, 8
      %s551 = ssub.s32 %s550, 1
      %p552 = scmp.gt.s32.totalorder %s551, 0
      %s553 = scalar_select %p552, %s551, 0
      %s554 = smul.u32 %s28, 8
      %s555 = sadd.s32 %s554, 8
      %p556 = scmp.lt.s32.totalorder %s555, 15
      %s557 = scalar_select %p556, %s555, 15
      %p558 = scmp.lt.s32.totalorder %s27, 1
      %s559 = scalar_select %p558, %s27, 1
      %p560 = scmp.lt.s32.totalorder %s557, 15
      %s561 = scalar_select %p560, %s557, 15
      %s562 = smul.addr %s561, 2
      %s563 = smul.addr %s559, 32
      %s564 = sadd.s32 %s562, %s563
      %s565 = smul.addr %s564, 4
      %s566 = scalar_lea.vmem %s2, %s565
      %s567 = smul.u32 %s28, 8
      %s568 = sadd.s32 %s567, 8
      %p569 = scmp.lt.s32.totalorder %s568, 15
      %s570 = scalar_select %p569, %s568, 15
      %s571 = smul.u32 8, %s28
      %p572 = scmp.lt.s32.totalorder %s27, 1
      %s573 = scalar_select %p572, %s27, 1
      %p574 = scmp.lt.s32.totalorder %s571, 15
      %s575 = scalar_select %p574, %s571, 15
      %s576 = smul.addr %s575, 2
      %s577 = smul.addr %s573, 32
      %s578 = sadd.s32 %s576, %s577
      %s579 = smul.addr %s578, 8
      %s580 = scalar_lea.vmem %s12, %s579
      %s581 = smul.u32 8, %s28
      %vm583 = vcmask 1043459
      %vm584 = vsmask.f32 7950
      %vm585 = vmand %vm583, %vm584
      %v586 = vld [vmem:[#allocation2 + $0x4] sm:$0x8]
      %v587 = vsel %vm585, 0, %v586
      %588 = vst [vmem:[#allocation2 + $0x4] sm:$0x8] %v587
      %v589 = vld [vmem:[#allocation2 + $0x18] sm:$0x8]
      %v590 = vsel %vm585, 0, %v589
      %591 = vst [vmem:[#allocation2 + $0x18] sm:$0x8] %v590
      %v592 = vld [vmem:[#allocation2 + $0x2c] sm:$0x8]
      %v593 = vsel %vm585, 0, %v592
      %594 = vst [vmem:[#allocation2 + $0x2c] sm:$0x8] %v593
      %v595 = vld [vmem:[#allocation2 + $0x40] sm:$0x8]
      %v596 = vsel %vm585, 0, %v595
      %597 = vst [vmem:[#allocation2 + $0x40] sm:$0x8] %v596
      %v598 = vld [vmem:[#allocation2 + $0x54] sm:$0x8]
      %v599 = vsel %vm585, 0, %v598
      %600 = vst [vmem:[#allocation2 + $0x54] sm:$0x8] %v599
      %v601 = vld [vmem:[#allocation2 + $0x68] sm:$0x8]
      %v602 = vsel %vm585, 0, %v601
      %603 = vst [vmem:[#allocation2 + $0x68] sm:$0x8] %v602
      %v604 = vld [vmem:[#allocation2 + $0x7c] sm:$0x8]
      %v605 = vsel %vm585, 0, %v604
      %606 = vst [vmem:[#allocation2 + $0x7c] sm:$0x8] %v605
      %v607 = vld [vmem:[#allocation2 + $0x90] sm:$0x8]
      %v608 = vsel %vm585, 0, %v607
      %609 = vst [vmem:[#allocation2 + $0x90] sm:$0x8] %v608
      %v610 = vld [vmem:[#allocation2 + $0xa4] sm:$0x8]
      %v611 = vsel %vm585, 0, %v610
      %612 = vst [vmem:[#allocation2 + $0xa4] sm:$0x8] %v611
      %v613 = vld [vmem:[#allocation2 + $0xb8] sm:$0x8]
      %v614 = vsel %vm585, 0, %v613
      %615 = vst [vmem:[#allocation2 + $0xb8] sm:$0x8] %v614
      %vm616 = vcmask 1040384
      %vm617 = vsmask.f32 256
      %vm618 = vmand %vm616, %vm617
      %v619 = vld [vmem:[#allocation2 + $0x10] sm:$0x1]
      %v620 = vsel %vm618, 0, %v619
      %621 = vst [vmem:[#allocation2 + $0x10] sm:$0x1] %v620
      %v622 = vld [vmem:[#allocation2 + $0x24] sm:$0x1]
      %v623 = vsel %vm618, 0, %v622
      %624 = vst [vmem:[#allocation2 + $0x24] sm:$0x1] %v623
      %v625 = vld [vmem:[#allocation2 + $0x38] sm:$0x1]
      %v626 = vsel %vm618, 0, %v625
      %627 = vst [vmem:[#allocation2 + $0x38] sm:$0x1] %v626
      %v628 = vld [vmem:[#allocation2 + $0x4c] sm:$0x1]
      %v629 = vsel %vm618, 0, %v628
      %630 = vst [vmem:[#allocation2 + $0x4c] sm:$0x1] %v629
      %v631 = vld [vmem:[#allocation2 + $0x60] sm:$0x1]
      %v632 = vsel %vm618, 0, %v631
      %633 = vst [vmem:[#allocation2 + $0x60] sm:$0x1] %v632
      %v634 = vld [vmem:[#allocation2 + $0x74] sm:$0x1]
      %v635 = vsel %vm618, 0, %v634
      %636 = vst [vmem:[#allocation2 + $0x74] sm:$0x1] %v635
      %v637 = vld [vmem:[#allocation2 + $0x88] sm:$0x1]
      %v638 = vsel %vm618, 0, %v637
      %639 = vst [vmem:[#allocation2 + $0x88] sm:$0x1] %v638
      %v640 = vld [vmem:[#allocation2 + $0x9c] sm:$0x1]
      %v641 = vsel %vm618, 0, %v640
      %642 = vst [vmem:[#allocation2 + $0x9c] sm:$0x1] %v641
      %v643 = vld [vmem:[#allocation2 + $0xb0] sm:$0x1]
      %v644 = vsel %vm618, 0, %v643
      %645 = vst [vmem:[#allocation2 + $0xb0] sm:$0x1] %v644
      %v646 = vld [vmem:[#allocation2 + $0xc4] sm:$0x1]
      %v647 = vsel %vm618, 0, %v646
      %648 = vst [vmem:[#allocation2 + $0xc4] sm:$0x1] %v647
      %v649 = vld [vmem:[%s549] sm:$0xf]
      %v650 = vld [vmem:[%s549 + $0x4] sm:$0xf]
      %v651 = vld [vmem:[%s3] sm:$0xf]
      %v652 = vld [vmem:[%s3 + $0x4] sm:$0xf]
      %v653 = vld [vmem:[%s3 + $0x8] sm:$0xf]
      %v654 = vld [vmem:[%s3 + $0xc] sm:$0xf]
      %v655 = vld [vmem:[%s3 + $0x10] sm:$0xf]
      %v656 = vld [vmem:[%s3 + $0x14] sm:$0xf]
      %v657 = vld [vmem:[%s3 + $0x18] sm:$0xf]
      %v658 = vld [vmem:[%s3 + $0x1c] sm:$0xf]
      %v659 = vld [vmem:[%s3 + $0x20] sm:$0xf]
      %v660 = vld [vmem:[%s3 + $0x24] sm:$0xf]
      %v661 = vld [vmem:[%s3 + $0x28] sm:$0xf]
      %v662 = vld [vmem:[%s3 + $0x2c] sm:$0xf]
      %v663 = vld [vmem:[%s3 + $0x30] sm:$0xf]
      %v664 = vld [vmem:[%s3 + $0x34] sm:$0xf]
      %v665 = vld [vmem:[%s3 + $0x38] sm:$0xf]
      %v666 = vld [vmem:[%s3 + $0x3c] sm:$0xf]
      %v669 = vunpack.c.l.b16 %v649
      %v670 = vunpack.c.l.b16 %v650
      %v671 = vpack.c.b16 %v670, %v669
      %v689 = vunpack.c.l.b16 %v651
      %v690 = vunpack.c.l.b16 %v652
      %v691 = vunpack.c.l.b16 %v653
      %v692 = vunpack.c.l.b16 %v654
      %v693 = vunpack.c.l.b16 %v655
      %v694 = vunpack.c.l.b16 %v656
      %v695 = vunpack.c.l.b16 %v657
      %v696 = vunpack.c.l.b16 %v658
      %v697 = vunpack.c.l.b16 %v659
      %v698 = vunpack.c.l.b16 %v660
      %v699 = vunpack.c.l.b16 %v661
      %v700 = vunpack.c.l.b16 %v662
      %v701 = vunpack.c.l.b16 %v663
      %v702 = vunpack.c.l.b16 %v664
      %v703 = vunpack.c.l.b16 %v665
      %v704 = vunpack.c.l.b16 %v666
      %v705 = vpack.c.b16 %v690, %v689
      %v706 = vpack.c.b16 %v692, %v691
      %v707 = vpack.c.b16 %v694, %v693
      %v708 = vpack.c.b16 %v696, %v695
      %v709 = vpack.c.b16 %v698, %v697
      %v710 = vpack.c.b16 %v700, %v699
      %v711 = vpack.c.b16 %v702, %v701
      %v712 = vpack.c.b16 %v704, %v703
      %721 = vmatpush.bf16.msra.mxu0 %v712
      %722 = vmatpush.bf16.msra.mxu0 %v711
      %723 = vmatpush.bf16.msra.mxu0 %v710
      %724 = vmatpush.bf16.msra.mxu0 %v709
      %725 = vmatpush.bf16.msra.mxu0 %v708
      %726 = vmatpush.bf16.msra.mxu0 %v707
      %727 = vmatpush.bf16.msra.mxu0 %v706
      %728 = vmatpush.bf16.msra.mxu0 %v705
      %729 = vmatmul.bf16.gmra.mxu0 %v671
      %v730 = vpop.f32.mrf.mxu0
      %v731 = vadd.f32 0.0, %v730
      %v732 = vpop.f32.mrf.mxu0
      %v733 = vadd.f32 0.0, %v732
      %734 = vdwg.mxu0
      %v735 = vld [vmem:[%s4] sm:$0x1]
      %v737 = vperm.slane %v735, 0
      %v739 = vmul.f32 %v731, %v737
      %v740 = vmul.f32 %v733, %v737
      %v741 = vld [vmem:[%s5] sm:$0x1]
      %v743 = vperm.slane %v741, 0
      %v745 = vadd.f32 %v739, %v743
      %v746 = vadd.f32 %v740, %v743
      %v747 = vmax.f32 %v745, 0.0
      %v748 = vmax.f32 %v746, 0.0
      %v749 = vpack.c.bf16 %v747, %v747
      %v750 = vpack.c.bf16 %v748, %v748
      %751 = vst [vmem:[#allocation2 + $0x8] sm:$0xf] %v749
      %752 = vst [vmem:[#allocation2 + $0xc] sm:$0xf] %v750
      %v753 = vld [vmem:[%s566] sm:$0xf]
      %v754 = vld [vmem:[%s566 + $0x4] sm:$0xf]
      %v755 = vld [vmem:[%s3] sm:$0xf]
      %v756 = vld [vmem:[%s3 + $0x4] sm:$0xf]
      %v757 = vld [vmem:[%s3 + $0x8] sm:$0xf]
      %v758 = vld [vmem:[%s3 + $0xc] sm:$0xf]
      %v759 = vld [vmem:[%s3 + $0x10] sm:$0xf]
      %v760 = vld [vmem:[%s3 + $0x14] sm:$0xf]
      %v761 = vld [vmem:[%s3 + $0x18] sm:$0xf]
      %v762 = vld [vmem:[%s3 + $0x1c] sm:$0xf]
      %v763 = vld [vmem:[%s3 + $0x20] sm:$0xf]
      %v764 = vld [vmem:[%s3 + $0x24] sm:$0xf]
      %v765 = vld [vmem:[%s3 + $0x28] sm:$0xf]
      %v766 = vld [vmem:[%s3 + $0x2c] sm:$0xf]
      %v767 = vld [vmem:[%s3 + $0x30] sm:$0xf]
      %v768 = vld [vmem:[%s3 + $0x34] sm:$0xf]
      %v769 = vld [vmem:[%s3 + $0x38] sm:$0xf]
      %v770 = vld [vmem:[%s3 + $0x3c] sm:$0xf]
      %v773 = vunpack.c.l.b16 %v753
      %v774 = vunpack.c.l.b16 %v754
      %v775 = vpack.c.b16 %v774, %v773
      %v793 = vunpack.c.l.b16 %v755
      %v794 = vunpack.c.l.b16 %v756
      %v795 = vunpack.c.l.b16 %v757
      %v796 = vunpack.c.l.b16 %v758
      %v797 = vunpack.c.l.b16 %v759
      %v798 = vunpack.c.l.b16 %v760
      %v799 = vunpack.c.l.b16 %v761
      %v800 = vunpack.c.l.b16 %v762
      %v801 = vunpack.c.l.b16 %v763
      %v802 = vunpack.c.l.b16 %v764
      %v803 = vunpack.c.l.b16 %v765
      %v804 = vunpack.c.l.b16 %v766
      %v805 = vunpack.c.l.b16 %v767
      %v806 = vunpack.c.l.b16 %v768
      %v807 = vunpack.c.l.b16 %v769
      %v808 = vunpack.c.l.b16 %v770
      %v809 = vpack.c.b16 %v794, %v793
      %v810 = vpack.c.b16 %v796, %v795
      %v811 = vpack.c.b16 %v798, %v797
      %v812 = vpack.c.b16 %v800, %v799
      %v813 = vpack.c.b16 %v802, %v801
      %v814 = vpack.c.b16 %v804, %v803
      %v815 = vpack.c.b16 %v806, %v805
      %v816 = vpack.c.b16 %v808, %v807
      %825 = vmatpush.bf16.msra.mxu0 %v816
      %826 = vmatpush.bf16.msra.mxu0 %v815
      %827 = vmatpush.bf16.msra.mxu0 %v814
      %828 = vmatpush.bf16.msra.mxu0 %v813
      %829 = vmatpush.bf16.msra.mxu0 %v812
      %830 = vmatpush.bf16.msra.mxu0 %v811
      %831 = vmatpush.bf16.msra.mxu0 %v810
      %832 = vmatpush.bf16.msra.mxu0 %v809
      %833 = vmatmul.bf16.gmra.mxu0 %v775
      %v834 = vpop.f32.mrf.mxu0
      %v835 = vadd.f32 0.0, %v834
      %v836 = vpop.f32.mrf.mxu0
      %v837 = vadd.f32 0.0, %v836
      %838 = vdwg.mxu0
      %v839 = vld [vmem:[%s4] sm:$0x1]
      %v841 = vperm.slane %v839, 0
      %v843 = vmul.f32 %v835, %v841
      %v844 = vmul.f32 %v837, %v841
      %v845 = vld [vmem:[%s5] sm:$0x1]
      %v847 = vperm.slane %v845, 0
      %v849 = vadd.f32 %v843, %v847
      %v850 = vadd.f32 %v844, %v847
      %v851 = vmax.f32 %v849, 0.0
      %v852 = vmax.f32 %v850, 0.0
      %v853 = vpack.c.bf16 %v851, %v851
      %v854 = vpack.c.bf16 %v852, %v852
      %s855 = scalar_lea.vmem [#allocation2], 180
      %856 = vst [vmem:[%s855 + $0x8] sm:$0xf] %v853
      %857 = vst [vmem:[%s855 + $0xc] sm:$0xf] %v854
      %v858 = vld [vmem:[%s535] sm:$0xf]
      %v859 = vld [vmem:[%s535 + $0x4] sm:$0xf]
      %v860 = vld [vmem:[%s535 + $0x8] sm:$0xf]
      %v861 = vld [vmem:[%s535 + $0xc] sm:$0xf]
      %v862 = vld [vmem:[%s535 + $0x10] sm:$0xf]
      %v863 = vld [vmem:[%s535 + $0x14] sm:$0xf]
      %v864 = vld [vmem:[%s535 + $0x18] sm:$0xf]
      %v865 = vld [vmem:[%s535 + $0x1c] sm:$0xf]
      %v866 = vld [vmem:[%s535 + $0x20] sm:$0xf]
      %v867 = vld [vmem:[%s535 + $0x24] sm:$0xf]
      %v868 = vld [vmem:[%s535 + $0x28] sm:$0xf]
      %v869 = vld [vmem:[%s535 + $0x2c] sm:$0xf]
      %v870 = vld [vmem:[%s535 + $0x30] sm:$0xf]
      %v871 = vld [vmem:[%s535 + $0x34] sm:$0xf]
      %v872 = vld [vmem:[%s535 + $0x38] sm:$0xf]
      %v873 = vld [vmem:[%s535 + $0x3c] sm:$0xf]
      %v874 = vld [vmem:[%s3] sm:$0xf]
      %v875 = vld [vmem:[%s3 + $0x4] sm:$0xf]
      %v876 = vld [vmem:[%s3 + $0x8] sm:$0xf]
      %v877 = vld [vmem:[%s3 + $0xc] sm:$0xf]
      %v878 = vld [vmem:[%s3 + $0x10] sm:$0xf]
      %v879 = vld [vmem:[%s3 + $0x14] sm:$0xf]
      %v880 = vld [vmem:[%s3 + $0x18] sm:$0xf]
      %v881 = vld [vmem:[%s3 + $0x1c] sm:$0xf]
      %v882 = vld [vmem:[%s3 + $0x20] sm:$0xf]
      %v883 = vld [vmem:[%s3 + $0x24] sm:$0xf]
      %v884 = vld [vmem:[%s3 + $0x28] sm:$0xf]
      %v885 = vld [vmem:[%s3 + $0x2c] sm:$0xf]
      %v886 = vld [vmem:[%s3 + $0x30] sm:$0xf]
      %v887 = vld [vmem:[%s3 + $0x34] sm:$0xf]
      %v888 = vld [vmem:[%s3 + $0x38] sm:$0xf]
      %v889 = vld [vmem:[%s3 + $0x3c] sm:$0xf]
      %v906 = vunpack.c.l.b16 %v858
      %v907 = vunpack.c.l.b16 %v859
      %v908 = vunpack.c.l.b16 %v860
      %v909 = vunpack.c.l.b16 %v861
      %v910 = vunpack.c.l.b16 %v862
      %v911 = vunpack.c.l.b16 %v863
      %v912 = vunpack.c.l.b16 %v864
      %v913 = vunpack.c.l.b16 %v865
      %v914 = vunpack.c.l.b16 %v866
      %v915 = vunpack.c.l.b16 %v867
      %v916 = vunpack.c.l.b16 %v868
      %v917 = vunpack.c.l.b16 %v869
      %v918 = vunpack.c.l.b16 %v870
      %v919 = vunpack.c.l.b16 %v871
      %v920 = vunpack.c.l.b16 %v872
      %v921 = vunpack.c.l.b16 %v873
      %v922 = vpack.c.b16 %v907, %v906
      %v923 = vpack.c.b16 %v909, %v908
      %v924 = vpack.c.b16 %v911, %v910
      %v925 = vpack.c.b16 %v913, %v912
      %v926 = vpack.c.b16 %v915, %v914
      %v927 = vpack.c.b16 %v917, %v916
      %v928 = vpack.c.b16 %v919, %v918
      %v929 = vpack.c.b16 %v921, %v920
      %v954 = vunpack.c.l.b16 %v874
      %v955 = vunpack.c.l.b16 %v875
      %v956 = vunpack.c.l.b16 %v876
      %v957 = vunpack.c.l.b16 %v877
      %v958 = vunpack.c.l.b16 %v878
      %v959 = vunpack.c.l.b16 %v879
      %v960 = vunpack.c.l.b16 %v880
      %v961 = vunpack.c.l.b16 %v881
      %v962 = vunpack.c.l.b16 %v882
      %v963 = vunpack.c.l.b16 %v883
      %v964 = vunpack.c.l.b16 %v884
      %v965 = vunpack.c.l.b16 %v885
      %v966 = vunpack.c.l.b16 %v886
      %v967 = vunpack.c.l.b16 %v887
      %v968 = vunpack.c.l.b16 %v888
      %v969 = vunpack.c.l.b16 %v889
      %v970 = vpack.c.b16 %v955, %v954
      %v971 = vpack.c.b16 %v957, %v956
      %v972 = vpack.c.b16 %v959, %v958
      %v973 = vpack.c.b16 %v961, %v960
      %v974 = vpack.c.b16 %v963, %v962
      %v975 = vpack.c.b16 %v965, %v964
      %v976 = vpack.c.b16 %v967, %v966
      %v977 = vpack.c.b16 %v969, %v968
      %986 = vmatpush.bf16.msra.mxu0 %v977
      %987 = vmatpush.bf16.msra.mxu0 %v976
      %988 = vmatpush.bf16.msra.mxu0 %v975
      %989 = vmatpush.bf16.msra.mxu0 %v974
      %990 = vmatpush.bf16.msra.mxu0 %v973
      %991 = vmatpush.bf16.msra.mxu0 %v972
      %992 = vmatpush.bf16.msra.mxu0 %v971
      %993 = vmatpush.bf16.msra.mxu0 %v970
      %994 = vmatmul.bf16.gmra.mxu0 %v922
      %v995 = vpop.f32.mrf.mxu0
      %v996 = vadd.f32 0.0, %v995
      %v997 = vpop.f32.mrf.mxu0
      %v998 = vadd.f32 0.0, %v997
      %999 = vmatmul.bf16.gmra.mxu0 %v923
      %v1000 = vpop.f32.mrf.mxu0
      %v1001 = vadd.f32 0.0, %v1000
      %v1002 = vpop.f32.mrf.mxu0
      %v1003 = vadd.f32 0.0, %v1002
      %1004 = vmatmul.bf16.gmra.mxu0 %v924
      %v1005 = vpop.f32.mrf.mxu0
      %v1006 = vadd.f32 0.0, %v1005
      %v1007 = vpop.f32.mrf.mxu0
      %v1008 = vadd.f32 0.0, %v1007
      %1009 = vmatmul.bf16.gmra.mxu0 %v925
      %v1010 = vpop.f32.mrf.mxu0
      %v1011 = vadd.f32 0.0, %v1010
      %v1012 = vpop.f32.mrf.mxu0
      %v1013 = vadd.f32 0.0, %v1012
      %1014 = vmatmul.bf16.gmra.mxu0 %v926
      %v1015 = vpop.f32.mrf.mxu0
      %v1016 = vadd.f32 0.0, %v1015
      %v1017 = vpop.f32.mrf.mxu0
      %v1018 = vadd.f32 0.0, %v1017
      %1019 = vmatmul.bf16.gmra.mxu0 %v927
      %v1020 = vpop.f32.mrf.mxu0
      %v1021 = vadd.f32 0.0, %v1020
      %v1022 = vpop.f32.mrf.mxu0
      %v1023 = vadd.f32 0.0, %v1022
      %1024 = vmatmul.bf16.gmra.mxu0 %v928
      %v1025 = vpop.f32.mrf.mxu0
      %v1026 = vadd.f32 0.0, %v1025
      %v1027 = vpop.f32.mrf.mxu0
      %v1028 = vadd.f32 0.0, %v1027
      %1029 = vmatmul.bf16.gmra.mxu0 %v929
      %v1030 = vpop.f32.mrf.mxu0
      %v1031 = vadd.f32 0.0, %v1030
      %v1032 = vpop.f32.mrf.mxu0
      %v1033 = vadd.f32 0.0, %v1032
      %1034 = vdwg.mxu0
      %v1035 = vld [vmem:[%s4] sm:$0x1]
      %v1037 = vperm.slane %v1035, 0
      %v1039 = vmul.f32 %v996, %v1037
      %v1040 = vmul.f32 %v998, %v1037
      %v1041 = vmul.f32 %v1001, %v1037
      %v1042 = vmul.f32 %v1003, %v1037
      %v1043 = vmul.f32 %v1006, %v1037
      %v1044 = vmul.f32 %v1008, %v1037
      %v1045 = vmul.f32 %v1011, %v1037
      %v1046 = vmul.f32 %v1013, %v1037
      %v1047 = vmul.f32 %v1016, %v1037
      %v1048 = vmul.f32 %v1018, %v1037
      %v1049 = vmul.f32 %v1021, %v1037
      %v1050 = vmul.f32 %v1023, %v1037
      %v1051 = vmul.f32 %v1026, %v1037
      %v1052 = vmul.f32 %v1028, %v1037
      %v1053 = vmul.f32 %v1031, %v1037
      %v1054 = vmul.f32 %v1033, %v1037
      %v1055 = vld [vmem:[%s5] sm:$0x1]
      %v1057 = vperm.slane %v1055, 0
      %v1059 = vadd.f32 %v1039, %v1057
      %v1060 = vadd.f32 %v1040, %v1057
      %v1061 = vadd.f32 %v1041, %v1057
      %v1062 = vadd.f32 %v1042, %v1057
      %v1063 = vadd.f32 %v1043, %v1057
      %v1064 = vadd.f32 %v1044, %v1057
      %v1065 = vadd.f32 %v1045, %v1057
      %v1066 = vadd.f32 %v1046, %v1057
      %v1067 = vadd.f32 %v1047, %v1057
      %v1068 = vadd.f32 %v1048, %v1057
      %v1069 = vadd.f32 %v1049, %v1057
      %v1070 = vadd.f32 %v1050, %v1057
      %v1071 = vadd.f32 %v1051, %v1057
      %v1072 = vadd.f32 %v1052, %v1057
      %v1073 = vadd.f32 %v1053, %v1057
      %v1074 = vadd.f32 %v1054, %v1057
      %v1075 = vmax.f32 %v1059, 0.0
      %v1076 = vmax.f32 %v1060, 0.0
      %v1077 = vmax.f32 %v1061, 0.0
      %v1078 = vmax.f32 %v1062, 0.0
      %v1079 = vmax.f32 %v1063, 0.0
      %v1080 = vmax.f32 %v1064, 0.0
      %v1081 = vmax.f32 %v1065, 0.0
      %v1082 = vmax.f32 %v1066, 0.0
      %v1083 = vmax.f32 %v1067, 0.0
      %v1084 = vmax.f32 %v1068, 0.0
      %v1085 = vmax.f32 %v1069, 0.0
      %v1086 = vmax.f32 %v1070, 0.0
      %v1087 = vmax.f32 %v1071, 0.0
      %v1088 = vmax.f32 %v1072, 0.0
      %v1089 = vmax.f32 %v1073, 0.0
      %v1090 = vmax.f32 %v1074, 0.0
      %v1091 = vpack.c.bf16 %v1075, %v1075
      %v1092 = vpack.c.bf16 %v1076, %v1076
      %v1093 = vpack.c.bf16 %v1077, %v1077
      %v1094 = vpack.c.bf16 %v1078, %v1078
      %v1095 = vpack.c.bf16 %v1079, %v1079
      %v1096 = vpack.c.bf16 %v1080, %v1080
      %v1097 = vpack.c.bf16 %v1081, %v1081
      %v1098 = vpack.c.bf16 %v1082, %v1082
      %v1099 = vpack.c.bf16 %v1083, %v1083
      %v1100 = vpack.c.bf16 %v1084, %v1084
      %v1101 = vpack.c.bf16 %v1085, %v1085
      %v1102 = vpack.c.bf16 %v1086, %v1086
      %v1103 = vpack.c.bf16 %v1087, %v1087
      %v1104 = vpack.c.bf16 %v1088, %v1088
      %v1105 = vpack.c.bf16 %v1089, %v1089
      %v1106 = vpack.c.bf16 %v1090, %v1090
      %s1107 = scalar_lea.vmem [#allocation2], 20
      %1108 = vst [vmem:[%s1107 + $0x8] sm:$0xf] %v1091
      %1109 = vst [vmem:[%s1107 + $0xc] sm:$0xf] %v1092
      %1110 = vst [vmem:[%s1107 + $0x1c] sm:$0xf] %v1093
      %1111 = vst [vmem:[%s1107 + $0x20] sm:$0xf] %v1094
      %1112 = vst [vmem:[%s1107 + $0x30] sm:$0xf] %v1095
      %1113 = vst [vmem:[%s1107 + $0x34] sm:$0xf] %v1096
      %1114 = vst [vmem:[%s1107 + $0x44] sm:$0xf] %v1097
      %1115 = vst [vmem:[%s1107 + $0x48] sm:$0xf] %v1098
      %1116 = vst [vmem:[%s1107 + $0x58] sm:$0xf] %v1099
      %1117 = vst [vmem:[%s1107 + $0x5c] sm:$0xf] %v1100
      %1118 = vst [vmem:[%s1107 + $0x6c] sm:$0xf] %v1101
      %1119 = vst [vmem:[%s1107 + $0x70] sm:$0xf] %v1102
      %1120 = vst [vmem:[%s1107 + $0x80] sm:$0xf] %v1103
      %1121 = vst [vmem:[%s1107 + $0x84] sm:$0xf] %v1104
      %1122 = vst [vmem:[%s1107 + $0x94] sm:$0xf] %v1105
      %1123 = vst [vmem:[%s1107 + $0x98] sm:$0xf] %v1106
      %p1124 = scmp.eq.s32.totalorder %s28, 0
      // Predicated region
      $region69: #{bottleneck_pallas.1} parent=67 // pred_check
        %p1125 = pneg %p1124
      $region70: #{bottleneck_pallas.1} parent=67 // pred_check_branch
        %1127 = sbr.rel (%p1125) target = $region72
      $region71: #{bottleneck_pallas.1} parent=67 // pred_region
        %1128 = vst [vmem:[#allocation2 + $0x8] sm:$0xf] 0
        %1129 = vst [vmem:[#allocation2 + $0xc] sm:$0xf] 0
      $region72: #{bottleneck_pallas.1} parent=67 // pred_fallthru
        _
      %p1130 = scmp.eq.s32.totalorder %s28, 1
      // Predicated region
      $region73: #{bottleneck_pallas.1} parent=67 // pred_check
        %p1131 = pneg %p1130
      $region74: #{bottleneck_pallas.1} parent=67 // pred_check_branch
        %1133 = sbr.rel (%p1131) target = $region76
      $region75: #{bottleneck_pallas.1} parent=67 // pred_region
        %1134 = vst [vmem:[%s855 + $0x8] sm:$0xf] 0
        %1135 = vst [vmem:[%s855 + $0xc] sm:$0xf] 0
      $region76: #{bottleneck_pallas.1} parent=67 // pred_fallthru
        _
      %v1136 = vld [vmem:[#allocation2 + $0x4] sm:$0x8]
      %v1137 = vld [vmem:[#allocation2 + $0x8] sm:$0xf]
      %v1138 = vld [vmem:[#allocation2 + $0xc] sm:$0xf]
      %v1139 = vld [vmem:[#allocation2 + $0x18] sm:$0x8]
      %v1140 = vld [vmem:[#allocation2 + $0x1c] sm:$0xf]
      %v1141 = vld [vmem:[#allocation2 + $0x20] sm:$0xf]
      %v1142 = vld [vmem:[#allocation2 + $0x2c] sm:$0x8]
      %v1143 = vld [vmem:[#allocation2 + $0x30] sm:$0xf]
      %v1144 = vld [vmem:[#allocation2 + $0x34] sm:$0xf]
      %v1145 = vld [vmem:[#allocation2 + $0x40] sm:$0x8]
      %v1146 = vld [vmem:[#allocation2 + $0x44] sm:$0xf]
      %v1147 = vld [vmem:[#allocation2 + $0x48] sm:$0xf]
      %v1148 = vld [vmem:[#allocation2 + $0x54] sm:$0x8]
      %v1149 = vld [vmem:[#allocation2 + $0x58] sm:$0xf]
      %v1150 = vld [vmem:[#allocation2 + $0x5c] sm:$0xf]
      %v1151 = vld [vmem:[#allocation2 + $0x68] sm:$0x8]
      %v1152 = vld [vmem:[#allocation2 + $0x6c] sm:$0xf]
      %v1153 = vld [vmem:[#allocation2 + $0x70] sm:$0xf]
      %v1154 = vld [vmem:[#allocation2 + $0x7c] sm:$0x8]
      %v1155 = vld [vmem:[#allocation2 + $0x80] sm:$0xf]
      %v1156 = vld [vmem:[#allocation2 + $0x84] sm:$0xf]
      %v1157 = vld [vmem:[#allocation2 + $0x90] sm:$0x8]
      %v1158 = vld [vmem:[#allocation2 + $0x94] sm:$0xf]
      %v1159 = vld [vmem:[#allocation2 + $0x98] sm:$0xf]
      %vm1160 = vsmask.f32 4368
      %vm1161 = vmor %vm617, %vm1160
      %v1163 = vshrl.u32 %v1136, 16
      %v1165 = vrot.slane %v1163, 7
      %v1166 = vrot.slane %v1165, 4
      %v1168 = vshrl.u32 %v1137, 16
      %v1170 = vrot.slane %v1168, 7
      %v1171 = vshll.u32 %v1137, 16
      %v1173 = vor.u32 %v1170, %v1171
      %v1174 = vsel %vm1161, %v1166, %v1173
      %v1175 = vrot.slane %v1170, 4
      %v1177 = vshrl.u32 %v1138, 16
      %v1179 = vrot.slane %v1177, 7
      %v1180 = vshll.u32 %v1138, 16
      %v1182 = vor.u32 %v1179, %v1180
      %v1183 = vsel %vm1161, %v1175, %v1182
      %v1185 = vshrl.u32 %v1139, 16
      %v1187 = vrot.slane %v1185, 7
      %v1188 = vrot.slane %v1187, 4
      %v1190 = vshrl.u32 %v1140, 16
      %v1192 = vrot.slane %v1190, 7
      %v1193 = vshll.u32 %v1140, 16
      %v1195 = vor.u32 %v1192, %v1193
      %v1196 = vsel %vm1161, %v1188, %v1195
      %v1197 = vrot.slane %v1192, 4
      %v1199 = vshrl.u32 %v1141, 16
      %v1201 = vrot.slane %v1199, 7
      %v1202 = vshll.u32 %v1141, 16
      %v1204 = vor.u32 %v1201, %v1202
      %v1205 = vsel %vm1161, %v1197, %v1204
      %v1207 = vshrl.u32 %v1142, 16
      %v1209 = vrot.slane %v1207, 7
      %v1210 = vrot.slane %v1209, 4
      %v1212 = vshrl.u32 %v1143, 16
      %v1214 = vrot.slane %v1212, 7
      %v1215 = vshll.u32 %v1143, 16
      %v1217 = vor.u32 %v1214, %v1215
      %v1218 = vsel %vm1161, %v1210, %v1217
      %v1219 = vrot.slane %v1214, 4
      %v1221 = vshrl.u32 %v1144, 16
      %v1223 = vrot.slane %v1221, 7
      %v1224 = vshll.u32 %v1144, 16
      %v1226 = vor.u32 %v1223, %v1224
      %v1227 = vsel %vm1161, %v1219, %v1226
      %v1229 = vshrl.u32 %v1145, 16
      %v1231 = vrot.slane %v1229, 7
      %v1232 = vrot.slane %v1231, 4
      %v1234 = vshrl.u32 %v1146, 16
      %v1236 = vrot.slane %v1234, 7
      %v1237 = vshll.u32 %v1146, 16
      %v1239 = vor.u32 %v1236, %v1237
      %v1240 = vsel %vm1161, %v1232, %v1239
      %v1241 = vrot.slane %v1236, 4
      %v1243 = vshrl.u32 %v1147, 16
      %v1245 = vrot.slane %v1243, 7
      %v1246 = vshll.u32 %v1147, 16
      %v1248 = vor.u32 %v1245, %v1246
      %v1249 = vsel %vm1161, %v1241, %v1248
      %v1251 = vshrl.u32 %v1148, 16
      %v1253 = vrot.slane %v1251, 7
      %v1254 = vrot.slane %v1253, 4
      %v1256 = vshrl.u32 %v1149, 16
      %v1258 = vrot.slane %v1256, 7
      %v1259 = vshll.u32 %v1149, 16
      %v1261 = vor.u32 %v1258, %v1259
      %v1262 = vsel %vm1161, %v1254, %v1261
      %v1263 = vrot.slane %v1258, 4
      %v1265 = vshrl.u32 %v1150, 16
      %v1267 = vrot.slane %v1265, 7
      %v1268 = vshll.u32 %v1150, 16
      %v1270 = vor.u32 %v1267, %v1268
      %v1271 = vsel %vm1161, %v1263, %v1270
      %v1273 = vshrl.u32 %v1151, 16
      %v1275 = vrot.slane %v1273, 7
      %v1276 = vrot.slane %v1275, 4
      %v1278 = vshrl.u32 %v1152, 16
      %v1280 = vrot.slane %v1278, 7
      %v1281 = vshll.u32 %v1152, 16
      %v1283 = vor.u32 %v1280, %v1281
      %v1284 = vsel %vm1161, %v1276, %v1283
      %v1285 = vrot.slane %v1280, 4
      %v1287 = vshrl.u32 %v1153, 16
      %v1289 = vrot.slane %v1287, 7
      %v1290 = vshll.u32 %v1153, 16
      %v1292 = vor.u32 %v1289, %v1290
      %v1293 = vsel %vm1161, %v1285, %v1292
      %v1295 = vshrl.u32 %v1154, 16
      %v1297 = vrot.slane %v1295, 7
      %v1298 = vrot.slane %v1297, 4
      %v1300 = vshrl.u32 %v1155, 16
      %v1302 = vrot.slane %v1300, 7
      %v1303 = vshll.u32 %v1155, 16
      %v1305 = vor.u32 %v1302, %v1303
      %v1306 = vsel %vm1161, %v1298, %v1305
      %v1307 = vrot.slane %v1302, 4
      %v1309 = vshrl.u32 %v1156, 16
      %v1311 = vrot.slane %v1309, 7
      %v1312 = vshll.u32 %v1156, 16
      %v1314 = vor.u32 %v1311, %v1312
      %v1315 = vsel %vm1161, %v1307, %v1314
      %v1317 = vshrl.u32 %v1157, 16
      %v1319 = vrot.slane %v1317, 7
      %v1320 = vrot.slane %v1319, 4
      %v1322 = vshrl.u32 %v1158, 16
      %v1324 = vrot.slane %v1322, 7
      %v1325 = vshll.u32 %v1158, 16
      %v1327 = vor.u32 %v1324, %v1325
      %v1328 = vsel %vm1161, %v1320, %v1327
      %v1329 = vrot.slane %v1324, 4
      %v1331 = vshrl.u32 %v1159, 16
      %v1333 = vrot.slane %v1331, 7
      %v1334 = vshll.u32 %v1159, 16
      %v1336 = vor.u32 %v1333, %v1334
      %v1337 = vsel %vm1161, %v1329, %v1336
      %v1338 = vld [vmem:[#allocation2 + $0x10] sm:$0x1]
      %v1339 = vld [vmem:[#allocation2 + $0x24] sm:$0x1]
      %v1340 = vld [vmem:[#allocation2 + $0x38] sm:$0x1]
      %v1341 = vld [vmem:[#allocation2 + $0x4c] sm:$0x1]
      %v1342 = vld [vmem:[#allocation2 + $0x60] sm:$0x1]
      %v1343 = vld [vmem:[#allocation2 + $0x74] sm:$0x1]
      %v1344 = vld [vmem:[#allocation2 + $0x88] sm:$0x1]
      %v1345 = vld [vmem:[#allocation2 + $0x9c] sm:$0x1]
      %vm1346 = vsmask.f32 3328
      %vm1347 = vsmask.f32 7440
      %vm1348 = vmor %vm1346, %vm1347
      %v1349 = vrot.slane %v1168, 4
      %v1350 = vrot.slane %v1171, 5
      %v1351 = vor.u32 %v1349, %v1350
      %v1352 = vrot.slane %v1351, 4
      %v1353 = vrot.slane %v1180, 5
      %v1354 = vsel %vm1348, %v1352, %v1353
      %v1355 = vrot.slane %v1177, 4
      %v1356 = vor.u32 %v1355, %v1353
      %v1357 = vrot.slane %v1356, 4
      %v1359 = vshll.u32 %v1338, 16
      %v1361 = vrot.slane %v1359, 5
      %v1362 = vsel %vm1348, %v1357, %v1361
      %v1363 = vrot.slane %v1190, 4
      %v1364 = vrot.slane %v1193, 5
      %v1365 = vor.u32 %v1363, %v1364
      %v1366 = vrot.slane %v1365, 4
      %v1367 = vrot.slane %v1202, 5
      %v1368 = vsel %vm1348, %v1366, %v1367
      %v1369 = vrot.slane %v1199, 4
      %v1370 = vor.u32 %v1369, %v1367
      %v1371 = vrot.slane %v1370, 4
      %v1373 = vshll.u32 %v1339, 16
      %v1375 = vrot.slane %v1373, 5
      %v1376 = vsel %vm1348, %v1371, %v1375
      %v1377 = vrot.slane %v1212, 4
      %v1378 = vrot.slane %v1215, 5
      %v1379 = vor.u32 %v1377, %v1378
      %v1380 = vrot.slane %v1379, 4
      %v1381 = vrot.slane %v1224, 5
      %v1382 = vsel %vm1348, %v1380, %v1381
      %v1383 = vrot.slane %v1221, 4
      %v1384 = vor.u32 %v1383, %v1381
      %v1385 = vrot.slane %v1384, 4
      %v1387 = vshll.u32 %v1340, 16
      %v1389 = vrot.slane %v1387, 5
      %v1390 = vsel %vm1348, %v1385, %v1389
      %v1391 = vrot.slane %v1234, 4
      %v1392 = vrot.slane %v1237, 5
      %v1393 = vor.u32 %v1391, %v1392
      %v1394 = vrot.slane %v1393, 4
      %v1395 = vrot.slane %v1246, 5
      %v1396 = vsel %vm1348, %v1394, %v1395
      %v1397 = vrot.slane %v1243, 4
      %v1398 = vor.u32 %v1397, %v1395
      %v1399 = vrot.slane %v1398, 4
      %v1401 = vshll.u32 %v1341, 16
      %v1403 = vrot.slane %v1401, 5
      %v1404 = vsel %vm1348, %v1399, %v1403
      %v1405 = vrot.slane %v1256, 4
      %v1406 = vrot.slane %v1259, 5
      %v1407 = vor.u32 %v1405, %v1406
      %v1408 = vrot.slane %v1407, 4
      %v1409 = vrot.slane %v1268, 5
      %v1410 = vsel %vm1348, %v1408, %v1409
      %v1411 = vrot.slane %v1265, 4
      %v1412 = vor.u32 %v1411, %v1409
      %v1413 = vrot.slane %v1412, 4
      %v1415 = vshll.u32 %v1342, 16
      %v1417 = vrot.slane %v1415, 5
      %v1418 = vsel %vm1348, %v1413, %v1417
      %v1419 = vrot.slane %v1278, 4
      %v1420 = vrot.slane %v1281, 5
      %v1421 = vor.u32 %v1419, %v1420
      %v1422 = vrot.slane %v1421, 4
      %v1423 = vrot.slane %v1290, 5
      %v1424 = vsel %vm1348, %v1422, %v1423
      %v1425 = vrot.slane %v1287, 4
      %v1426 = vor.u32 %v1425, %v1423
      %v1427 = vrot.slane %v1426, 4
      %v1429 = vshll.u32 %v1343, 16
      %v1431 = vrot.slane %v1429, 5
      %v1432 = vsel %vm1348, %v1427, %v1431
      %v1433 = vrot.slane %v1300, 4
      %v1434 = vrot.slane %v1303, 5
      %v1435 = vor.u32 %v1433, %v1434
      %v1436 = vrot.slane %v1435, 4
      %v1437 = vrot.slane %v1312, 5
      %v1438 = vsel %vm1348, %v1436, %v1437
      %v1439 = vrot.slane %v1309, 4
      %v1440 = vor.u32 %v1439, %v1437
      %v1441 = vrot.slane %v1440, 4
      %v1443 = vshll.u32 %v1344, 16
      %v1445 = vrot.slane %v1443, 5
      %v1446 = vsel %vm1348, %v1441, %v1445
      %v1447 = vrot.slane %v1322, 4
      %v1448 = vrot.slane %v1325, 5
      %v1449 = vor.u32 %v1447, %v1448
      %v1450 = vrot.slane %v1449, 4
      %v1451 = vrot.slane %v1334, 5
      %v1452 = vsel %vm1348, %v1450, %v1451
      %v1453 = vrot.slane %v1331, 4
      %v1454 = vor.u32 %v1453, %v1451
      %v1455 = vrot.slane %v1454, 4
      %v1457 = vshll.u32 %v1345, 16
      %v1459 = vrot.slane %v1457, 5
      %v1460 = vsel %vm1348, %v1455, %v1459
      %v1461 = vunpack.c.l.b16 %v1174
      %v1462 = vunpack.c.l.b16 %v1183
      %v1463 = vunpack.c.l.b16 %v1196
      %v1464 = vunpack.c.l.b16 %v1205
      %v1465 = vunpack.c.l.b16 %v1218
      %v1466 = vunpack.c.l.b16 %v1227
      %v1467 = vunpack.c.l.b16 %v1240
      %v1468 = vunpack.c.l.b16 %v1249
      %v1469 = vunpack.c.l.b16 %v1262
      %v1470 = vunpack.c.l.b16 %v1271
      %v1471 = vunpack.c.l.b16 %v1284
      %v1472 = vunpack.c.l.b16 %v1293
      %v1473 = vunpack.c.l.b16 %v1306
      %v1474 = vunpack.c.l.b16 %v1315
      %v1475 = vunpack.c.l.b16 %v1328
      %v1476 = vunpack.c.l.b16 %v1337
      %v1477 = vpack.c.b16 %v1462, %v1461
      %v1478 = vpack.c.b16 %v1464, %v1463
      %v1479 = vpack.c.b16 %v1466, %v1465
      %v1480 = vpack.c.b16 %v1468, %v1467
      %v1481 = vpack.c.b16 %v1470, %v1469
      %v1482 = vpack.c.b16 %v1472, %v1471
      %v1483 = vpack.c.b16 %v1474, %v1473
      %v1484 = vpack.c.b16 %v1476, %v1475
      %v1509 = vunpack.c.l.b16 %v1137
      %v1510 = vunpack.c.l.b16 %v1138
      %v1511 = vunpack.c.l.b16 %v1140
      %v1512 = vunpack.c.l.b16 %v1141
      %v1513 = vunpack.c.l.b16 %v1143
      %v1514 = vunpack.c.l.b16 %v1144
      %v1515 = vunpack.c.l.b16 %v1146
      %v1516 = vunpack.c.l.b16 %v1147
      %v1517 = vunpack.c.l.b16 %v1149
      %v1518 = vunpack.c.l.b16 %v1150
      %v1519 = vunpack.c.l.b16 %v1152
      %v1520 = vunpack.c.l.b16 %v1153
      %v1521 = vunpack.c.l.b16 %v1155
      %v1522 = vunpack.c.l.b16 %v1156
      %v1523 = vunpack.c.l.b16 %v1158
      %v1524 = vunpack.c.l.b16 %v1159
      %v1525 = vpack.c.b16 %v1510, %v1509
      %v1526 = vpack.c.b16 %v1512, %v1511
      %v1527 = vpack.c.b16 %v1514, %v1513
      %v1528 = vpack.c.b16 %v1516, %v1515
      %v1529 = vpack.c.b16 %v1518, %v1517
      %v1530 = vpack.c.b16 %v1520, %v1519
      %v1531 = vpack.c.b16 %v1522, %v1521
      %v1532 = vpack.c.b16 %v1524, %v1523
      %v1541 = vunpack.c.l.b16 %v1354
      %v1542 = vunpack.c.l.b16 %v1362
      %v1543 = vunpack.c.l.b16 %v1368
      %v1544 = vunpack.c.l.b16 %v1376
      %v1545 = vunpack.c.l.b16 %v1382
      %v1546 = vunpack.c.l.b16 %v1390
      %v1547 = vunpack.c.l.b16 %v1396
      %v1548 = vunpack.c.l.b16 %v1404
      %v1549 = vunpack.c.l.b16 %v1410
      %v1550 = vunpack.c.l.b16 %v1418
      %v1551 = vunpack.c.l.b16 %v1424
      %v1552 = vunpack.c.l.b16 %v1432
      %v1553 = vunpack.c.l.b16 %v1438
      %v1554 = vunpack.c.l.b16 %v1446
      %v1555 = vunpack.c.l.b16 %v1452
      %v1556 = vunpack.c.l.b16 %v1460
      %v1557 = vpack.c.b16 %v1542, %v1541
      %v1558 = vpack.c.b16 %v1544, %v1543
      %v1559 = vpack.c.b16 %v1546, %v1545
      %v1560 = vpack.c.b16 %v1548, %v1547
      %v1561 = vpack.c.b16 %v1550, %v1549
      %v1562 = vpack.c.b16 %v1552, %v1551
      %v1563 = vpack.c.b16 %v1554, %v1553
      %v1564 = vpack.c.b16 %v1556, %v1555
      %v1573 = vld [vmem:[%s6] sm:$0xf]
      %v1574 = vld [vmem:[%s6 + $0x4] sm:$0xf]
      %v1575 = vld [vmem:[%s6 + $0x8] sm:$0xf]
      %v1576 = vld [vmem:[%s6 + $0xc] sm:$0xf]
      %v1577 = vld [vmem:[%s6 + $0x10] sm:$0xf]
      %v1578 = vld [vmem:[%s6 + $0x14] sm:$0xf]
      %v1579 = vld [vmem:[%s6 + $0x18] sm:$0xf]
      %v1580 = vld [vmem:[%s6 + $0x1c] sm:$0xf]
      %v1581 = vld [vmem:[%s6 + $0x20] sm:$0xf]
      %v1582 = vld [vmem:[%s6 + $0x24] sm:$0xf]
      %v1583 = vld [vmem:[%s6 + $0x28] sm:$0xf]
      %v1584 = vld [vmem:[%s6 + $0x2c] sm:$0xf]
      %v1585 = vld [vmem:[%s6 + $0x30] sm:$0xf]
      %v1586 = vld [vmem:[%s6 + $0x34] sm:$0xf]
      %v1587 = vld [vmem:[%s6 + $0x38] sm:$0xf]
      %v1588 = vld [vmem:[%s6 + $0x3c] sm:$0xf]
      %v1589 = vld [vmem:[%s6 + $0x40] sm:$0xf]
      %v1590 = vld [vmem:[%s6 + $0x44] sm:$0xf]
      %v1591 = vld [vmem:[%s6 + $0x48] sm:$0xf]
      %v1592 = vld [vmem:[%s6 + $0x4c] sm:$0xf]
      %v1593 = vld [vmem:[%s6 + $0x50] sm:$0xf]
      %v1594 = vld [vmem:[%s6 + $0x54] sm:$0xf]
      %v1595 = vld [vmem:[%s6 + $0x58] sm:$0xf]
      %v1596 = vld [vmem:[%s6 + $0x5c] sm:$0xf]
      %v1597 = vld [vmem:[%s6 + $0x60] sm:$0xf]
      %v1598 = vld [vmem:[%s6 + $0x64] sm:$0xf]
      %v1599 = vld [vmem:[%s6 + $0x68] sm:$0xf]
      %v1600 = vld [vmem:[%s6 + $0x6c] sm:$0xf]
      %v1601 = vld [vmem:[%s6 + $0x70] sm:$0xf]
      %v1602 = vld [vmem:[%s6 + $0x74] sm:$0xf]
      %v1603 = vld [vmem:[%s6 + $0x78] sm:$0xf]
      %v1604 = vld [vmem:[%s6 + $0x7c] sm:$0xf]
      %v1605 = vld [vmem:[%s6 + $0x80] sm:$0xf]
      %v1606 = vld [vmem:[%s6 + $0x84] sm:$0xf]
      %v1607 = vld [vmem:[%s6 + $0x88] sm:$0xf]
      %v1608 = vld [vmem:[%s6 + $0x8c] sm:$0xf]
      %v1609 = vld [vmem:[%s6 + $0x90] sm:$0xf]
      %v1610 = vld [vmem:[%s6 + $0x94] sm:$0xf]
      %v1611 = vld [vmem:[%s6 + $0x98] sm:$0xf]
      %v1612 = vld [vmem:[%s6 + $0x9c] sm:$0xf]
      %v1613 = vld [vmem:[%s6 + $0xa0] sm:$0xf]
      %v1614 = vld [vmem:[%s6 + $0xa4] sm:$0xf]
      %v1615 = vld [vmem:[%s6 + $0xa8] sm:$0xf]
      %v1616 = vld [vmem:[%s6 + $0xac] sm:$0xf]
      %v1617 = vld [vmem:[%s6 + $0xb0] sm:$0xf]
      %v1618 = vld [vmem:[%s6 + $0xb4] sm:$0xf]
      %v1619 = vld [vmem:[%s6 + $0xb8] sm:$0xf]
      %v1620 = vld [vmem:[%s6 + $0xbc] sm:$0xf]
      %v1621 = vld [vmem:[%s1107 + $0x4] sm:$0x8]
      %v1622 = vld [vmem:[%s1107 + $0x8] sm:$0xf]
      %v1623 = vld [vmem:[%s1107 + $0xc] sm:$0xf]
      %v1624 = vld [vmem:[%s1107 + $0x18] sm:$0x8]
      %v1625 = vld [vmem:[%s1107 + $0x1c] sm:$0xf]
      %v1626 = vld [vmem:[%s1107 + $0x20] sm:$0xf]
      %v1627 = vld [vmem:[%s1107 + $0x2c] sm:$0x8]
      %v1628 = vld [vmem:[%s1107 + $0x30] sm:$0xf]
      %v1629 = vld [vmem:[%s1107 + $0x34] sm:$0xf]
      %v1630 = vld [vmem:[%s1107 + $0x40] sm:$0x8]
      %v1631 = vld [vmem:[%s1107 + $0x44] sm:$0xf]
      %v1632 = vld [vmem:[%s1107 + $0x48] sm:$0xf]
      %v1633 = vld [vmem:[%s1107 + $0x54] sm:$0x8]
      %v1634 = vld [vmem:[%s1107 + $0x58] sm:$0xf]
      %v1635 = vld [vmem:[%s1107 + $0x5c] sm:$0xf]
      %v1636 = vld [vmem:[%s1107 + $0x68] sm:$0x8]
      %v1637 = vld [vmem:[%s1107 + $0x6c] sm:$0xf]
      %v1638 = vld [vmem:[%s1107 + $0x70] sm:$0xf]
      %v1639 = vld [vmem:[%s1107 + $0x7c] sm:$0x8]
      %v1640 = vld [vmem:[%s1107 + $0x80] sm:$0xf]
      %v1641 = vld [vmem:[%s1107 + $0x84] sm:$0xf]
      %v1642 = vld [vmem:[%s1107 + $0x90] sm:$0x8]
      %v1643 = vld [vmem:[%s1107 + $0x94] sm:$0xf]
      %v1644 = vld [vmem:[%s1107 + $0x98] sm:$0xf]
      %v1646 = vshrl.u32 %v1621, 16
      %v1648 = vrot.slane %v1646, 7
      %v1649 = vrot.slane %v1648, 4
      %v1651 = vshrl.u32 %v1622, 16
      %v1653 = vrot.slane %v1651, 7
      %v1654 = vshll.u32 %v1622, 16
      %v1656 = vor.u32 %v1653, %v1654
      %v1657 = vsel %vm1161, %v1649, %v1656
      %v1658 = vrot.slane %v1653, 4
      %v1660 = vshrl.u32 %v1623, 16
      %v1662 = vrot.slane %v1660, 7
      %v1663 = vshll.u32 %v1623, 16
      %v1665 = vor.u32 %v1662, %v1663
      %v1666 = vsel %vm1161, %v1658, %v1665
      %v1668 = vshrl.u32 %v1624, 16
      %v1670 = vrot.slane %v1668, 7
      %v1671 = vrot.slane %v1670, 4
      %v1673 = vshrl.u32 %v1625, 16
      %v1675 = vrot.slane %v1673, 7
      %v1676 = vshll.u32 %v1625, 16
      %v1678 = vor.u32 %v1675, %v1676
      %v1679 = vsel %vm1161, %v1671, %v1678
      %v1680 = vrot.slane %v1675, 4
      %v1682 = vshrl.u32 %v1626, 16
      %v1684 = vrot.slane %v1682, 7
      %v1685 = vshll.u32 %v1626, 16
      %v1687 = vor.u32 %v1684, %v1685
      %v1688 = vsel %vm1161, %v1680, %v1687
      %v1690 = vshrl.u32 %v1627, 16
      %v1692 = vrot.slane %v1690, 7
      %v1693 = vrot.slane %v1692, 4
      %v1695 = vshrl.u32 %v1628, 16
      %v1697 = vrot.slane %v1695, 7
      %v1698 = vshll.u32 %v1628, 16
      %v1700 = vor.u32 %v1697, %v1698
      %v1701 = vsel %vm1161, %v1693, %v1700
      %v1702 = vrot.slane %v1697, 4
      %v1704 = vshrl.u32 %v1629, 16
      %v1706 = vrot.slane %v1704, 7
      %v1707 = vshll.u32 %v1629, 16
      %v1709 = vor.u32 %v1706, %v1707
      %v1710 = vsel %vm1161, %v1702, %v1709
      %v1712 = vshrl.u32 %v1630, 16
      %v1714 = vrot.slane %v1712, 7
      %v1715 = vrot.slane %v1714, 4
      %v1717 = vshrl.u32 %v1631, 16
      %v1719 = vrot.slane %v1717, 7
      %v1720 = vshll.u32 %v1631, 16
      %v1722 = vor.u32 %v1719, %v1720
      %v1723 = vsel %vm1161, %v1715, %v1722
      %v1724 = vrot.slane %v1719, 4
      %v1726 = vshrl.u32 %v1632, 16
      %v1728 = vrot.slane %v1726, 7
      %v1729 = vshll.u32 %v1632, 16
      %v1731 = vor.u32 %v1728, %v1729
      %v1732 = vsel %vm1161, %v1724, %v1731
      %v1734 = vshrl.u32 %v1633, 16
      %v1736 = vrot.slane %v1734, 7
      %v1737 = vrot.slane %v1736, 4
      %v1739 = vshrl.u32 %v1634, 16
      %v1741 = vrot.slane %v1739, 7
      %v1742 = vshll.u32 %v1634, 16
      %v1744 = vor.u32 %v1741, %v1742
      %v1745 = vsel %vm1161, %v1737, %v1744
      %v1746 = vrot.slane %v1741, 4
      %v1748 = vshrl.u32 %v1635, 16
      %v1750 = vrot.slane %v1748, 7
      %v1751 = vshll.u32 %v1635, 16
      %v1753 = vor.u32 %v1750, %v1751
      %v1754 = vsel %vm1161, %v1746, %v1753
      %v1756 = vshrl.u32 %v1636, 16
      %v1758 = vrot.slane %v1756, 7
      %v1759 = vrot.slane %v1758, 4
      %v1761 = vshrl.u32 %v1637, 16
      %v1763 = vrot.slane %v1761, 7
      %v1764 = vshll.u32 %v1637, 16
      %v1766 = vor.u32 %v1763, %v1764
      %v1767 = vsel %vm1161, %v1759, %v1766
      %v1768 = vrot.slane %v1763, 4
      %v1770 = vshrl.u32 %v1638, 16
      %v1772 = vrot.slane %v1770, 7
      %v1773 = vshll.u32 %v1638, 16
      %v1775 = vor.u32 %v1772, %v1773
      %v1776 = vsel %vm1161, %v1768, %v1775
      %v1778 = vshrl.u32 %v1639, 16
      %v1780 = vrot.slane %v1778, 7
      %v1781 = vrot.slane %v1780, 4
      %v1783 = vshrl.u32 %v1640, 16
      %v1785 = vrot.slane %v1783, 7
      %v1786 = vshll.u32 %v1640, 16
      %v1788 = vor.u32 %v1785, %v1786
      %v1789 = vsel %vm1161, %v1781, %v1788
      %v1790 = vrot.slane %v1785, 4
      %v1792 = vshrl.u32 %v1641, 16
      %v1794 = vrot.slane %v1792, 7
      %v1795 = vshll.u32 %v1641, 16
      %v1797 = vor.u32 %v1794, %v1795
      %v1798 = vsel %vm1161, %v1790, %v1797
      %v1800 = vshrl.u32 %v1642, 16
      %v1802 = vrot.slane %v1800, 7
      %v1803 = vrot.slane %v1802, 4
      %v1805 = vshrl.u32 %v1643, 16
      %v1807 = vrot.slane %v1805, 7
      %v1808 = vshll.u32 %v1643, 16
      %v1810 = vor.u32 %v1807, %v1808
      %v1811 = vsel %vm1161, %v1803, %v1810
      %v1812 = vrot.slane %v1807, 4
      %v1814 = vshrl.u32 %v1644, 16
      %v1816 = vrot.slane %v1814, 7
      %v1817 = vshll.u32 %v1644, 16
      %v1819 = vor.u32 %v1816, %v1817
      %v1820 = vsel %vm1161, %v1812, %v1819
      %v1821 = vld [vmem:[%s1107 + $0x10] sm:$0x1]
      %v1822 = vld [vmem:[%s1107 + $0x24] sm:$0x1]
      %v1823 = vld [vmem:[%s1107 + $0x38] sm:$0x1]
      %v1824 = vld [vmem:[%s1107 + $0x4c] sm:$0x1]
      %v1825 = vld [vmem:[%s1107 + $0x60] sm:$0x1]
      %v1826 = vld [vmem:[%s1107 + $0x74] sm:$0x1]
      %v1827 = vld [vmem:[%s1107 + $0x88] sm:$0x1]
      %v1828 = vld [vmem:[%s1107 + $0x9c] sm:$0x1]
      %v1829 = vrot.slane %v1651, 4
      %v1830 = vrot.slane %v1654, 5
      %v1831 = vor.u32 %v1829, %v1830
      %v1832 = vrot.slane %v1831, 4
      %v1833 = vrot.slane %v1663, 5
      %v1834 = vsel %vm1348, %v1832, %v1833
      %v1835 = vrot.slane %v1660, 4
      %v1836 = vor.u32 %v1835, %v1833
      %v1837 = vrot.slane %v1836, 4
      %v1839 = vshll.u32 %v1821, 16
      %v1841 = vrot.slane %v1839, 5
      %v1842 = vsel %vm1348, %v1837, %v1841
      %v1843 = vrot.slane %v1673, 4
      %v1844 = vrot.slane %v1676, 5
      %v1845 = vor.u32 %v1843, %v1844
      %v1846 = vrot.slane %v1845, 4
      %v1847 = vrot.slane %v1685, 5
      %v1848 = vsel %vm1348, %v1846, %v1847
      %v1849 = vrot.slane %v1682, 4
      %v1850 = vor.u32 %v1849, %v1847
      %v1851 = vrot.slane %v1850, 4
      %v1853 = vshll.u32 %v1822, 16
      %v1855 = vrot.slane %v1853, 5
      %v1856 = vsel %vm1348, %v1851, %v1855
      %v1857 = vrot.slane %v1695, 4
      %v1858 = vrot.slane %v1698, 5
      %v1859 = vor.u32 %v1857, %v1858
      %v1860 = vrot.slane %v1859, 4
      %v1861 = vrot.slane %v1707, 5
      %v1862 = vsel %vm1348, %v1860, %v1861
      %v1863 = vrot.slane %v1704, 4
      %v1864 = vor.u32 %v1863, %v1861
      %v1865 = vrot.slane %v1864, 4
      %v1867 = vshll.u32 %v1823, 16
      %v1869 = vrot.slane %v1867, 5
      %v1870 = vsel %vm1348, %v1865, %v1869
      %v1871 = vrot.slane %v1717, 4
      %v1872 = vrot.slane %v1720, 5
      %v1873 = vor.u32 %v1871, %v1872
      %v1874 = vrot.slane %v1873, 4
      %v1875 = vrot.slane %v1729, 5
      %v1876 = vsel %vm1348, %v1874, %v1875
      %v1877 = vrot.slane %v1726, 4
      %v1878 = vor.u32 %v1877, %v1875
      %v1879 = vrot.slane %v1878, 4
      %v1881 = vshll.u32 %v1824, 16
      %v1883 = vrot.slane %v1881, 5
      %v1884 = vsel %vm1348, %v1879, %v1883
      %v1885 = vrot.slane %v1739, 4
      %v1886 = vrot.slane %v1742, 5
      %v1887 = vor.u32 %v1885, %v1886
      %v1888 = vrot.slane %v1887, 4
      %v1889 = vrot.slane %v1751, 5
      %v1890 = vsel %vm1348, %v1888, %v1889
      %v1891 = vrot.slane %v1748, 4
      %v1892 = vor.u32 %v1891, %v1889
      %v1893 = vrot.slane %v1892, 4
      %v1895 = vshll.u32 %v1825, 16
      %v1897 = vrot.slane %v1895, 5
      %v1898 = vsel %vm1348, %v1893, %v1897
      %v1899 = vrot.slane %v1761, 4
      %v1900 = vrot.slane %v1764, 5
      %v1901 = vor.u32 %v1899, %v1900
      %v1902 = vrot.slane %v1901, 4
      %v1903 = vrot.slane %v1773, 5
      %v1904 = vsel %vm1348, %v1902, %v1903
      %v1905 = vrot.slane %v1770, 4
      %v1906 = vor.u32 %v1905, %v1903
      %v1907 = vrot.slane %v1906, 4
      %v1909 = vshll.u32 %v1826, 16
      %v1911 = vrot.slane %v1909, 5
      %v1912 = vsel %vm1348, %v1907, %v1911
      %v1913 = vrot.slane %v1783, 4
      %v1914 = vrot.slane %v1786, 5
      %v1915 = vor.u32 %v1913, %v1914
      %v1916 = vrot.slane %v1915, 4
      %v1917 = vrot.slane %v1795, 5
      %v1918 = vsel %vm1348, %v1916, %v1917
      %v1919 = vrot.slane %v1792, 4
      %v1920 = vor.u32 %v1919, %v1917
      %v1921 = vrot.slane %v1920, 4
      %v1923 = vshll.u32 %v1827, 16
      %v1925 = vrot.slane %v1923, 5
      %v1926 = vsel %vm1348, %v1921, %v1925
      %v1927 = vrot.slane %v1805, 4
      %v1928 = vrot.slane %v1808, 5
      %v1929 = vor.u32 %v1927, %v1928
      %v1930 = vrot.slane %v1929, 4
      %v1931 = vrot.slane %v1817, 5
      %v1932 = vsel %vm1348, %v1930, %v1931
      %v1933 = vrot.slane %v1814, 4
      %v1934 = vor.u32 %v1933, %v1931
      %v1935 = vrot.slane %v1934, 4
      %v1937 = vshll.u32 %v1828, 16
      %v1939 = vrot.slane %v1937, 5
      %v1940 = vsel %vm1348, %v1935, %v1939
      %v1941 = vunpack.c.l.b16 %v1657
      %v1942 = vunpack.c.l.b16 %v1666
      %v1943 = vunpack.c.l.b16 %v1679
      %v1944 = vunpack.c.l.b16 %v1688
      %v1945 = vunpack.c.l.b16 %v1701
      %v1946 = vunpack.c.l.b16 %v1710
      %v1947 = vunpack.c.l.b16 %v1723
      %v1948 = vunpack.c.l.b16 %v1732
      %v1949 = vunpack.c.l.b16 %v1745
      %v1950 = vunpack.c.l.b16 %v1754
      %v1951 = vunpack.c.l.b16 %v1767
      %v1952 = vunpack.c.l.b16 %v1776
      %v1953 = vunpack.c.l.b16 %v1789
      %v1954 = vunpack.c.l.b16 %v1798
      %v1955 = vunpack.c.l.b16 %v1811
      %v1956 = vunpack.c.l.b16 %v1820
      %v1957 = vpack.c.b16 %v1942, %v1941
      %v1958 = vpack.c.b16 %v1944, %v1943
      %v1959 = vpack.c.b16 %v1946, %v1945
      %v1960 = vpack.c.b16 %v1948, %v1947
      %v1961 = vpack.c.b16 %v1950, %v1949
      %v1962 = vpack.c.b16 %v1952, %v1951
      %v1963 = vpack.c.b16 %v1954, %v1953
      %v1964 = vpack.c.b16 %v1956, %v1955
      %v1989 = vunpack.c.l.b16 %v1622
      %v1990 = vunpack.c.l.b16 %v1623
      %v1991 = vunpack.c.l.b16 %v1625
      %v1992 = vunpack.c.l.b16 %v1626
      %v1993 = vunpack.c.l.b16 %v1628
      %v1994 = vunpack.c.l.b16 %v1629
      %v1995 = vunpack.c.l.b16 %v1631
      %v1996 = vunpack.c.l.b16 %v1632
      %v1997 = vunpack.c.l.b16 %v1634
      %v1998 = vunpack.c.l.b16 %v1635
      %v1999 = vunpack.c.l.b16 %v1637
      %v2000 = vunpack.c.l.b16 %v1638
      %v2001 = vunpack.c.l.b16 %v1640
      %v2002 = vunpack.c.l.b16 %v1641
      %v2003 = vunpack.c.l.b16 %v1643
      %v2004 = vunpack.c.l.b16 %v1644
      %v2005 = vpack.c.b16 %v1990, %v1989
      %v2006 = vpack.c.b16 %v1992, %v1991
      %v2007 = vpack.c.b16 %v1994, %v1993
      %v2008 = vpack.c.b16 %v1996, %v1995
      %v2009 = vpack.c.b16 %v1998, %v1997
      %v2010 = vpack.c.b16 %v2000, %v1999
      %v2011 = vpack.c.b16 %v2002, %v2001
      %v2012 = vpack.c.b16 %v2004, %v2003
      %v2021 = vunpack.c.l.b16 %v1834
      %v2022 = vunpack.c.l.b16 %v1842
      %v2023 = vunpack.c.l.b16 %v1848
      %v2024 = vunpack.c.l.b16 %v1856
      %v2025 = vunpack.c.l.b16 %v1862
      %v2026 = vunpack.c.l.b16 %v1870
      %v2027 = vunpack.c.l.b16 %v1876
      %v2028 = vunpack.c.l.b16 %v1884
      %v2029 = vunpack.c.l.b16 %v1890
      %v2030 = vunpack.c.l.b16 %v1898
      %v2031 = vunpack.c.l.b16 %v1904
      %v2032 = vunpack.c.l.b16 %v1912
      %v2033 = vunpack.c.l.b16 %v1918
      %v2034 = vunpack.c.l.b16 %v1926
      %v2035 = vunpack.c.l.b16 %v1932
      %v2036 = vunpack.c.l.b16 %v1940
      %v2037 = vpack.c.b16 %v2022, %v2021
      %v2038 = vpack.c.b16 %v2024, %v2023
      %v2039 = vpack.c.b16 %v2026, %v2025
      %v2040 = vpack.c.b16 %v2028, %v2027
      %v2041 = vpack.c.b16 %v2030, %v2029
      %v2042 = vpack.c.b16 %v2032, %v2031
      %v2043 = vpack.c.b16 %v2034, %v2033
      %v2044 = vpack.c.b16 %v2036, %v2035
      %s2053 = scalar_lea.vmem %s6, 192
      %v2054 = vld [vmem:[%s2053] sm:$0xf]
      %v2055 = vld [vmem:[%s2053 + $0x4] sm:$0xf]
      %v2056 = vld [vmem:[%s2053 + $0x8] sm:$0xf]
      %v2057 = vld [vmem:[%s2053 + $0xc] sm:$0xf]
      %v2058 = vld [vmem:[%s2053 + $0x10] sm:$0xf]
      %v2059 = vld [vmem:[%s2053 + $0x14] sm:$0xf]
      %v2060 = vld [vmem:[%s2053 + $0x18] sm:$0xf]
      %v2061 = vld [vmem:[%s2053 + $0x1c] sm:$0xf]
      %v2062 = vld [vmem:[%s2053 + $0x20] sm:$0xf]
      %v2063 = vld [vmem:[%s2053 + $0x24] sm:$0xf]
      %v2064 = vld [vmem:[%s2053 + $0x28] sm:$0xf]
      %v2065 = vld [vmem:[%s2053 + $0x2c] sm:$0xf]
      %v2066 = vld [vmem:[%s2053 + $0x30] sm:$0xf]
      %v2067 = vld [vmem:[%s2053 + $0x34] sm:$0xf]
      %v2068 = vld [vmem:[%s2053 + $0x38] sm:$0xf]
      %v2069 = vld [vmem:[%s2053 + $0x3c] sm:$0xf]
      %v2070 = vld [vmem:[%s2053 + $0x40] sm:$0xf]
      %v2071 = vld [vmem:[%s2053 + $0x44] sm:$0xf]
      %v2072 = vld [vmem:[%s2053 + $0x48] sm:$0xf]
      %v2073 = vld [vmem:[%s2053 + $0x4c] sm:$0xf]
      %v2074 = vld [vmem:[%s2053 + $0x50] sm:$0xf]
      %v2075 = vld [vmem:[%s2053 + $0x54] sm:$0xf]
      %v2076 = vld [vmem:[%s2053 + $0x58] sm:$0xf]
      %v2077 = vld [vmem:[%s2053 + $0x5c] sm:$0xf]
      %v2078 = vld [vmem:[%s2053 + $0x60] sm:$0xf]
      %v2079 = vld [vmem:[%s2053 + $0x64] sm:$0xf]
      %v2080 = vld [vmem:[%s2053 + $0x68] sm:$0xf]
      %v2081 = vld [vmem:[%s2053 + $0x6c] sm:$0xf]
      %v2082 = vld [vmem:[%s2053 + $0x70] sm:$0xf]
      %v2083 = vld [vmem:[%s2053 + $0x74] sm:$0xf]
      %v2084 = vld [vmem:[%s2053 + $0x78] sm:$0xf]
      %v2085 = vld [vmem:[%s2053 + $0x7c] sm:$0xf]
      %v2086 = vld [vmem:[%s2053 + $0x80] sm:$0xf]
      %v2087 = vld [vmem:[%s2053 + $0x84] sm:$0xf]
      %v2088 = vld [vmem:[%s2053 + $0x88] sm:$0xf]
      %v2089 = vld [vmem:[%s2053 + $0x8c] sm:$0xf]
      %v2090 = vld [vmem:[%s2053 + $0x90] sm:$0xf]
      %v2091 = vld [vmem:[%s2053 + $0x94] sm:$0xf]
      %v2092 = vld [vmem:[%s2053 + $0x98] sm:$0xf]
      %v2093 = vld [vmem:[%s2053 + $0x9c] sm:$0xf]
      %v2094 = vld [vmem:[%s2053 + $0xa0] sm:$0xf]
      %v2095 = vld [vmem:[%s2053 + $0xa4] sm:$0xf]
      %v2096 = vld [vmem:[%s2053 + $0xa8] sm:$0xf]
      %v2097 = vld [vmem:[%s2053 + $0xac] sm:$0xf]
      %v2098 = vld [vmem:[%s2053 + $0xb0] sm:$0xf]
      %v2099 = vld [vmem:[%s2053 + $0xb4] sm:$0xf]
      %v2100 = vld [vmem:[%s2053 + $0xb8] sm:$0xf]
      %v2101 = vld [vmem:[%s2053 + $0xbc] sm:$0xf]
      %v2150 = vunpack.c.l.b16 %v2054
      %v2151 = vunpack.c.l.b16 %v2055
      %v2152 = vunpack.c.l.b16 %v2056
      %v2153 = vunpack.c.l.b16 %v2057
      %v2154 = vunpack.c.l.b16 %v2058
      %v2155 = vunpack.c.l.b16 %v2059
      %v2156 = vunpack.c.l.b16 %v2060
      %v2157 = vunpack.c.l.b16 %v2061
      %v2158 = vunpack.c.l.b16 %v2062
      %v2159 = vunpack.c.l.b16 %v2063
      %v2160 = vunpack.c.l.b16 %v2064
      %v2161 = vunpack.c.l.b16 %v2065
      %v2162 = vunpack.c.l.b16 %v2066
      %v2163 = vunpack.c.l.b16 %v2067
      %v2164 = vunpack.c.l.b16 %v2068
      %v2165 = vunpack.c.l.b16 %v2069
      %v2166 = vunpack.c.l.b16 %v2070
      %v2167 = vunpack.c.l.b16 %v2071
      %v2168 = vunpack.c.l.b16 %v2072
      %v2169 = vunpack.c.l.b16 %v2073
      %v2170 = vunpack.c.l.b16 %v2074
      %v2171 = vunpack.c.l.b16 %v2075
      %v2172 = vunpack.c.l.b16 %v2076
      %v2173 = vunpack.c.l.b16 %v2077
      %v2174 = vunpack.c.l.b16 %v2078
      %v2175 = vunpack.c.l.b16 %v2079
      %v2176 = vunpack.c.l.b16 %v2080
      %v2177 = vunpack.c.l.b16 %v2081
      %v2178 = vunpack.c.l.b16 %v2082
      %v2179 = vunpack.c.l.b16 %v2083
      %v2180 = vunpack.c.l.b16 %v2084
      %v2181 = vunpack.c.l.b16 %v2085
      %v2182 = vunpack.c.l.b16 %v2086
      %v2183 = vunpack.c.l.b16 %v2087
      %v2184 = vunpack.c.l.b16 %v2088
      %v2185 = vunpack.c.l.b16 %v2089
      %v2186 = vunpack.c.l.b16 %v2090
      %v2187 = vunpack.c.l.b16 %v2091
      %v2188 = vunpack.c.l.b16 %v2092
      %v2189 = vunpack.c.l.b16 %v2093
      %v2190 = vunpack.c.l.b16 %v2094
      %v2191 = vunpack.c.l.b16 %v2095
      %v2192 = vunpack.c.l.b16 %v2096
      %v2193 = vunpack.c.l.b16 %v2097
      %v2194 = vunpack.c.l.b16 %v2098
      %v2195 = vunpack.c.l.b16 %v2099
      %v2196 = vunpack.c.l.b16 %v2100
      %v2197 = vunpack.c.l.b16 %v2101
      %v2198 = vpack.c.b16 %v2151, %v2150
      %v2199 = vpack.c.b16 %v2153, %v2152
      %v2200 = vpack.c.b16 %v2155, %v2154
      %v2201 = vpack.c.b16 %v2157, %v2156
      %v2202 = vpack.c.b16 %v2159, %v2158
      %v2203 = vpack.c.b16 %v2161, %v2160
      %v2204 = vpack.c.b16 %v2163, %v2162
      %v2205 = vpack.c.b16 %v2165, %v2164
      %v2206 = vpack.c.b16 %v2167, %v2166
      %v2207 = vpack.c.b16 %v2169, %v2168
      %v2208 = vpack.c.b16 %v2171, %v2170
      %v2209 = vpack.c.b16 %v2173, %v2172
      %v2210 = vpack.c.b16 %v2175, %v2174
      %v2211 = vpack.c.b16 %v2177, %v2176
      %v2212 = vpack.c.b16 %v2179, %v2178
      %v2213 = vpack.c.b16 %v2181, %v2180
      %v2214 = vpack.c.b16 %v2183, %v2182
      %v2215 = vpack.c.b16 %v2185, %v2184
      %v2216 = vpack.c.b16 %v2187, %v2186
      %v2217 = vpack.c.b16 %v2189, %v2188
      %v2218 = vpack.c.b16 %v2191, %v2190
      %v2219 = vpack.c.b16 %v2193, %v2192
      %v2220 = vpack.c.b16 %v2195, %v2194
      %v2221 = vpack.c.b16 %v2197, %v2196
      %2246 = vmatpush.bf16.msra.mxu0 %v2205
      %2247 = vmatpush.bf16.msra.mxu0 %v2204
      %2248 = vmatpush.bf16.msra.mxu0 %v2203
      %2249 = vmatpush.bf16.msra.mxu0 %v2202
      %2250 = vmatpush.bf16.msra.mxu0 %v2201
      %2251 = vmatpush.bf16.msra.mxu0 %v2200
      %2252 = vmatpush.bf16.msra.mxu0 %v2199
      %2253 = vmatpush.bf16.msra.mxu0 %v2198
      %2254 = vmatmul.bf16.gmra.mxu0 %v1957
      %v2255 = vpop.f32.mrf.mxu0
      %v2256 = vadd.f32 0.0, %v2255
      %v2257 = vpop.f32.mrf.mxu0
      %v2258 = vadd.f32 0.0, %v2257
      %2259 = vmatmul.bf16.gmra.mxu0 %v1958
      %v2260 = vpop.f32.mrf.mxu0
      %v2261 = vadd.f32 0.0, %v2260
      %v2262 = vpop.f32.mrf.mxu0
      %v2263 = vadd.f32 0.0, %v2262
      %2264 = vmatmul.bf16.gmra.mxu0 %v1959
      %v2265 = vpop.f32.mrf.mxu0
      %v2266 = vadd.f32 0.0, %v2265
      %v2267 = vpop.f32.mrf.mxu0
      %v2268 = vadd.f32 0.0, %v2267
      %2269 = vmatmul.bf16.gmra.mxu0 %v1960
      %v2270 = vpop.f32.mrf.mxu0
      %v2271 = vadd.f32 0.0, %v2270
      %v2272 = vpop.f32.mrf.mxu0
      %v2273 = vadd.f32 0.0, %v2272
      %2274 = vmatmul.bf16.gmra.mxu0 %v1961
      %v2275 = vpop.f32.mrf.mxu0
      %v2276 = vadd.f32 0.0, %v2275
      %v2277 = vpop.f32.mrf.mxu0
      %v2278 = vadd.f32 0.0, %v2277
      %2279 = vmatmul.bf16.gmra.mxu0 %v1962
      %v2280 = vpop.f32.mrf.mxu0
      %v2281 = vadd.f32 0.0, %v2280
      %v2282 = vpop.f32.mrf.mxu0
      %v2283 = vadd.f32 0.0, %v2282
      %2284 = vmatmul.bf16.gmra.mxu0 %v1963
      %v2285 = vpop.f32.mrf.mxu0
      %v2286 = vadd.f32 0.0, %v2285
      %v2287 = vpop.f32.mrf.mxu0
      %v2288 = vadd.f32 0.0, %v2287
      %2289 = vmatmul.bf16.gmra.mxu0 %v1964
      %v2290 = vpop.f32.mrf.mxu0
      %v2291 = vadd.f32 0.0, %v2290
      %v2292 = vpop.f32.mrf.mxu0
      %v2293 = vadd.f32 0.0, %v2292
      %2294 = vdwg.mxu0
      %2295 = vmatpush.bf16.msra.mxu0 %v2213
      %2296 = vmatpush.bf16.msra.mxu0 %v2212
      %2297 = vmatpush.bf16.msra.mxu0 %v2211
      %2298 = vmatpush.bf16.msra.mxu0 %v2210
      %2299 = vmatpush.bf16.msra.mxu0 %v2209
      %2300 = vmatpush.bf16.msra.mxu0 %v2208
      %2301 = vmatpush.bf16.msra.mxu0 %v2207
      %2302 = vmatpush.bf16.msra.mxu0 %v2206
      %2303 = vmatmul.bf16.gmra.mxu0 %v2005
      %v2304 = vpop.f32.mrf.mxu0
      %v2305 = vadd.f32 %v2256, %v2304
      %v2306 = vpop.f32.mrf.mxu0
      %v2307 = vadd.f32 %v2258, %v2306
      %2308 = vmatmul.bf16.gmra.mxu0 %v2006
      %v2309 = vpop.f32.mrf.mxu0
      %v2310 = vadd.f32 %v2261, %v2309
      %v2311 = vpop.f32.mrf.mxu0
      %v2312 = vadd.f32 %v2263, %v2311
      %2313 = vmatmul.bf16.gmra.mxu0 %v2007
      %v2314 = vpop.f32.mrf.mxu0
      %v2315 = vadd.f32 %v2266, %v2314
      %v2316 = vpop.f32.mrf.mxu0
      %v2317 = vadd.f32 %v2268, %v2316
      %2318 = vmatmul.bf16.gmra.mxu0 %v2008
      %v2319 = vpop.f32.mrf.mxu0
      %v2320 = vadd.f32 %v2271, %v2319
      %v2321 = vpop.f32.mrf.mxu0
      %v2322 = vadd.f32 %v2273, %v2321
      %2323 = vmatmul.bf16.gmra.mxu0 %v2009
      %v2324 = vpop.f32.mrf.mxu0
      %v2325 = vadd.f32 %v2276, %v2324
      %v2326 = vpop.f32.mrf.mxu0
      %v2327 = vadd.f32 %v2278, %v2326
      %2328 = vmatmul.bf16.gmra.mxu0 %v2010
      %v2329 = vpop.f32.mrf.mxu0
      %v2330 = vadd.f32 %v2281, %v2329
      %v2331 = vpop.f32.mrf.mxu0
      %v2332 = vadd.f32 %v2283, %v2331
      %2333 = vmatmul.bf16.gmra.mxu0 %v2011
      %v2334 = vpop.f32.mrf.mxu0
      %v2335 = vadd.f32 %v2286, %v2334
      %v2336 = vpop.f32.mrf.mxu0
      %v2337 = vadd.f32 %v2288, %v2336
      %2338 = vmatmul.bf16.gmra.mxu0 %v2012
      %v2339 = vpop.f32.mrf.mxu0
      %v2340 = vadd.f32 %v2291, %v2339
      %v2341 = vpop.f32.mrf.mxu0
      %v2342 = vadd.f32 %v2293, %v2341
      %2343 = vdwg.mxu0
      %2344 = vmatpush.bf16.msra.mxu0 %v2221
      %2345 = vmatpush.bf16.msra.mxu0 %v2220
      %2346 = vmatpush.bf16.msra.mxu0 %v2219
      %2347 = vmatpush.bf16.msra.mxu0 %v2218
      %2348 = vmatpush.bf16.msra.mxu0 %v2217
      %2349 = vmatpush.bf16.msra.mxu0 %v2216
      %2350 = vmatpush.bf16.msra.mxu0 %v2215
      %2351 = vmatpush.bf16.msra.mxu0 %v2214
      %2352 = vmatmul.bf16.gmra.mxu0 %v2037
      %v2353 = vpop.f32.mrf.mxu0
      %v2354 = vadd.f32 %v2305, %v2353
      %v2355 = vpop.f32.mrf.mxu0
      %v2356 = vadd.f32 %v2307, %v2355
      %2357 = vmatmul.bf16.gmra.mxu0 %v2038
      %v2358 = vpop.f32.mrf.mxu0
      %v2359 = vadd.f32 %v2310, %v2358
      %v2360 = vpop.f32.mrf.mxu0
      %v2361 = vadd.f32 %v2312, %v2360
      %2362 = vmatmul.bf16.gmra.mxu0 %v2039
      %v2363 = vpop.f32.mrf.mxu0
      %v2364 = vadd.f32 %v2315, %v2363
      %v2365 = vpop.f32.mrf.mxu0
      %v2366 = vadd.f32 %v2317, %v2365
      %2367 = vmatmul.bf16.gmra.mxu0 %v2040
      %v2368 = vpop.f32.mrf.mxu0
      %v2369 = vadd.f32 %v2320, %v2368
      %v2370 = vpop.f32.mrf.mxu0
      %v2371 = vadd.f32 %v2322, %v2370
      %2372 = vmatmul.bf16.gmra.mxu0 %v2041
      %v2373 = vpop.f32.mrf.mxu0
      %v2374 = vadd.f32 %v2325, %v2373
      %v2375 = vpop.f32.mrf.mxu0
      %v2376 = vadd.f32 %v2327, %v2375
      %2377 = vmatmul.bf16.gmra.mxu0 %v2042
      %v2378 = vpop.f32.mrf.mxu0
      %v2379 = vadd.f32 %v2330, %v2378
      %v2380 = vpop.f32.mrf.mxu0
      %v2381 = vadd.f32 %v2332, %v2380
      %2382 = vmatmul.bf16.gmra.mxu0 %v2043
      %v2383 = vpop.f32.mrf.mxu0
      %v2384 = vadd.f32 %v2335, %v2383
      %v2385 = vpop.f32.mrf.mxu0
      %v2386 = vadd.f32 %v2337, %v2385
      %2387 = vmatmul.bf16.gmra.mxu0 %v2044
      %v2388 = vpop.f32.mrf.mxu0
      %v2389 = vadd.f32 %v2340, %v2388
      %v2390 = vpop.f32.mrf.mxu0
      %v2391 = vadd.f32 %v2342, %v2390
      %2392 = vdwg.mxu0
      %v2441 = vunpack.c.l.b16 %v1573
      %v2442 = vunpack.c.l.b16 %v1574
      %v2443 = vunpack.c.l.b16 %v1575
      %v2444 = vunpack.c.l.b16 %v1576
      %v2445 = vunpack.c.l.b16 %v1577
      %v2446 = vunpack.c.l.b16 %v1578
      %v2447 = vunpack.c.l.b16 %v1579
      %v2448 = vunpack.c.l.b16 %v1580
      %v2449 = vunpack.c.l.b16 %v1581
      %v2450 = vunpack.c.l.b16 %v1582
      %v2451 = vunpack.c.l.b16 %v1583
      %v2452 = vunpack.c.l.b16 %v1584
      %v2453 = vunpack.c.l.b16 %v1585
      %v2454 = vunpack.c.l.b16 %v1586
      %v2455 = vunpack.c.l.b16 %v1587
      %v2456 = vunpack.c.l.b16 %v1588
      %v2457 = vunpack.c.l.b16 %v1589
      %v2458 = vunpack.c.l.b16 %v1590
      %v2459 = vunpack.c.l.b16 %v1591
      %v2460 = vunpack.c.l.b16 %v1592
      %v2461 = vunpack.c.l.b16 %v1593
      %v2462 = vunpack.c.l.b16 %v1594
      %v2463 = vunpack.c.l.b16 %v1595
      %v2464 = vunpack.c.l.b16 %v1596
      %v2465 = vunpack.c.l.b16 %v1597
      %v2466 = vunpack.c.l.b16 %v1598
      %v2467 = vunpack.c.l.b16 %v1599
      %v2468 = vunpack.c.l.b16 %v1600
      %v2469 = vunpack.c.l.b16 %v1601
      %v2470 = vunpack.c.l.b16 %v1602
      %v2471 = vunpack.c.l.b16 %v1603
      %v2472 = vunpack.c.l.b16 %v1604
      %v2473 = vunpack.c.l.b16 %v1605
      %v2474 = vunpack.c.l.b16 %v1606
      %v2475 = vunpack.c.l.b16 %v1607
      %v2476 = vunpack.c.l.b16 %v1608
      %v2477 = vunpack.c.l.b16 %v1609
      %v2478 = vunpack.c.l.b16 %v1610
      %v2479 = vunpack.c.l.b16 %v1611
      %v2480 = vunpack.c.l.b16 %v1612
      %v2481 = vunpack.c.l.b16 %v1613
      %v2482 = vunpack.c.l.b16 %v1614
      %v2483 = vunpack.c.l.b16 %v1615
      %v2484 = vunpack.c.l.b16 %v1616
      %v2485 = vunpack.c.l.b16 %v1617
      %v2486 = vunpack.c.l.b16 %v1618
      %v2487 = vunpack.c.l.b16 %v1619
      %v2488 = vunpack.c.l.b16 %v1620
      %v2489 = vpack.c.b16 %v2442, %v2441
      %v2490 = vpack.c.b16 %v2444, %v2443
      %v2491 = vpack.c.b16 %v2446, %v2445
      %v2492 = vpack.c.b16 %v2448, %v2447
      %v2493 = vpack.c.b16 %v2450, %v2449
      %v2494 = vpack.c.b16 %v2452, %v2451
      %v2495 = vpack.c.b16 %v2454, %v2453
      %v2496 = vpack.c.b16 %v2456, %v2455
      %v2497 = vpack.c.b16 %v2458, %v2457
      %v2498 = vpack.c.b16 %v2460, %v2459
      %v2499 = vpack.c.b16 %v2462, %v2461
      %v2500 = vpack.c.b16 %v2464, %v2463
      %v2501 = vpack.c.b16 %v2466, %v2465
      %v2502 = vpack.c.b16 %v2468, %v2467
      %v2503 = vpack.c.b16 %v2470, %v2469
      %v2504 = vpack.c.b16 %v2472, %v2471
      %v2505 = vpack.c.b16 %v2474, %v2473
      %v2506 = vpack.c.b16 %v2476, %v2475
      %v2507 = vpack.c.b16 %v2478, %v2477
      %v2508 = vpack.c.b16 %v2480, %v2479
      %v2509 = vpack.c.b16 %v2482, %v2481
      %v2510 = vpack.c.b16 %v2484, %v2483
      %v2511 = vpack.c.b16 %v2486, %v2485
      %v2512 = vpack.c.b16 %v2488, %v2487
      %2537 = vmatpush.bf16.msra.mxu0 %v2496
      %2538 = vmatpush.bf16.msra.mxu0 %v2495
      %2539 = vmatpush.bf16.msra.mxu0 %v2494
      %2540 = vmatpush.bf16.msra.mxu0 %v2493
      %2541 = vmatpush.bf16.msra.mxu0 %v2492
      %2542 = vmatpush.bf16.msra.mxu0 %v2491
      %2543 = vmatpush.bf16.msra.mxu0 %v2490
      %2544 = vmatpush.bf16.msra.mxu0 %v2489
      %2545 = vmatmul.bf16.gmra.mxu0 %v1477
      %v2546 = vpop.f32.mrf.mxu0
      %v2547 = vadd.f32 %v2354, %v2546
      %v2548 = vpop.f32.mrf.mxu0
      %v2549 = vadd.f32 %v2356, %v2548
      %2550 = vmatmul.bf16.gmra.mxu0 %v1478
      %v2551 = vpop.f32.mrf.mxu0
      %v2552 = vadd.f32 %v2359, %v2551
      %v2553 = vpop.f32.mrf.mxu0
      %v2554 = vadd.f32 %v2361, %v2553
      %2555 = vmatmul.bf16.gmra.mxu0 %v1479
      %v2556 = vpop.f32.mrf.mxu0
      %v2557 = vadd.f32 %v2364, %v2556
      %v2558 = vpop.f32.mrf.mxu0
      %v2559 = vadd.f32 %v2366, %v2558
      %2560 = vmatmul.bf16.gmra.mxu0 %v1480
      %v2561 = vpop.f32.mrf.mxu0
      %v2562 = vadd.f32 %v2369, %v2561
      %v2563 = vpop.f32.mrf.mxu0
      %v2564 = vadd.f32 %v2371, %v2563
      %2565 = vmatmul.bf16.gmra.mxu0 %v1481
      %v2566 = vpop.f32.mrf.mxu0
      %v2567 = vadd.f32 %v2374, %v2566
      %v2568 = vpop.f32.mrf.mxu0
      %v2569 = vadd.f32 %v2376, %v2568
      %2570 = vmatmul.bf16.gmra.mxu0 %v1482
      %v2571 = vpop.f32.mrf.mxu0
      %v2572 = vadd.f32 %v2379, %v2571
      %v2573 = vpop.f32.mrf.mxu0
      %v2574 = vadd.f32 %v2381, %v2573
      %2575 = vmatmul.bf16.gmra.mxu0 %v1483
      %v2576 = vpop.f32.mrf.mxu0
      %v2577 = vadd.f32 %v2384, %v2576
      %v2578 = vpop.f32.mrf.mxu0
      %v2579 = vadd.f32 %v2386, %v2578
      %2580 = vmatmul.bf16.gmra.mxu0 %v1484
      %v2581 = vpop.f32.mrf.mxu0
      %v2582 = vadd.f32 %v2389, %v2581
      %v2583 = vpop.f32.mrf.mxu0
      %v2584 = vadd.f32 %v2391, %v2583
      %2585 = vdwg.mxu0
      %2586 = vmatpush.bf16.msra.mxu0 %v2504
      %2587 = vmatpush.bf16.msra.mxu0 %v2503
      %2588 = vmatpush.bf16.msra.mxu0 %v2502
      %2589 = vmatpush.bf16.msra.mxu0 %v2501
      %2590 = vmatpush.bf16.msra.mxu0 %v2500
      %2591 = vmatpush.bf16.msra.mxu0 %v2499
      %2592 = vmatpush.bf16.msra.mxu0 %v2498
      %2593 = vmatpush.bf16.msra.mxu0 %v2497
      %2594 = vmatmul.bf16.gmra.mxu0 %v1525
      %v2595 = vpop.f32.mrf.mxu0
      %v2596 = vadd.f32 %v2547, %v2595
      %v2597 = vpop.f32.mrf.mxu0
      %v2598 = vadd.f32 %v2549, %v2597
      %2599 = vmatmul.bf16.gmra.mxu0 %v1526
      %v2600 = vpop.f32.mrf.mxu0
      %v2601 = vadd.f32 %v2552, %v2600
      %v2602 = vpop.f32.mrf.mxu0
      %v2603 = vadd.f32 %v2554, %v2602
      %2604 = vmatmul.bf16.gmra.mxu0 %v1527
      %v2605 = vpop.f32.mrf.mxu0
      %v2606 = vadd.f32 %v2557, %v2605
      %v2607 = vpop.f32.mrf.mxu0
      %v2608 = vadd.f32 %v2559, %v2607
      %2609 = vmatmul.bf16.gmra.mxu0 %v1528
      %v2610 = vpop.f32.mrf.mxu0
      %v2611 = vadd.f32 %v2562, %v2610
      %v2612 = vpop.f32.mrf.mxu0
      %v2613 = vadd.f32 %v2564, %v2612
      %2614 = vmatmul.bf16.gmra.mxu0 %v1529
      %v2615 = vpop.f32.mrf.mxu0
      %v2616 = vadd.f32 %v2567, %v2615
      %v2617 = vpop.f32.mrf.mxu0
      %v2618 = vadd.f32 %v2569, %v2617
      %2619 = vmatmul.bf16.gmra.mxu0 %v1530
      %v2620 = vpop.f32.mrf.mxu0
      %v2621 = vadd.f32 %v2572, %v2620
      %v2622 = vpop.f32.mrf.mxu0
      %v2623 = vadd.f32 %v2574, %v2622
      %2624 = vmatmul.bf16.gmra.mxu0 %v1531
      %v2625 = vpop.f32.mrf.mxu0
      %v2626 = vadd.f32 %v2577, %v2625
      %v2627 = vpop.f32.mrf.mxu0
      %v2628 = vadd.f32 %v2579, %v2627
      %2629 = vmatmul.bf16.gmra.mxu0 %v1532
      %v2630 = vpop.f32.mrf.mxu0
      %v2631 = vadd.f32 %v2582, %v2630
      %v2632 = vpop.f32.mrf.mxu0
      %v2633 = vadd.f32 %v2584, %v2632
      %2634 = vdwg.mxu0
      %2635 = vmatpush.bf16.msra.mxu0 %v2512
      %2636 = vmatpush.bf16.msra.mxu0 %v2511
      %2637 = vmatpush.bf16.msra.mxu0 %v2510
      %2638 = vmatpush.bf16.msra.mxu0 %v2509
      %2639 = vmatpush.bf16.msra.mxu0 %v2508
      %2640 = vmatpush.bf16.msra.mxu0 %v2507
      %2641 = vmatpush.bf16.msra.mxu0 %v2506
      %2642 = vmatpush.bf16.msra.mxu0 %v2505
      %2643 = vmatmul.bf16.gmra.mxu0 %v1557
      %v2644 = vpop.f32.mrf.mxu0
      %v2645 = vadd.f32 %v2596, %v2644
      %v2646 = vpop.f32.mrf.mxu0
      %v2647 = vadd.f32 %v2598, %v2646
      %2648 = vmatmul.bf16.gmra.mxu0 %v1558
      %v2649 = vpop.f32.mrf.mxu0
      %v2650 = vadd.f32 %v2601, %v2649
      %v2651 = vpop.f32.mrf.mxu0
      %v2652 = vadd.f32 %v2603, %v2651
      %2653 = vmatmul.bf16.gmra.mxu0 %v1559
      %v2654 = vpop.f32.mrf.mxu0
      %v2655 = vadd.f32 %v2606, %v2654
      %v2656 = vpop.f32.mrf.mxu0
      %v2657 = vadd.f32 %v2608, %v2656
      %2658 = vmatmul.bf16.gmra.mxu0 %v1560
      %v2659 = vpop.f32.mrf.mxu0
      %v2660 = vadd.f32 %v2611, %v2659
      %v2661 = vpop.f32.mrf.mxu0
      %v2662 = vadd.f32 %v2613, %v2661
      %2663 = vmatmul.bf16.gmra.mxu0 %v1561
      %v2664 = vpop.f32.mrf.mxu0
      %v2665 = vadd.f32 %v2616, %v2664
      %v2666 = vpop.f32.mrf.mxu0
      %v2667 = vadd.f32 %v2618, %v2666
      %2668 = vmatmul.bf16.gmra.mxu0 %v1562
      %v2669 = vpop.f32.mrf.mxu0
      %v2670 = vadd.f32 %v2621, %v2669
      %v2671 = vpop.f32.mrf.mxu0
      %v2672 = vadd.f32 %v2623, %v2671
      %2673 = vmatmul.bf16.gmra.mxu0 %v1563
      %v2674 = vpop.f32.mrf.mxu0
      %v2675 = vadd.f32 %v2626, %v2674
      %v2676 = vpop.f32.mrf.mxu0
      %v2677 = vadd.f32 %v2628, %v2676
      %2678 = vmatmul.bf16.gmra.mxu0 %v1564
      %v2679 = vpop.f32.mrf.mxu0
      %v2680 = vadd.f32 %v2631, %v2679
      %v2681 = vpop.f32.mrf.mxu0
      %v2682 = vadd.f32 %v2633, %v2681
      %2683 = vdwg.mxu0
      %s2684 = scalar_lea.vmem [#allocation2], 40
      %v2685 = vld [vmem:[%s2684 + $0x4] sm:$0x8]
      %v2686 = vld [vmem:[%s2684 + $0x8] sm:$0xf]
      %v2687 = vld [vmem:[%s2684 + $0xc] sm:$0xf]
      %v2688 = vld [vmem:[%s2684 + $0x18] sm:$0x8]
      %v2689 = vld [vmem:[%s2684 + $0x1c] sm:$0xf]
      %v2690 = vld [vmem:[%s2684 + $0x20] sm:$0xf]
      %v2691 = vld [vmem:[%s2684 + $0x2c] sm:$0x8]
      %v2692 = vld [vmem:[%s2684 + $0x30] sm:$0xf]
      %v2693 = vld [vmem:[%s2684 + $0x34] sm:$0xf]
      %v2694 = vld [vmem:[%s2684 + $0x40] sm:$0x8]
      %v2695 = vld [vmem:[%s2684 + $0x44] sm:$0xf]
      %v2696 = vld [vmem:[%s2684 + $0x48] sm:$0xf]
      %v2697 = vld [vmem:[%s2684 + $0x54] sm:$0x8]
      %v2698 = vld [vmem:[%s2684 + $0x58] sm:$0xf]
      %v2699 = vld [vmem:[%s2684 + $0x5c] sm:$0xf]
      %v2700 = vld [vmem:[%s2684 + $0x68] sm:$0x8]
      %v2701 = vld [vmem:[%s2684 + $0x6c] sm:$0xf]
      %v2702 = vld [vmem:[%s2684 + $0x70] sm:$0xf]
      %v2703 = vld [vmem:[%s2684 + $0x7c] sm:$0x8]
      %v2704 = vld [vmem:[%s2684 + $0x80] sm:$0xf]
      %v2705 = vld [vmem:[%s2684 + $0x84] sm:$0xf]
      %v2706 = vld [vmem:[%s2684 + $0x90] sm:$0x8]
      %v2707 = vld [vmem:[%s2684 + $0x94] sm:$0xf]
      %v2708 = vld [vmem:[%s2684 + $0x98] sm:$0xf]
      %v2710 = vshrl.u32 %v2685, 16
      %v2712 = vrot.slane %v2710, 7
      %v2713 = vrot.slane %v2712, 4
      %v2715 = vshrl.u32 %v2686, 16
      %v2717 = vrot.slane %v2715, 7
      %v2718 = vshll.u32 %v2686, 16
      %v2720 = vor.u32 %v2717, %v2718
      %v2721 = vsel %vm1161, %v2713, %v2720
      %v2722 = vrot.slane %v2717, 4
      %v2724 = vshrl.u32 %v2687, 16
      %v2726 = vrot.slane %v2724, 7
      %v2727 = vshll.u32 %v2687, 16
      %v2729 = vor.u32 %v2726, %v2727
      %v2730 = vsel %vm1161, %v2722, %v2729
      %v2732 = vshrl.u32 %v2688, 16
      %v2734 = vrot.slane %v2732, 7
      %v2735 = vrot.slane %v2734, 4
      %v2737 = vshrl.u32 %v2689, 16
      %v2739 = vrot.slane %v2737, 7
      %v2740 = vshll.u32 %v2689, 16
      %v2742 = vor.u32 %v2739, %v2740
      %v2743 = vsel %vm1161, %v2735, %v2742
      %v2744 = vrot.slane %v2739, 4
      %v2746 = vshrl.u32 %v2690, 16
      %v2748 = vrot.slane %v2746, 7
      %v2749 = vshll.u32 %v2690, 16
      %v2751 = vor.u32 %v2748, %v2749
      %v2752 = vsel %vm1161, %v2744, %v2751
      %v2754 = vshrl.u32 %v2691, 16
      %v2756 = vrot.slane %v2754, 7
      %v2757 = vrot.slane %v2756, 4
      %v2759 = vshrl.u32 %v2692, 16
      %v2761 = vrot.slane %v2759, 7
      %v2762 = vshll.u32 %v2692, 16
      %v2764 = vor.u32 %v2761, %v2762
      %v2765 = vsel %vm1161, %v2757, %v2764
      %v2766 = vrot.slane %v2761, 4
      %v2768 = vshrl.u32 %v2693, 16
      %v2770 = vrot.slane %v2768, 7
      %v2771 = vshll.u32 %v2693, 16
      %v2773 = vor.u32 %v2770, %v2771
      %v2774 = vsel %vm1161, %v2766, %v2773
      %v2776 = vshrl.u32 %v2694, 16
      %v2778 = vrot.slane %v2776, 7
      %v2779 = vrot.slane %v2778, 4
      %v2781 = vshrl.u32 %v2695, 16
      %v2783 = vrot.slane %v2781, 7
      %v2784 = vshll.u32 %v2695, 16
      %v2786 = vor.u32 %v2783, %v2784
      %v2787 = vsel %vm1161, %v2779, %v2786
      %v2788 = vrot.slane %v2783, 4
      %v2790 = vshrl.u32 %v2696, 16
      %v2792 = vrot.slane %v2790, 7
      %v2793 = vshll.u32 %v2696, 16
      %v2795 = vor.u32 %v2792, %v2793
      %v2796 = vsel %vm1161, %v2788, %v2795
      %v2798 = vshrl.u32 %v2697, 16
      %v2800 = vrot.slane %v2798, 7
      %v2801 = vrot.slane %v2800, 4
      %v2803 = vshrl.u32 %v2698, 16
      %v2805 = vrot.slane %v2803, 7
      %v2806 = vshll.u32 %v2698, 16
      %v2808 = vor.u32 %v2805, %v2806
      %v2809 = vsel %vm1161, %v2801, %v2808
      %v2810 = vrot.slane %v2805, 4
      %v2812 = vshrl.u32 %v2699, 16
      %v2814 = vrot.slane %v2812, 7
      %v2815 = vshll.u32 %v2699, 16
      %v2817 = vor.u32 %v2814, %v2815
      %v2818 = vsel %vm1161, %v2810, %v2817
      %v2820 = vshrl.u32 %v2700, 16
      %v2822 = vrot.slane %v2820, 7
      %v2823 = vrot.slane %v2822, 4
      %v2825 = vshrl.u32 %v2701, 16
      %v2827 = vrot.slane %v2825, 7
      %v2828 = vshll.u32 %v2701, 16
      %v2830 = vor.u32 %v2827, %v2828
      %v2831 = vsel %vm1161, %v2823, %v2830
      %v2832 = vrot.slane %v2827, 4
      %v2834 = vshrl.u32 %v2702, 16
      %v2836 = vrot.slane %v2834, 7
      %v2837 = vshll.u32 %v2702, 16
      %v2839 = vor.u32 %v2836, %v2837
      %v2840 = vsel %vm1161, %v2832, %v2839
      %v2842 = vshrl.u32 %v2703, 16
      %v2844 = vrot.slane %v2842, 7
      %v2845 = vrot.slane %v2844, 4
      %v2847 = vshrl.u32 %v2704, 16
      %v2849 = vrot.slane %v2847, 7
      %v2850 = vshll.u32 %v2704, 16
      %v2852 = vor.u32 %v2849, %v2850
      %v2853 = vsel %vm1161, %v2845, %v2852
      %v2854 = vrot.slane %v2849, 4
      %v2856 = vshrl.u32 %v2705, 16
      %v2858 = vrot.slane %v2856, 7
      %v2859 = vshll.u32 %v2705, 16
      %v2861 = vor.u32 %v2858, %v2859
      %v2862 = vsel %vm1161, %v2854, %v2861
      %v2864 = vshrl.u32 %v2706, 16
      %v2866 = vrot.slane %v2864, 7
      %v2867 = vrot.slane %v2866, 4
      %v2869 = vshrl.u32 %v2707, 16
      %v2871 = vrot.slane %v2869, 7
      %v2872 = vshll.u32 %v2707, 16
      %v2874 = vor.u32 %v2871, %v2872
      %v2875 = vsel %vm1161, %v2867, %v2874
      %v2876 = vrot.slane %v2871, 4
      %v2878 = vshrl.u32 %v2708, 16
      %v2880 = vrot.slane %v2878, 7
      %v2881 = vshll.u32 %v2708, 16
      %v2883 = vor.u32 %v2880, %v2881
      %v2884 = vsel %vm1161, %v2876, %v2883
      %v2885 = vld [vmem:[%s2684 + $0x10] sm:$0x1]
      %v2886 = vld [vmem:[%s2684 + $0x24] sm:$0x1]
      %v2887 = vld [vmem:[%s2684 + $0x38] sm:$0x1]
      %v2888 = vld [vmem:[%s2684 + $0x4c] sm:$0x1]
      %v2889 = vld [vmem:[%s2684 + $0x60] sm:$0x1]
      %v2890 = vld [vmem:[%s2684 + $0x74] sm:$0x1]
      %v2891 = vld [vmem:[%s2684 + $0x88] sm:$0x1]
      %v2892 = vld [vmem:[%s2684 + $0x9c] sm:$0x1]
      %v2893 = vrot.slane %v2715, 4
      %v2894 = vrot.slane %v2718, 5
      %v2895 = vor.u32 %v2893, %v2894
      %v2896 = vrot.slane %v2895, 4
      %v2897 = vrot.slane %v2727, 5
      %v2898 = vsel %vm1348, %v2896, %v2897
      %v2899 = vrot.slane %v2724, 4
      %v2900 = vor.u32 %v2899, %v2897
      %v2901 = vrot.slane %v2900, 4
      %v2903 = vshll.u32 %v2885, 16
      %v2905 = vrot.slane %v2903, 5
      %v2906 = vsel %vm1348, %v2901, %v2905
      %v2907 = vrot.slane %v2737, 4
      %v2908 = vrot.slane %v2740, 5
      %v2909 = vor.u32 %v2907, %v2908
      %v2910 = vrot.slane %v2909, 4
      %v2911 = vrot.slane %v2749, 5
      %v2912 = vsel %vm1348, %v2910, %v2911
      %v2913 = vrot.slane %v2746, 4
      %v2914 = vor.u32 %v2913, %v2911
      %v2915 = vrot.slane %v2914, 4
      %v2917 = vshll.u32 %v2886, 16
      %v2919 = vrot.slane %v2917, 5
      %v2920 = vsel %vm1348, %v2915, %v2919
      %v2921 = vrot.slane %v2759, 4
      %v2922 = vrot.slane %v2762, 5
      %v2923 = vor.u32 %v2921, %v2922
      %v2924 = vrot.slane %v2923, 4
      %v2925 = vrot.slane %v2771, 5
      %v2926 = vsel %vm1348, %v2924, %v2925
      %v2927 = vrot.slane %v2768, 4
      %v2928 = vor.u32 %v2927, %v2925
      %v2929 = vrot.slane %v2928, 4
      %v2931 = vshll.u32 %v2887, 16
      %v2933 = vrot.slane %v2931, 5
      %v2934 = vsel %vm1348, %v2929, %v2933
      %v2935 = vrot.slane %v2781, 4
      %v2936 = vrot.slane %v2784, 5
      %v2937 = vor.u32 %v2935, %v2936
      %v2938 = vrot.slane %v2937, 4
      %v2939 = vrot.slane %v2793, 5
      %v2940 = vsel %vm1348, %v2938, %v2939
      %v2941 = vrot.slane %v2790, 4
      %v2942 = vor.u32 %v2941, %v2939
      %v2943 = vrot.slane %v2942, 4
      %v2945 = vshll.u32 %v2888, 16
      %v2947 = vrot.slane %v2945, 5
      %v2948 = vsel %vm1348, %v2943, %v2947
      %v2949 = vrot.slane %v2803, 4
      %v2950 = vrot.slane %v2806, 5
      %v2951 = vor.u32 %v2949, %v2950
      %v2952 = vrot.slane %v2951, 4
      %v2953 = vrot.slane %v2815, 5
      %v2954 = vsel %vm1348, %v2952, %v2953
      %v2955 = vrot.slane %v2812, 4
      %v2956 = vor.u32 %v2955, %v2953
      %v2957 = vrot.slane %v2956, 4
      %v2959 = vshll.u32 %v2889, 16
      %v2961 = vrot.slane %v2959, 5
      %v2962 = vsel %vm1348, %v2957, %v2961
      %v2963 = vrot.slane %v2825, 4
      %v2964 = vrot.slane %v2828, 5
      %v2965 = vor.u32 %v2963, %v2964
      %v2966 = vrot.slane %v2965, 4
      %v2967 = vrot.slane %v2837, 5
      %v2968 = vsel %vm1348, %v2966, %v2967
      %v2969 = vrot.slane %v2834, 4
      %v2970 = vor.u32 %v2969, %v2967
      %v2971 = vrot.slane %v2970, 4
      %v2973 = vshll.u32 %v2890, 16
      %v2975 = vrot.slane %v2973, 5
      %v2976 = vsel %vm1348, %v2971, %v2975
      %v2977 = vrot.slane %v2847, 4
      %v2978 = vrot.slane %v2850, 5
      %v2979 = vor.u32 %v2977, %v2978
      %v2980 = vrot.slane %v2979, 4
      %v2981 = vrot.slane %v2859, 5
      %v2982 = vsel %vm1348, %v2980, %v2981
      %v2983 = vrot.slane %v2856, 4
      %v2984 = vor.u32 %v2983, %v2981
      %v2985 = vrot.slane %v2984, 4
      %v2987 = vshll.u32 %v2891, 16
      %v2989 = vrot.slane %v2987, 5
      %v2990 = vsel %vm1348, %v2985, %v2989
      %v2991 = vrot.slane %v2869, 4
      %v2992 = vrot.slane %v2872, 5
      %v2993 = vor.u32 %v2991, %v2992
      %v2994 = vrot.slane %v2993, 4
      %v2995 = vrot.slane %v2881, 5
      %v2996 = vsel %vm1348, %v2994, %v2995
      %v2997 = vrot.slane %v2878, 4
      %v2998 = vor.u32 %v2997, %v2995
      %v2999 = vrot.slane %v2998, 4
      %v3001 = vshll.u32 %v2892, 16
      %v3003 = vrot.slane %v3001, 5
      %v3004 = vsel %vm1348, %v2999, %v3003
      %v3005 = vunpack.c.l.b16 %v2721
      %v3006 = vunpack.c.l.b16 %v2730
      %v3007 = vunpack.c.l.b16 %v2743
      %v3008 = vunpack.c.l.b16 %v2752
      %v3009 = vunpack.c.l.b16 %v2765
      %v3010 = vunpack.c.l.b16 %v2774
      %v3011 = vunpack.c.l.b16 %v2787
      %v3012 = vunpack.c.l.b16 %v2796
      %v3013 = vunpack.c.l.b16 %v2809
      %v3014 = vunpack.c.l.b16 %v2818
      %v3015 = vunpack.c.l.b16 %v2831
      %v3016 = vunpack.c.l.b16 %v2840
      %v3017 = vunpack.c.l.b16 %v2853
      %v3018 = vunpack.c.l.b16 %v2862
      %v3019 = vunpack.c.l.b16 %v2875
      %v3020 = vunpack.c.l.b16 %v2884
      %v3021 = vpack.c.b16 %v3006, %v3005
      %v3022 = vpack.c.b16 %v3008, %v3007
      %v3023 = vpack.c.b16 %v3010, %v3009
      %v3024 = vpack.c.b16 %v3012, %v3011
      %v3025 = vpack.c.b16 %v3014, %v3013
      %v3026 = vpack.c.b16 %v3016, %v3015
      %v3027 = vpack.c.b16 %v3018, %v3017
      %v3028 = vpack.c.b16 %v3020, %v3019
      %v3053 = vunpack.c.l.b16 %v2686
      %v3054 = vunpack.c.l.b16 %v2687
      %v3055 = vunpack.c.l.b16 %v2689
      %v3056 = vunpack.c.l.b16 %v2690
      %v3057 = vunpack.c.l.b16 %v2692
      %v3058 = vunpack.c.l.b16 %v2693
      %v3059 = vunpack.c.l.b16 %v2695
      %v3060 = vunpack.c.l.b16 %v2696
      %v3061 = vunpack.c.l.b16 %v2698
      %v3062 = vunpack.c.l.b16 %v2699
      %v3063 = vunpack.c.l.b16 %v2701
      %v3064 = vunpack.c.l.b16 %v2702
      %v3065 = vunpack.c.l.b16 %v2704
      %v3066 = vunpack.c.l.b16 %v2705
      %v3067 = vunpack.c.l.b16 %v2707
      %v3068 = vunpack.c.l.b16 %v2708
      %v3069 = vpack.c.b16 %v3054, %v3053
      %v3070 = vpack.c.b16 %v3056, %v3055
      %v3071 = vpack.c.b16 %v3058, %v3057
      %v3072 = vpack.c.b16 %v3060, %v3059
      %v3073 = vpack.c.b16 %v3062, %v3061
      %v3074 = vpack.c.b16 %v3064, %v3063
      %v3075 = vpack.c.b16 %v3066, %v3065
      %v3076 = vpack.c.b16 %v3068, %v3067
      %v3085 = vunpack.c.l.b16 %v2898
      %v3086 = vunpack.c.l.b16 %v2906
      %v3087 = vunpack.c.l.b16 %v2912
      %v3088 = vunpack.c.l.b16 %v2920
      %v3089 = vunpack.c.l.b16 %v2926
      %v3090 = vunpack.c.l.b16 %v2934
      %v3091 = vunpack.c.l.b16 %v2940
      %v3092 = vunpack.c.l.b16 %v2948
      %v3093 = vunpack.c.l.b16 %v2954
      %v3094 = vunpack.c.l.b16 %v2962
      %v3095 = vunpack.c.l.b16 %v2968
      %v3096 = vunpack.c.l.b16 %v2976
      %v3097 = vunpack.c.l.b16 %v2982
      %v3098 = vunpack.c.l.b16 %v2990
      %v3099 = vunpack.c.l.b16 %v2996
      %v3100 = vunpack.c.l.b16 %v3004
      %v3101 = vpack.c.b16 %v3086, %v3085
      %v3102 = vpack.c.b16 %v3088, %v3087
      %v3103 = vpack.c.b16 %v3090, %v3089
      %v3104 = vpack.c.b16 %v3092, %v3091
      %v3105 = vpack.c.b16 %v3094, %v3093
      %v3106 = vpack.c.b16 %v3096, %v3095
      %v3107 = vpack.c.b16 %v3098, %v3097
      %v3108 = vpack.c.b16 %v3100, %v3099
      %s3117 = scalar_lea.vmem %s6, 384
      %v3118 = vld [vmem:[%s3117] sm:$0xf]
      %v3119 = vld [vmem:[%s3117 + $0x4] sm:$0xf]
      %v3120 = vld [vmem:[%s3117 + $0x8] sm:$0xf]
      %v3121 = vld [vmem:[%s3117 + $0xc] sm:$0xf]
      %v3122 = vld [vmem:[%s3117 + $0x10] sm:$0xf]
      %v3123 = vld [vmem:[%s3117 + $0x14] sm:$0xf]
      %v3124 = vld [vmem:[%s3117 + $0x18] sm:$0xf]
      %v3125 = vld [vmem:[%s3117 + $0x1c] sm:$0xf]
      %v3126 = vld [vmem:[%s3117 + $0x20] sm:$0xf]
      %v3127 = vld [vmem:[%s3117 + $0x24] sm:$0xf]
      %v3128 = vld [vmem:[%s3117 + $0x28] sm:$0xf]
      %v3129 = vld [vmem:[%s3117 + $0x2c] sm:$0xf]
      %v3130 = vld [vmem:[%s3117 + $0x30] sm:$0xf]
      %v3131 = vld [vmem:[%s3117 + $0x34] sm:$0xf]
      %v3132 = vld [vmem:[%s3117 + $0x38] sm:$0xf]
      %v3133 = vld [vmem:[%s3117 + $0x3c] sm:$0xf]
      %v3134 = vld [vmem:[%s3117 + $0x40] sm:$0xf]
      %v3135 = vld [vmem:[%s3117 + $0x44] sm:$0xf]
      %v3136 = vld [vmem:[%s3117 + $0x48] sm:$0xf]
      %v3137 = vld [vmem:[%s3117 + $0x4c] sm:$0xf]
      %v3138 = vld [vmem:[%s3117 + $0x50] sm:$0xf]
      %v3139 = vld [vmem:[%s3117 + $0x54] sm:$0xf]
      %v3140 = vld [vmem:[%s3117 + $0x58] sm:$0xf]
      %v3141 = vld [vmem:[%s3117 + $0x5c] sm:$0xf]
      %v3142 = vld [vmem:[%s3117 + $0x60] sm:$0xf]
      %v3143 = vld [vmem:[%s3117 + $0x64] sm:$0xf]
      %v3144 = vld [vmem:[%s3117 + $0x68] sm:$0xf]
      %v3145 = vld [vmem:[%s3117 + $0x6c] sm:$0xf]
      %v3146 = vld [vmem:[%s3117 + $0x70] sm:$0xf]
      %v3147 = vld [vmem:[%s3117 + $0x74] sm:$0xf]
      %v3148 = vld [vmem:[%s3117 + $0x78] sm:$0xf]
      %v3149 = vld [vmem:[%s3117 + $0x7c] sm:$0xf]
      %v3150 = vld [vmem:[%s3117 + $0x80] sm:$0xf]
      %v3151 = vld [vmem:[%s3117 + $0x84] sm:$0xf]
      %v3152 = vld [vmem:[%s3117 + $0x88] sm:$0xf]
      %v3153 = vld [vmem:[%s3117 + $0x8c] sm:$0xf]
      %v3154 = vld [vmem:[%s3117 + $0x90] sm:$0xf]
      %v3155 = vld [vmem:[%s3117 + $0x94] sm:$0xf]
      %v3156 = vld [vmem:[%s3117 + $0x98] sm:$0xf]
      %v3157 = vld [vmem:[%s3117 + $0x9c] sm:$0xf]
      %v3158 = vld [vmem:[%s3117 + $0xa0] sm:$0xf]
      %v3159 = vld [vmem:[%s3117 + $0xa4] sm:$0xf]
      %v3160 = vld [vmem:[%s3117 + $0xa8] sm:$0xf]
      %v3161 = vld [vmem:[%s3117 + $0xac] sm:$0xf]
      %v3162 = vld [vmem:[%s3117 + $0xb0] sm:$0xf]
      %v3163 = vld [vmem:[%s3117 + $0xb4] sm:$0xf]
      %v3164 = vld [vmem:[%s3117 + $0xb8] sm:$0xf]
      %v3165 = vld [vmem:[%s3117 + $0xbc] sm:$0xf]
      %v3214 = vunpack.c.l.b16 %v3118
      %v3215 = vunpack.c.l.b16 %v3119
      %v3216 = vunpack.c.l.b16 %v3120
      %v3217 = vunpack.c.l.b16 %v3121
      %v3218 = vunpack.c.l.b16 %v3122
      %v3219 = vunpack.c.l.b16 %v3123
      %v3220 = vunpack.c.l.b16 %v3124
      %v3221 = vunpack.c.l.b16 %v3125
      %v3222 = vunpack.c.l.b16 %v3126
      %v3223 = vunpack.c.l.b16 %v3127
      %v3224 = vunpack.c.l.b16 %v3128
      %v3225 = vunpack.c.l.b16 %v3129
      %v3226 = vunpack.c.l.b16 %v3130
      %v3227 = vunpack.c.l.b16 %v3131
      %v3228 = vunpack.c.l.b16 %v3132
      %v3229 = vunpack.c.l.b16 %v3133
      %v3230 = vunpack.c.l.b16 %v3134
      %v3231 = vunpack.c.l.b16 %v3135
      %v3232 = vunpack.c.l.b16 %v3136
      %v3233 = vunpack.c.l.b16 %v3137
      %v3234 = vunpack.c.l.b16 %v3138
      %v3235 = vunpack.c.l.b16 %v3139
      %v3236 = vunpack.c.l.b16 %v3140
      %v3237 = vunpack.c.l.b16 %v3141
      %v3238 = vunpack.c.l.b16 %v3142
      %v3239 = vunpack.c.l.b16 %v3143
      %v3240 = vunpack.c.l.b16 %v3144
      %v3241 = vunpack.c.l.b16 %v3145
      %v3242 = vunpack.c.l.b16 %v3146
      %v3243 = vunpack.c.l.b16 %v3147
      %v3244 = vunpack.c.l.b16 %v3148
      %v3245 = vunpack.c.l.b16 %v3149
      %v3246 = vunpack.c.l.b16 %v3150
      %v3247 = vunpack.c.l.b16 %v3151
      %v3248 = vunpack.c.l.b16 %v3152
      %v3249 = vunpack.c.l.b16 %v3153
      %v3250 = vunpack.c.l.b16 %v3154
      %v3251 = vunpack.c.l.b16 %v3155
      %v3252 = vunpack.c.l.b16 %v3156
      %v3253 = vunpack.c.l.b16 %v3157
      %v3254 = vunpack.c.l.b16 %v3158
      %v3255 = vunpack.c.l.b16 %v3159
      %v3256 = vunpack.c.l.b16 %v3160
      %v3257 = vunpack.c.l.b16 %v3161
      %v3258 = vunpack.c.l.b16 %v3162
      %v3259 = vunpack.c.l.b16 %v3163
      %v3260 = vunpack.c.l.b16 %v3164
      %v3261 = vunpack.c.l.b16 %v3165
      %v3262 = vpack.c.b16 %v3215, %v3214
      %v3263 = vpack.c.b16 %v3217, %v3216
      %v3264 = vpack.c.b16 %v3219, %v3218
      %v3265 = vpack.c.b16 %v3221, %v3220
      %v3266 = vpack.c.b16 %v3223, %v3222
      %v3267 = vpack.c.b16 %v3225, %v3224
      %v3268 = vpack.c.b16 %v3227, %v3226
      %v3269 = vpack.c.b16 %v3229, %v3228
      %v3270 = vpack.c.b16 %v3231, %v3230
      %v3271 = vpack.c.b16 %v3233, %v3232
      %v3272 = vpack.c.b16 %v3235, %v3234
      %v3273 = vpack.c.b16 %v3237, %v3236
      %v3274 = vpack.c.b16 %v3239, %v3238
      %v3275 = vpack.c.b16 %v3241, %v3240
      %v3276 = vpack.c.b16 %v3243, %v3242
      %v3277 = vpack.c.b16 %v3245, %v3244
      %v3278 = vpack.c.b16 %v3247, %v3246
      %v3279 = vpack.c.b16 %v3249, %v3248
      %v3280 = vpack.c.b16 %v3251, %v3250
      %v3281 = vpack.c.b16 %v3253, %v3252
      %v3282 = vpack.c.b16 %v3255, %v3254
      %v3283 = vpack.c.b16 %v3257, %v3256
      %v3284 = vpack.c.b16 %v3259, %v3258
      %v3285 = vpack.c.b16 %v3261, %v3260
      %3310 = vmatpush.bf16.msra.mxu0 %v3269
      %3311 = vmatpush.bf16.msra.mxu0 %v3268
      %3312 = vmatpush.bf16.msra.mxu0 %v3267
      %3313 = vmatpush.bf16.msra.mxu0 %v3266
      %3314 = vmatpush.bf16.msra.mxu0 %v3265
      %3315 = vmatpush.bf16.msra.mxu0 %v3264
      %3316 = vmatpush.bf16.msra.mxu0 %v3263
      %3317 = vmatpush.bf16.msra.mxu0 %v3262
      %3318 = vmatmul.bf16.gmra.mxu0 %v3021
      %v3319 = vpop.f32.mrf.mxu0
      %v3320 = vadd.f32 0.0, %v3319
      %v3321 = vpop.f32.mrf.mxu0
      %v3322 = vadd.f32 0.0, %v3321
      %3323 = vmatmul.bf16.gmra.mxu0 %v3022
      %v3324 = vpop.f32.mrf.mxu0
      %v3325 = vadd.f32 0.0, %v3324
      %v3326 = vpop.f32.mrf.mxu0
      %v3327 = vadd.f32 0.0, %v3326
      %3328 = vmatmul.bf16.gmra.mxu0 %v3023
      %v3329 = vpop.f32.mrf.mxu0
      %v3330 = vadd.f32 0.0, %v3329
      %v3331 = vpop.f32.mrf.mxu0
      %v3332 = vadd.f32 0.0, %v3331
      %3333 = vmatmul.bf16.gmra.mxu0 %v3024
      %v3334 = vpop.f32.mrf.mxu0
      %v3335 = vadd.f32 0.0, %v3334
      %v3336 = vpop.f32.mrf.mxu0
      %v3337 = vadd.f32 0.0, %v3336
      %3338 = vmatmul.bf16.gmra.mxu0 %v3025
      %v3339 = vpop.f32.mrf.mxu0
      %v3340 = vadd.f32 0.0, %v3339
      %v3341 = vpop.f32.mrf.mxu0
      %v3342 = vadd.f32 0.0, %v3341
      %3343 = vmatmul.bf16.gmra.mxu0 %v3026
      %v3344 = vpop.f32.mrf.mxu0
      %v3345 = vadd.f32 0.0, %v3344
      %v3346 = vpop.f32.mrf.mxu0
      %v3347 = vadd.f32 0.0, %v3346
      %3348 = vmatmul.bf16.gmra.mxu0 %v3027
      %v3349 = vpop.f32.mrf.mxu0
      %v3350 = vadd.f32 0.0, %v3349
      %v3351 = vpop.f32.mrf.mxu0
      %v3352 = vadd.f32 0.0, %v3351
      %3353 = vmatmul.bf16.gmra.mxu0 %v3028
      %v3354 = vpop.f32.mrf.mxu0
      %v3355 = vadd.f32 0.0, %v3354
      %v3356 = vpop.f32.mrf.mxu0
      %v3357 = vadd.f32 0.0, %v3356
      %3358 = vdwg.mxu0
      %3359 = vmatpush.bf16.msra.mxu0 %v3277
      %3360 = vmatpush.bf16.msra.mxu0 %v3276
      %3361 = vmatpush.bf16.msra.mxu0 %v3275
      %3362 = vmatpush.bf16.msra.mxu0 %v3274
      %3363 = vmatpush.bf16.msra.mxu0 %v3273
      %3364 = vmatpush.bf16.msra.mxu0 %v3272
      %3365 = vmatpush.bf16.msra.mxu0 %v3271
      %3366 = vmatpush.bf16.msra.mxu0 %v3270
      %3367 = vmatmul.bf16.gmra.mxu0 %v3069
      %v3368 = vpop.f32.mrf.mxu0
      %v3369 = vadd.f32 %v3320, %v3368
      %v3370 = vpop.f32.mrf.mxu0
      %v3371 = vadd.f32 %v3322, %v3370
      %3372 = vmatmul.bf16.gmra.mxu0 %v3070
      %v3373 = vpop.f32.mrf.mxu0
      %v3374 = vadd.f32 %v3325, %v3373
      %v3375 = vpop.f32.mrf.mxu0
      %v3376 = vadd.f32 %v3327, %v3375
      %3377 = vmatmul.bf16.gmra.mxu0 %v3071
      %v3378 = vpop.f32.mrf.mxu0
      %v3379 = vadd.f32 %v3330, %v3378
      %v3380 = vpop.f32.mrf.mxu0
      %v3381 = vadd.f32 %v3332, %v3380
      %3382 = vmatmul.bf16.gmra.mxu0 %v3072
      %v3383 = vpop.f32.mrf.mxu0
      %v3384 = vadd.f32 %v3335, %v3383
      %v3385 = vpop.f32.mrf.mxu0
      %v3386 = vadd.f32 %v3337, %v3385
      %3387 = vmatmul.bf16.gmra.mxu0 %v3073
      %v3388 = vpop.f32.mrf.mxu0
      %v3389 = vadd.f32 %v3340, %v3388
      %v3390 = vpop.f32.mrf.mxu0
      %v3391 = vadd.f32 %v3342, %v3390
      %3392 = vmatmul.bf16.gmra.mxu0 %v3074
      %v3393 = vpop.f32.mrf.mxu0
      %v3394 = vadd.f32 %v3345, %v3393
      %v3395 = vpop.f32.mrf.mxu0
      %v3396 = vadd.f32 %v3347, %v3395
      %3397 = vmatmul.bf16.gmra.mxu0 %v3075
      %v3398 = vpop.f32.mrf.mxu0
      %v3399 = vadd.f32 %v3350, %v3398
      %v3400 = vpop.f32.mrf.mxu0
      %v3401 = vadd.f32 %v3352, %v3400
      %3402 = vmatmul.bf16.gmra.mxu0 %v3076
      %v3403 = vpop.f32.mrf.mxu0
      %v3404 = vadd.f32 %v3355, %v3403
      %v3405 = vpop.f32.mrf.mxu0
      %v3406 = vadd.f32 %v3357, %v3405
      %3407 = vdwg.mxu0
      %3408 = vmatpush.bf16.msra.mxu0 %v3285
      %3409 = vmatpush.bf16.msra.mxu0 %v3284
      %3410 = vmatpush.bf16.msra.mxu0 %v3283
      %3411 = vmatpush.bf16.msra.mxu0 %v3282
      %3412 = vmatpush.bf16.msra.mxu0 %v3281
      %3413 = vmatpush.bf16.msra.mxu0 %v3280
      %3414 = vmatpush.bf16.msra.mxu0 %v3279
      %3415 = vmatpush.bf16.msra.mxu0 %v3278
      %3416 = vmatmul.bf16.gmra.mxu0 %v3101
      %v3417 = vpop.f32.mrf.mxu0
      %v3418 = vadd.f32 %v3369, %v3417
      %v3419 = vpop.f32.mrf.mxu0
      %v3420 = vadd.f32 %v3371, %v3419
      %3421 = vmatmul.bf16.gmra.mxu0 %v3102
      %v3422 = vpop.f32.mrf.mxu0
      %v3423 = vadd.f32 %v3374, %v3422
      %v3424 = vpop.f32.mrf.mxu0
      %v3425 = vadd.f32 %v3376, %v3424
      %3426 = vmatmul.bf16.gmra.mxu0 %v3103
      %v3427 = vpop.f32.mrf.mxu0
      %v3428 = vadd.f32 %v3379, %v3427
      %v3429 = vpop.f32.mrf.mxu0
      %v3430 = vadd.f32 %v3381, %v3429
      %3431 = vmatmul.bf16.gmra.mxu0 %v3104
      %v3432 = vpop.f32.mrf.mxu0
      %v3433 = vadd.f32 %v3384, %v3432
      %v3434 = vpop.f32.mrf.mxu0
      %v3435 = vadd.f32 %v3386, %v3434
      %3436 = vmatmul.bf16.gmra.mxu0 %v3105
      %v3437 = vpop.f32.mrf.mxu0
      %v3438 = vadd.f32 %v3389, %v3437
      %v3439 = vpop.f32.mrf.mxu0
      %v3440 = vadd.f32 %v3391, %v3439
      %3441 = vmatmul.bf16.gmra.mxu0 %v3106
      %v3442 = vpop.f32.mrf.mxu0
      %v3443 = vadd.f32 %v3394, %v3442
      %v3444 = vpop.f32.mrf.mxu0
      %v3445 = vadd.f32 %v3396, %v3444
      %3446 = vmatmul.bf16.gmra.mxu0 %v3107
      %v3447 = vpop.f32.mrf.mxu0
      %v3448 = vadd.f32 %v3399, %v3447
      %v3449 = vpop.f32.mrf.mxu0
      %v3450 = vadd.f32 %v3401, %v3449
      %3451 = vmatmul.bf16.gmra.mxu0 %v3108
      %v3452 = vpop.f32.mrf.mxu0
      %v3453 = vadd.f32 %v3404, %v3452
      %v3454 = vpop.f32.mrf.mxu0
      %v3455 = vadd.f32 %v3406, %v3454
      %3456 = vdwg.mxu0
      %v3457 = vadd.f32 %v2645, %v3418
      %v3458 = vadd.f32 %v2647, %v3420
      %v3459 = vadd.f32 %v2650, %v3423
      %v3460 = vadd.f32 %v2652, %v3425
      %v3461 = vadd.f32 %v2655, %v3428
      %v3462 = vadd.f32 %v2657, %v3430
      %v3463 = vadd.f32 %v2660, %v3433
      %v3464 = vadd.f32 %v2662, %v3435
      %v3465 = vadd.f32 %v2665, %v3438
      %v3466 = vadd.f32 %v2667, %v3440
      %v3467 = vadd.f32 %v2670, %v3443
      %v3468 = vadd.f32 %v2672, %v3445
      %v3469 = vadd.f32 %v2675, %v3448
      %v3470 = vadd.f32 %v2677, %v3450
      %v3471 = vadd.f32 %v2680, %v3453
      %v3472 = vadd.f32 %v2682, %v3455
      %v3473 = vld [vmem:[%s7] sm:$0x1]
      %v3475 = vperm.slane %v3473, 0
      %v3477 = vmul.f32 %v3457, %v3475
      %v3478 = vmul.f32 %v3458, %v3475
      %v3479 = vmul.f32 %v3459, %v3475
      %v3480 = vmul.f32 %v3460, %v3475
      %v3481 = vmul.f32 %v3461, %v3475
      %v3482 = vmul.f32 %v3462, %v3475
      %v3483 = vmul.f32 %v3463, %v3475
      %v3484 = vmul.f32 %v3464, %v3475
      %v3485 = vmul.f32 %v3465, %v3475
      %v3486 = vmul.f32 %v3466, %v3475
      %v3487 = vmul.f32 %v3467, %v3475
      %v3488 = vmul.f32 %v3468, %v3475
      %v3489 = vmul.f32 %v3469, %v3475
      %v3490 = vmul.f32 %v3470, %v3475
      %v3491 = vmul.f32 %v3471, %v3475
      %v3492 = vmul.f32 %v3472, %v3475
      %v3493 = vld [vmem:[%s8] sm:$0x1]
      %v3495 = vperm.slane %v3493, 0
      %v3497 = vadd.f32 %v3477, %v3495
      %v3498 = vadd.f32 %v3478, %v3495
      %v3499 = vadd.f32 %v3479, %v3495
      %v3500 = vadd.f32 %v3480, %v3495
      %v3501 = vadd.f32 %v3481, %v3495
      %v3502 = vadd.f32 %v3482, %v3495
      %v3503 = vadd.f32 %v3483, %v3495
      %v3504 = vadd.f32 %v3484, %v3495
      %v3505 = vadd.f32 %v3485, %v3495
      %v3506 = vadd.f32 %v3486, %v3495
      %v3507 = vadd.f32 %v3487, %v3495
      %v3508 = vadd.f32 %v3488, %v3495
      %v3509 = vadd.f32 %v3489, %v3495
      %v3510 = vadd.f32 %v3490, %v3495
      %v3511 = vadd.f32 %v3491, %v3495
      %v3512 = vadd.f32 %v3492, %v3495
      %v3513 = vmax.f32 %v3497, 0.0
      %v3514 = vmax.f32 %v3498, 0.0
      %v3515 = vmax.f32 %v3499, 0.0
      %v3516 = vmax.f32 %v3500, 0.0
      %v3517 = vmax.f32 %v3501, 0.0
      %v3518 = vmax.f32 %v3502, 0.0
      %v3519 = vmax.f32 %v3503, 0.0
      %v3520 = vmax.f32 %v3504, 0.0
      %v3521 = vmax.f32 %v3505, 0.0
      %v3522 = vmax.f32 %v3506, 0.0
      %v3523 = vmax.f32 %v3507, 0.0
      %v3524 = vmax.f32 %v3508, 0.0
      %v3525 = vmax.f32 %v3509, 0.0
      %v3526 = vmax.f32 %v3510, 0.0
      %v3527 = vmax.f32 %v3511, 0.0
      %v3528 = vmax.f32 %v3512, 0.0
      %v3529 = vpack.c.bf16 %v3514, %v3513
      %v3530 = vpack.c.bf16 %v3516, %v3515
      %v3531 = vpack.c.bf16 %v3518, %v3517
      %v3532 = vpack.c.bf16 %v3520, %v3519
      %v3533 = vpack.c.bf16 %v3522, %v3521
      %v3534 = vpack.c.bf16 %v3524, %v3523
      %v3535 = vpack.c.bf16 %v3526, %v3525
      %v3536 = vpack.c.bf16 %v3528, %v3527
      %v3537 = vld [vmem:[%s9] sm:$0xf]
      %v3538 = vld [vmem:[%s9 + $0x4] sm:$0xf]
      %v3539 = vld [vmem:[%s9 + $0x8] sm:$0xf]
      %v3540 = vld [vmem:[%s9 + $0xc] sm:$0xf]
      %v3541 = vld [vmem:[%s9 + $0x10] sm:$0xf]
      %v3542 = vld [vmem:[%s9 + $0x14] sm:$0xf]
      %v3543 = vld [vmem:[%s9 + $0x18] sm:$0xf]
      %v3544 = vld [vmem:[%s9 + $0x1c] sm:$0xf]
      %v3545 = vld [vmem:[%s9 + $0x20] sm:$0xf]
      %v3546 = vld [vmem:[%s9 + $0x24] sm:$0xf]
      %v3547 = vld [vmem:[%s9 + $0x28] sm:$0xf]
      %v3548 = vld [vmem:[%s9 + $0x2c] sm:$0xf]
      %v3549 = vld [vmem:[%s9 + $0x30] sm:$0xf]
      %v3550 = vld [vmem:[%s9 + $0x34] sm:$0xf]
      %v3551 = vld [vmem:[%s9 + $0x38] sm:$0xf]
      %v3552 = vld [vmem:[%s9 + $0x3c] sm:$0xf]
      %v3569 = vunpack.c.l.b16 %v3537
      %v3570 = vunpack.c.l.b16 %v3538
      %v3571 = vunpack.c.l.b16 %v3539
      %v3572 = vunpack.c.l.b16 %v3540
      %v3573 = vunpack.c.l.b16 %v3541
      %v3574 = vunpack.c.l.b16 %v3542
      %v3575 = vunpack.c.l.b16 %v3543
      %v3576 = vunpack.c.l.b16 %v3544
      %v3577 = vunpack.c.l.b16 %v3545
      %v3578 = vunpack.c.l.b16 %v3546
      %v3579 = vunpack.c.l.b16 %v3547
      %v3580 = vunpack.c.l.b16 %v3548
      %v3581 = vunpack.c.l.b16 %v3549
      %v3582 = vunpack.c.l.b16 %v3550
      %v3583 = vunpack.c.l.b16 %v3551
      %v3584 = vunpack.c.l.b16 %v3552
      %v3585 = vpack.c.b16 %v3570, %v3569
      %v3586 = vpack.c.b16 %v3572, %v3571
      %v3587 = vpack.c.b16 %v3574, %v3573
      %v3588 = vpack.c.b16 %v3576, %v3575
      %v3589 = vpack.c.b16 %v3578, %v3577
      %v3590 = vpack.c.b16 %v3580, %v3579
      %v3591 = vpack.c.b16 %v3582, %v3581
      %v3592 = vpack.c.b16 %v3584, %v3583
      %3601 = vmatpush.bf16.msra.mxu0 %v3592
      %3602 = vmatpush.bf16.msra.mxu0 %v3591
      %3603 = vmatpush.bf16.msra.mxu0 %v3590
      %3604 = vmatpush.bf16.msra.mxu0 %v3589
      %3605 = vmatpush.bf16.msra.mxu0 %v3588
      %3606 = vmatpush.bf16.msra.mxu0 %v3587
      %3607 = vmatpush.bf16.msra.mxu0 %v3586
      %3608 = vmatpush.bf16.msra.mxu0 %v3585
      %3609 = vmatmul.bf16.gmra.mxu0 %v3529
      %v3610 = vpop.f32.mrf.mxu0
      %v3611 = vadd.f32 0.0, %v3610
      %v3612 = vpop.f32.mrf.mxu0
      %v3613 = vadd.f32 0.0, %v3612
      %3614 = vmatmul.bf16.gmra.mxu0 %v3530
      %v3615 = vpop.f32.mrf.mxu0
      %v3616 = vadd.f32 0.0, %v3615
      %v3617 = vpop.f32.mrf.mxu0
      %v3618 = vadd.f32 0.0, %v3617
      %3619 = vmatmul.bf16.gmra.mxu0 %v3531
      %v3620 = vpop.f32.mrf.mxu0
      %v3621 = vadd.f32 0.0, %v3620
      %v3622 = vpop.f32.mrf.mxu0
      %v3623 = vadd.f32 0.0, %v3622
      %3624 = vmatmul.bf16.gmra.mxu0 %v3532
      %v3625 = vpop.f32.mrf.mxu0
      %v3626 = vadd.f32 0.0, %v3625
      %v3627 = vpop.f32.mrf.mxu0
      %v3628 = vadd.f32 0.0, %v3627
      %3629 = vmatmul.bf16.gmra.mxu0 %v3533
      %v3630 = vpop.f32.mrf.mxu0
      %v3631 = vadd.f32 0.0, %v3630
      %v3632 = vpop.f32.mrf.mxu0
      %v3633 = vadd.f32 0.0, %v3632
      %3634 = vmatmul.bf16.gmra.mxu0 %v3534
      %v3635 = vpop.f32.mrf.mxu0
      %v3636 = vadd.f32 0.0, %v3635
      %v3637 = vpop.f32.mrf.mxu0
      %v3638 = vadd.f32 0.0, %v3637
      %3639 = vmatmul.bf16.gmra.mxu0 %v3535
      %v3640 = vpop.f32.mrf.mxu0
      %v3641 = vadd.f32 0.0, %v3640
      %v3642 = vpop.f32.mrf.mxu0
      %v3643 = vadd.f32 0.0, %v3642
      %3644 = vmatmul.bf16.gmra.mxu0 %v3536
      %v3645 = vpop.f32.mrf.mxu0
      %v3646 = vadd.f32 0.0, %v3645
      %v3647 = vpop.f32.mrf.mxu0
      %v3648 = vadd.f32 0.0, %v3647
      %3649 = vdwg.mxu0
      %v3650 = vld [vmem:[%s10] sm:$0x1]
      %v3652 = vperm.slane %v3650, 0
      %v3654 = vmul.f32 %v3611, %v3652
      %v3655 = vmul.f32 %v3613, %v3652
      %v3656 = vmul.f32 %v3616, %v3652
      %v3657 = vmul.f32 %v3618, %v3652
      %v3658 = vmul.f32 %v3621, %v3652
      %v3659 = vmul.f32 %v3623, %v3652
      %v3660 = vmul.f32 %v3626, %v3652
      %v3661 = vmul.f32 %v3628, %v3652
      %v3662 = vmul.f32 %v3631, %v3652
      %v3663 = vmul.f32 %v3633, %v3652
      %v3664 = vmul.f32 %v3636, %v3652
      %v3665 = vmul.f32 %v3638, %v3652
      %v3666 = vmul.f32 %v3641, %v3652
      %v3667 = vmul.f32 %v3643, %v3652
      %v3668 = vmul.f32 %v3646, %v3652
      %v3669 = vmul.f32 %v3648, %v3652
      %v3670 = vld [vmem:[%s11] sm:$0x1]
      %v3672 = vperm.slane %v3670, 0
      %v3674 = vadd.f32 %v3654, %v3672
      %v3675 = vadd.f32 %v3655, %v3672
      %v3676 = vadd.f32 %v3656, %v3672
      %v3677 = vadd.f32 %v3657, %v3672
      %v3678 = vadd.f32 %v3658, %v3672
      %v3679 = vadd.f32 %v3659, %v3672
      %v3680 = vadd.f32 %v3660, %v3672
      %v3681 = vadd.f32 %v3661, %v3672
      %v3682 = vadd.f32 %v3662, %v3672
      %v3683 = vadd.f32 %v3663, %v3672
      %v3684 = vadd.f32 %v3664, %v3672
      %v3685 = vadd.f32 %v3665, %v3672
      %v3686 = vadd.f32 %v3666, %v3672
      %v3687 = vadd.f32 %v3667, %v3672
      %v3688 = vadd.f32 %v3668, %v3672
      %v3689 = vadd.f32 %v3669, %v3672
      %v3690 = vld [vmem:[%s535] sm:$0xf]
      %v3691 = vld [vmem:[%s535 + $0x4] sm:$0xf]
      %v3692 = vld [vmem:[%s535 + $0x8] sm:$0xf]
      %v3693 = vld [vmem:[%s535 + $0xc] sm:$0xf]
      %v3694 = vld [vmem:[%s535 + $0x10] sm:$0xf]
      %v3695 = vld [vmem:[%s535 + $0x14] sm:$0xf]
      %v3696 = vld [vmem:[%s535 + $0x18] sm:$0xf]
      %v3697 = vld [vmem:[%s535 + $0x1c] sm:$0xf]
      %v3698 = vld [vmem:[%s535 + $0x20] sm:$0xf]
      %v3699 = vld [vmem:[%s535 + $0x24] sm:$0xf]
      %v3700 = vld [vmem:[%s535 + $0x28] sm:$0xf]
      %v3701 = vld [vmem:[%s535 + $0x2c] sm:$0xf]
      %v3702 = vld [vmem:[%s535 + $0x30] sm:$0xf]
      %v3703 = vld [vmem:[%s535 + $0x34] sm:$0xf]
      %v3704 = vld [vmem:[%s535 + $0x38] sm:$0xf]
      %v3705 = vld [vmem:[%s535 + $0x3c] sm:$0xf]
      %v3706 = vunpack.c.l.bf16 %v3690
      %v3707 = vunpack.c.l.bf16 %v3691
      %v3708 = vunpack.c.l.bf16 %v3692
      %v3709 = vunpack.c.l.bf16 %v3693
      %v3710 = vunpack.c.l.bf16 %v3694
      %v3711 = vunpack.c.l.bf16 %v3695
      %v3712 = vunpack.c.l.bf16 %v3696
      %v3713 = vunpack.c.l.bf16 %v3697
      %v3714 = vunpack.c.l.bf16 %v3698
      %v3715 = vunpack.c.l.bf16 %v3699
      %v3716 = vunpack.c.l.bf16 %v3700
      %v3717 = vunpack.c.l.bf16 %v3701
      %v3718 = vunpack.c.l.bf16 %v3702
      %v3719 = vunpack.c.l.bf16 %v3703
      %v3720 = vunpack.c.l.bf16 %v3704
      %v3721 = vunpack.c.l.bf16 %v3705
      %v3722 = vadd.f32 %v3674, %v3706
      %v3723 = vadd.f32 %v3675, %v3707
      %v3724 = vadd.f32 %v3676, %v3708
      %v3725 = vadd.f32 %v3677, %v3709
      %v3726 = vadd.f32 %v3678, %v3710
      %v3727 = vadd.f32 %v3679, %v3711
      %v3728 = vadd.f32 %v3680, %v3712
      %v3729 = vadd.f32 %v3681, %v3713
      %v3730 = vadd.f32 %v3682, %v3714
      %v3731 = vadd.f32 %v3683, %v3715
      %v3732 = vadd.f32 %v3684, %v3716
      %v3733 = vadd.f32 %v3685, %v3717
      %v3734 = vadd.f32 %v3686, %v3718
      %v3735 = vadd.f32 %v3687, %v3719
      %v3736 = vadd.f32 %v3688, %v3720
      %v3737 = vadd.f32 %v3689, %v3721
      %v3738 = vmax.f32 %v3722, 0.0
      %v3739 = vmax.f32 %v3723, 0.0
      %v3740 = vmax.f32 %v3724, 0.0
      %v3741 = vmax.f32 %v3725, 0.0
      %v3742 = vmax.f32 %v3726, 0.0
      %v3743 = vmax.f32 %v3727, 0.0
      %v3744 = vmax.f32 %v3728, 0.0
      %v3745 = vmax.f32 %v3729, 0.0
      %v3746 = vmax.f32 %v3730, 0.0
      %v3747 = vmax.f32 %v3731, 0.0
      %v3748 = vmax.f32 %v3732, 0.0
      %v3749 = vmax.f32 %v3733, 0.0
      %v3750 = vmax.f32 %v3734, 0.0
      %v3751 = vmax.f32 %v3735, 0.0
      %v3752 = vmax.f32 %v3736, 0.0
      %v3753 = vmax.f32 %v3737, 0.0
      %3754 = vst [vmem:[%s580] sm:$0xff] %v3738
      %3755 = vst [vmem:[%s580 + $0x8] sm:$0xff] %v3739
      %3756 = vst [vmem:[%s580 + $0x10] sm:$0xff] %v3740
      %3757 = vst [vmem:[%s580 + $0x18] sm:$0xff] %v3741
      %3758 = vst [vmem:[%s580 + $0x20] sm:$0xff] %v3742
      %3759 = vst [vmem:[%s580 + $0x28] sm:$0xff] %v3743
      %3760 = vst [vmem:[%s580 + $0x30] sm:$0xff] %v3744
      %3761 = vst [vmem:[%s580 + $0x38] sm:$0xff] %v3745
      %3762 = vst [vmem:[%s580 + $0x40] sm:$0xff] %v3746
      %3763 = vst [vmem:[%s580 + $0x48] sm:$0xff] %v3747
      %3764 = vst [vmem:[%s580 + $0x50] sm:$0xff] %v3748
      %3765 = vst [vmem:[%s580 + $0x58] sm:$0xff] %v3749
      %3766 = vst [vmem:[%s580 + $0x60] sm:$0xff] %v3750
      %3767 = vst [vmem:[%s580 + $0x68] sm:$0xff] %v3751
      %3768 = vst [vmem:[%s580 + $0x70] sm:$0xff] %v3752
      %3769 = vst [vmem:[%s580 + $0x78] sm:$0xff] %v3753
      %s3770 = smul.u32 8, %s28
      %p3771 = scmp.lt.s32.totalorder %s27, 1
      %s3772 = scalar_select %p3771, %s27, 1
      %p3773 = scmp.lt.s32.totalorder %s3770, 15
      %s3774 = scalar_select %p3773, %s3770, 15
      %s3775 = smul.addr %s3774, 2
      %s3776 = smul.addr %s3772, 32
      %s3777 = sadd.s32 %s3775, %s3776
      %s3778 = smul.addr %s3777, 8
      %s3779 = scalar_lea.vmem %s12, %s3778
      // Predicated region
      $region77: #{bottleneck_pallas.1} parent=67 // pred_check
        %p3780 = pneg %p344
      $region78: #{bottleneck_pallas.1} parent=67 // pred_check_branch
        %3782 = sbr.rel (%p3780) target = $region80
      $region79: #{bottleneck_pallas.1} parent=67 // pred_region
        %s3783 = smul.u32 8, %s28
      $region80: #{bottleneck_pallas.1} parent=67 // pred_fallthru
        _
    $region68: #{bottleneck_pallas.1} parent=5 // pred_fallthru
      _
    %p3784 = scmp.le.s32.totalorder 2, %s18
    // Predicated region
    $region81: #{bottleneck_pallas.1} parent=5 // pred_check
      %p3785 = pneg %p3784
    $region82: #{bottleneck_pallas.1} parent=5 // pred_check_branch
      %3787 = sbr.rel (%p3785) target = $region84
    $region83: #{bottleneck_pallas.1} parent=5 // pred_region
      %s3788 = ssub.s32 %s18, 2
      // Predicated region
      $region85: #{bottleneck_pallas.1} parent=83 // pred_check
        %p3789 = pneg %p350
      $region86: #{bottleneck_pallas.1} parent=83 // pred_check_branch
        %3791 = sbr.rel (%p3789) target = $region88
      $region87: #{bottleneck_pallas.1} parent=83 // pred_region
        %s3792 = smul.u32 8, %s30
        %p3793 = scmp.lt.s32.totalorder %s29, 1
        %s3794 = scalar_select %p3793, %s29, 1
        %p3795 = scmp.lt.s32.totalorder %s3792, 15
        %s3796 = scalar_select %p3795, %s3792, 15
        %s3797 = smul.addr %s3796, 2
        %s3798 = smul.addr %s3794, 32
        %s3799 = sadd.s32 %s3797, %s3798
        %s3800 = smul.addr %s3799, 8
        %s3801 = scalar_lea.vmem %s12, %s3800
      $region88: #{bottleneck_pallas.1} parent=83 // pred_fallthru
        _
    $region84: #{bottleneck_pallas.1} parent=5 // pred_fallthru
      _
  $region6: #{bottleneck_pallas.1} parent=0 // loop_footer
    %s22 = sadd.s32 1, %s18
  $region7: #{bottleneck_pallas.1} parent=0 // loop_footer_branch
    %17 = sbr.rel target = $region3
  $region8: #{bottleneck_pallas.1} parent=0 // loop_exit
    _

</llo_original>
